<compile_context>
chip_gen: v7x
topology: tpu7x:2x2x1
jax: 0.10.0
libtpu: 0.0.40
codegen_flags: <defaults>
</compile_context>

<pallas_src>
import functools

import jax
import jax.numpy as jnp
from jax.experimental import pallas as pl
from jax.experimental.pallas import tpu as pltpu


# Pool configs of the MiniImagenet non-resnet FNet feature extractor:
#   conv_block x3 -> MaxPool2d(2, stride=2, padding=0)
#   conv_block    -> MaxPool2d(3, stride=1, padding=1)
_POOLS = ((2, 2, 0), (2, 2, 0), (2, 2, 0), (3, 1, 1))


def _pool_out(n, k, s, p):
    return (n + 2 * p - k) // s + 1


def _conv_bn_relu(x, w_ref, b_ref, pad_ref, H, W, Cin, Cout):
    """x: (H, W, Cin) value. w_ref: (9*Cin, Cout) BN-scale-folded weights.
    b_ref: (1, Cout) folded bias. pad_ref: VMEM scratch (H+2, W+2, Cin)."""
    # conv padding=1 done in-kernel (no wrapper jnp.pad / extra HBM pass)
    pad_ref[...] = jnp.zeros_like(pad_ref)
    pad_ref[1:H + 1, 1:W + 1, :] = x
    xp = pad_ref[...]                                        # (H+2, W+2, Cin)

    # im2col: concatenate the 9 shifted taps on the channel (lane) dim and do a
    # single MXU matmul with contraction depth K = 9*Cin.
    taps = [xp[dy:dy + H, dx:dx + W, :] for dy in range(3) for dx in range(3)]
    patches = jnp.concatenate(taps, axis=-1).reshape(H * W, 9 * Cin)
    acc = jnp.dot(patches, w_ref[...], preferred_element_type=jnp.float32)  # (H*W, Cout)

    # BN scale is already folded into w; only the folded bias + ReLU remain.
    y = jnp.maximum(acc + b_ref[...], 0.0)
    return y.reshape(H, W, Cout)


def _maxpool(y, pool_ref, H, W, C, pk, ps, pp):
    """y: (H, W, C) post-ReLU value (so zero padding == -inf padding)."""
    if pk == 2 and ps == 2 and pp == 0:
        H2, W2 = H // 2, W // 2
        # Row pairs: free in registers (leading-dim split, elementwise max).
        yr = y.reshape(H2, 2, W, C)
        rowmax = jnp.maximum(yr[:, 0], yr[:, 1])             # (H2, W, C)
        # Column pairs: two strided reads from a small VMEM scratch.
        pool_ref[...] = rowmax                               # pool_ref: (H2, W, C)
        a = pool_ref[:, pl.ds(0, W2, stride=2), :]
        b = pool_ref[:, pl.ds(1, W2, stride=2), :]
        return jnp.maximum(a, b)                             # (H2, W2, C)

    # General small-window path (k=3, s=1, p=1 here).
    Hp, Wp = H + 2 * pp, W + 2 * pp
    Ho, Wo = _pool_out(H, pk, ps, pp), _pool_out(W, pk, ps, pp)
    pool_ref[...] = jnp.zeros_like(pool_ref)                 # pool_ref: (Hp, Wp, C)
    pool_ref[pp:pp + H, pp:pp + W, :] = y
    m = None
    for ky in range(pk):
        for kx in range(pk):
            if ps == 1:
                v = pool_ref[ky:ky + Ho, kx:kx + Wo, :]
            else:
                v = pool_ref[pl.ds(ky, Ho, stride=ps), pl.ds(kx, Wo, stride=ps), :]
            m = v if m is None else jnp.maximum(m, v)
    return m


def _fnet_kernel(x_ref,
                 w1_ref, b1_ref, w2_ref, b2_ref, w3_ref, b3_ref, w4_ref, b4_ref,
                 o_ref,
                 pad1, pad2, pad3, pad4, pool1, pool2, pool3, pool4,
                 *, dims):
    """Whole 4-block network for one image per grid step; everything stays in VMEM."""
    w_refs = (w1_ref, w2_ref, w3_ref, w4_ref)
    b_refs = (b1_ref, b2_ref, b3_ref, b4_ref)
    pad_refs = (pad1, pad2, pad3, pad4)
    pool_refs = (pool1, pool2, pool3, pool4)

    x = x_ref[0]                                             # (H, W, Cin)
    for li in range(4):
        H, W, Cin, Cout = dims[li]
        pk, ps, pp = _POOLS[li]
        y = _conv_bn_relu(x, w_refs[li], b_refs[li], pad_refs[li], H, W, Cin, Cout)
        x = _maxpool(y, pool_refs[li], H, W, Cout, pk, ps, pp)
    o_ref[0] = x.astype(o_ref.dtype)


def fnet_forward_nhwc(x_nhwc, params):
    """Fused FNet feature extractor. x_nhwc: (N, H, W, Cin) f32.
    params: list of 4 (w_folded (9*Cin, Cout), bias (1, Cout))."""
    N, H, W, Cin = x_nhwc.shape

    # Static per-layer shapes.
    dims = []
    h, w, cin = H, W, Cin
    for li, (wf, _) in enumerate(params):
        cout = wf.shape[1]
        dims.append((h, w, cin, cout))
        pk, ps, pp = _POOLS[li]
        h, w, cin = _pool_out(h, pk, ps, pp), _pool_out(w, pk, ps, pp), cout
    Ho, Wo, Cz = h, w, cin
    dims = tuple(dims)

    # Tiny per-image VMEM scratches: 4 conv-pad buffers + 4 pool buffers (< 30 KB total).
    scratch = [pltpu.VMEM((hh + 2, ww + 2, ci), jnp.float32) for (hh, ww, ci, _) in dims]
    for li, (hh, ww, _, co) in enumerate(dims):
        pk, ps, pp = _POOLS[li]
        if pk == 2 and ps == 2 and pp == 0:
            scratch.append(pltpu.VMEM((hh // 2, ww, co), jnp.float32))
        else:
            scratch.append(pltpu.VMEM((hh + 2 * pp, ww + 2 * pp, co), jnp.float32))

    in_specs = [pl.BlockSpec((1, H, W, Cin), lambda n: (n, 0, 0, 0))]
    flat_params = []
    for wf, b in params:
        in_specs.append(pl.BlockSpec(wf.shape, lambda n: (0, 0)))
        in_specs.append(pl.BlockSpec(b.shape, lambda n: (0, 0)))
        flat_params.extend([wf, b])

    flops = 2 * N * sum(hh * ww * 9 * ci * co for (hh, ww, ci, co) in dims)
    bytes_accessed = 4 * (x_nhwc.size + sum(p.size for p in flat_params) + N * Ho * Wo * Cz)

    kernel = functools.partial(_fnet_kernel, dims=dims)

    return pl.pallas_call(
        kernel,
        out_shape=jax.ShapeDtypeStruct((N, Ho, Wo, Cz), jnp.float32),
        grid_spec=pltpu.PrefetchScalarGridSpec(
            num_scalar_prefetch=0,
            grid=(N,),                               # one image per step; "parallel" lets
            in_specs=in_specs,                       # v7x's two TensorCores split the batch
            out_specs=pl.BlockSpec((1, Ho, Wo, Cz), lambda n: (n, 0, 0, 0)),
            scratch_shapes=scratch,
        ),
        compiler_params=pltpu.CompilerParams(dimension_semantics=("parallel",)),
        cost_estimate=pl.CostEstimate(flops=flops, transcendentals=0,
                                      bytes_accessed=bytes_accessed),
    )(x_nhwc, *flat_params)


def init_fnet_params(key, x_dim=1, hid_dim=16, z_dim=16):
    """Deterministic synthetic conv/BN params for the 4 conv_blocks, pre-folded:
    returns [(w_folded (9*Cin, Cout), bias (1, Cout)), ...]."""
    layer_io = [(x_dim, hid_dim), (hid_dim, hid_dim), (hid_dim, hid_dim), (hid_dim, z_dim)]
    eps = 1e-5
    params = []
    for cin, cout in layer_io:
        key, k1, k2, k3, k4, k5, k6 = jax.random.split(key, 7)
        w = 0.1 * jax.random.normal(k1, (3, 3, cin, cout), jnp.float32)   # HWIO
        conv_b = 0.05 * jax.random.normal(k2, (cout,), jnp.float32)
        gamma = 1.0 + 0.1 * jax.random.normal(k3, (cout,), jnp.float32)
        beta = 0.05 * jax.random.normal(k4, (cout,), jnp.float32)
        running_mean = 0.05 * jax.random.normal(k5, (cout,), jnp.float32)
        running_var = 0.5 + jnp.abs(jax.random.normal(k6, (cout,), jnp.float32))
        # Fold eval-mode BatchNorm: scale into the conv weights, shift + conv bias into bias.
        scale = gamma / jnp.sqrt(running_var + eps)
        w_folded = (w * scale[None, None, None, :]).reshape(9 * cin, cout)
        bias = ((conv_b - running_mean) * scale + beta).reshape(1, cout)
        params.append((w_folded, bias))
    return params


def fnet_forward(x_nchw, params):
    """FNet forward (MiniImagenet, opt.resnet=False): 3x conv_block(pool 2/2/0)
    + conv_block(pool 3/1/1). Input/output follow PyTorch NCHW."""
    x = jnp.transpose(x_nchw, (0, 2, 3, 1))       # NCHW -> NHWC (channels on lanes)
    y = fnet_forward_nhwc(x, params)
    return jnp.transpose(y, (0, 3, 1, 2))         # NHWC -> NCHW (N*C*iH*iW)


# TODO(synk): the ResBlock (opt.resnet=True) and Omniglot branches of FNet.__init__
# are not exercised here; only the non-resnet MiniImagenet feature extractor is built.

if __name__ == "__main__":
    key = jax.random.PRNGKey(0)
    kx, kp = jax.random.split(key)

    # Small shapes consistent with the module: N=2, C=1 (x_dim), H=W=16, hid=z=16.
    x = jax.random.normal(kx, (2, 1, 16, 16), jnp.float32)   # NCHW, like PyTorch
    params = init_fnet_params(kp, x_dim=1, hid_dim=16, z_dim=16)

    out = jax.jit(fnet_forward)(x, params)
    out = jax.block_until_ready(out)
    assert out.shape == (2, 16, 2, 2), out.shape
    print("KERNEL_OK")
</pallas_src>

<mosaic_0001>
module attributes {stable_mosaic.version = 11 : i64} {
  func.func @_fnet_kernel(%arg0: i32, %arg1: memref<1x16x16x1xf32, #tpu.memory_space<vmem>>, %arg2: memref<9x16xf32, #tpu.memory_space<vmem>>, %arg3: memref<1x16xf32, #tpu.memory_space<vmem>>, %arg4: memref<144x16xf32, #tpu.memory_space<vmem>>, %arg5: memref<1x16xf32, #tpu.memory_space<vmem>>, %arg6: memref<144x16xf32, #tpu.memory_space<vmem>>, %arg7: memref<1x16xf32, #tpu.memory_space<vmem>>, %arg8: memref<144x16xf32, #tpu.memory_space<vmem>>, %arg9: memref<1x16xf32, #tpu.memory_space<vmem>>, %arg10: memref<1x2x2x16xf32, #tpu.memory_space<vmem>>, %arg11: memref<18x18x1xf32, #tpu.memory_space<vmem>>, %arg12: memref<10x10x16xf32, #tpu.memory_space<vmem>>, %arg13: memref<6x6x16xf32, #tpu.memory_space<vmem>>, %arg14: memref<4x4x16xf32, #tpu.memory_space<vmem>>, %arg15: memref<8x16x16xf32, #tpu.memory_space<vmem>>, %arg16: memref<4x8x16xf32, #tpu.memory_space<vmem>>, %arg17: memref<2x4x16xf32, #tpu.memory_space<vmem>>, %arg18: memref<4x4x16xf32, #tpu.memory_space<vmem>>) attributes {dimension_semantics = [#tpu.dimension_semantics<parallel>], iteration_bounds = array<i64: 2>, scalar_prefetch = 0 : i64, scratch_operands = 8 : i64, tpu.core_type = #tpu.core_type<tc>, window_params = [{transform_indices = @transform_0, window_bounds = array<i64: 1, 16, 16, 1>}, {pipeline_mode = #tpu.pipeline_mode<synchronous>, transform_indices = @transform_1, window_bounds = array<i64: 9, 16>}, {pipeline_mode = #tpu.pipeline_mode<synchronous>, transform_indices = @transform_2, window_bounds = array<i64: 1, 16>}, {pipeline_mode = #tpu.pipeline_mode<synchronous>, transform_indices = @transform_3, window_bounds = array<i64: 144, 16>}, {pipeline_mode = #tpu.pipeline_mode<synchronous>, transform_indices = @transform_4, window_bounds = array<i64: 1, 16>}, {pipeline_mode = #tpu.pipeline_mode<synchronous>, transform_indices = @transform_5, window_bounds = array<i64: 144, 16>}, {pipeline_mode = #tpu.pipeline_mode<synchronous>, transform_indices = @transform_6, window_bounds = array<i64: 1, 16>}, {pipeline_mode = #tpu.pipeline_mode<synchronous>, transform_indices = @transform_7, window_bounds = array<i64: 144, 16>}, {pipeline_mode = #tpu.pipeline_mode<synchronous>, transform_indices = @transform_8, window_bounds = array<i64: 1, 16>}, {transform_indices = @transform_9, window_bounds = array<i64: 1, 2, 2, 16>}]} {
    %c0 = arith.constant 0 : index
    %c0_0 = arith.constant 0 : index
    %c0_1 = arith.constant 0 : index
    %c0_2 = arith.constant 0 : index
    %0 = vector.load %arg1[%c0, %c0_0, %c0_1, %c0_2] : memref<1x16x16x1xf32, #tpu.memory_space<vmem>>, vector<1x16x16x1xf32>
    %1 = vector.shape_cast %0 : vector<1x16x16x1xf32> to vector<16x16x1xf32>
    %cst = arith.constant 0.000000e+00 : f32
    %2 = vector.broadcast %cst : f32 to vector<18x18x1xf32>
    %c0_3 = arith.constant 0 : index
    %c0_4 = arith.constant 0 : index
    %c0_5 = arith.constant 0 : index
    %3 = vector.load %arg11[%c0_3, %c0_4, %c0_5] : memref<18x18x1xf32, #tpu.memory_space<vmem>>, vector<18x18x1xf32>
    tpu.vector_store %arg11[%c0_3, %c0_4, %c0_5], %2 {strides = array<i32>} : memref<18x18x1xf32, #tpu.memory_space<vmem>>, vector<18x18x1xf32>,
    %c1 = arith.constant 1 : index
    %c1_6 = arith.constant 1 : index
    %c0_7 = arith.constant 0 : index
    %4 = vector.load %arg11[%c1, %c1_6, %c0_7] : memref<18x18x1xf32, #tpu.memory_space<vmem>>, vector<16x16x1xf32>
    tpu.vector_store %arg11[%c1, %c1_6, %c0_7], %1 {strides = array<i32>} : memref<18x18x1xf32, #tpu.memory_space<vmem>>, vector<16x16x1xf32>,
    %c0_8 = arith.constant 0 : index
    %c0_9 = arith.constant 0 : index
    %c0_10 = arith.constant 0 : index
    %5 = vector.load %arg11[%c0_8, %c0_9, %c0_10] : memref<18x18x1xf32, #tpu.memory_space<vmem>>, vector<18x18x1xf32>
    %6 = vector.extract_strided_slice %5 {offsets = [0, 0, 0], sizes = [16, 16, 1], strides = [1, 1, 1]} : vector<18x18x1xf32> to vector<16x16x1xf32>
    %7 = vector.extract_strided_slice %5 {offsets = [0, 1, 0], sizes = [16, 16, 1], strides = [1, 1, 1]} : vector<18x18x1xf32> to vector<16x16x1xf32>
    %8 = vector.extract_strided_slice %5 {offsets = [0, 2, 0], sizes = [16, 16, 1], strides = [1, 1, 1]} : vector<18x18x1xf32> to vector<16x16x1xf32>
    %9 = vector.extract_strided_slice %5 {offsets = [1, 0, 0], sizes = [16, 16, 1], strides = [1, 1, 1]} : vector<18x18x1xf32> to vector<16x16x1xf32>
    %10 = vector.extract_strided_slice %5 {offsets = [1, 1, 0], sizes = [16, 16, 1], strides = [1, 1, 1]} : vector<18x18x1xf32> to vector<16x16x1xf32>
    %11 = vector.extract_strided_slice %5 {offsets = [1, 2, 0], sizes = [16, 16, 1], strides = [1, 1, 1]} : vector<18x18x1xf32> to vector<16x16x1xf32>
    %12 = vector.extract_strided_slice %5 {offsets = [2, 0, 0], sizes = [16, 16, 1], strides = [1, 1, 1]} : vector<18x18x1xf32> to vector<16x16x1xf32>
    %13 = vector.extract_strided_slice %5 {offsets = [2, 1, 0], sizes = [16, 16, 1], strides = [1, 1, 1]} : vector<18x18x1xf32> to vector<16x16x1xf32>
    %14 = vector.extract_strided_slice %5 {offsets = [2, 2, 0], sizes = [16, 16, 1], strides = [1, 1, 1]} : vector<18x18x1xf32> to vector<16x16x1xf32>
    %15 = tpu.concatenate %6, %7, %8, %9, %10, %11, %12, %13, %14 in 2 : vector<16x16x1xf32>, vector<16x16x1xf32>, vector<16x16x1xf32>, vector<16x16x1xf32>, vector<16x16x1xf32>, vector<16x16x1xf32>, vector<16x16x1xf32>, vector<16x16x1xf32>, vector<16x16x1xf32> -> vector<16x16x9xf32>
    %16 = vector.shape_cast %15 : vector<16x16x9xf32> to vector<256x9xf32>
    %c0_11 = arith.constant 0 : index
    %c0_12 = arith.constant 0 : index
    %17 = vector.load %arg2[%c0_11, %c0_12] : memref<9x16xf32, #tpu.memory_space<vmem>>, vector<9x16xf32>
    %cst_13 = arith.constant dense<0.000000e+00> : vector<256x16xf32>
    %18 = tpu.matmul %16, %17, %cst_13 {dimension_numbers = #tpu.dot_dimension_numbers<[1], [0], [0], [1], [0, 0, 1, 1], [], []>} : vector<256x9xf32>, vector<9x16xf32>, vector<256x16xf32> -> vector<256x16xf32>
    %c0_14 = arith.constant 0 : index
    %c0_15 = arith.constant 0 : index
    %19 = vector.load %arg3[%c0_14, %c0_15] : memref<1x16xf32, #tpu.memory_space<vmem>>, vector<1x16xf32>
    %20 = vector.broadcast %19 : vector<1x16xf32> to vector<256x16xf32>
    %21 = arith.addf %18, %20 : vector<256x16xf32>
    %cst_16 = arith.constant 0.000000e+00 : f32
    %22 = vector.broadcast %cst_16 : f32 to vector<256x16xf32>
    %23 = arith.maximumf %21, %22 : vector<256x16xf32>
    %24 = vector.shape_cast %23 : vector<256x16xf32> to vector<16x16x16xf32>
    %25 = vector.shape_cast %24 : vector<16x16x16xf32> to vector<8x2x16x16xf32>
    %26 = vector.extract_strided_slice %25 {offsets = [0, 0, 0, 0], sizes = [8, 1, 16, 16], strides = [1, 1, 1, 1]} : vector<8x2x16x16xf32> to vector<8x1x16x16xf32>
    %27 = vector.shape_cast %26 : vector<8x1x16x16xf32> to vector<8x16x16xf32>
    %28 = vector.extract_strided_slice %25 {offsets = [0, 1, 0, 0], sizes = [8, 1, 16, 16], strides = [1, 1, 1, 1]} : vector<8x2x16x16xf32> to vector<8x1x16x16xf32>
    %29 = vector.shape_cast %28 : vector<8x1x16x16xf32> to vector<8x16x16xf32>
    %30 = arith.maximumf %27, %29 : vector<8x16x16xf32>
    %c0_17 = arith.constant 0 : index
    %c0_18 = arith.constant 0 : index
    %c0_19 = arith.constant 0 : index
    %31 = vector.load %arg15[%c0_17, %c0_18, %c0_19] : memref<8x16x16xf32, #tpu.memory_space<vmem>>, vector<8x16x16xf32>
    tpu.vector_store %arg15[%c0_17, %c0_18, %c0_19], %30 {strides = array<i32>} : memref<8x16x16xf32, #tpu.memory_space<vmem>>, vector<8x16x16xf32>,
    %c0_20 = arith.constant 0 : index
    %c0_21 = arith.constant 0 : index
    %c0_22 = arith.constant 0 : index
    %32 = tpu.strided_load %arg15[%c0_20, %c0_21, %c0_22] {strides = array<i32: 1, 2, 1>} : memref<8x16x16xf32, #tpu.memory_space<vmem>>, vector<8x8x16xf32>
    %c0_23 = arith.constant 0 : index
    %c1_24 = arith.constant 1 : index
    %c0_25 = arith.constant 0 : index
    %33 = tpu.strided_load %arg15[%c0_23, %c1_24, %c0_25] {strides = array<i32: 1, 2, 1>} : memref<8x16x16xf32, #tpu.memory_space<vmem>>, vector<8x8x16xf32>
    %34 = arith.maximumf %32, %33 : vector<8x8x16xf32>
    %cst_26 = arith.constant 0.000000e+00 : f32
    %35 = vector.broadcast %cst_26 : f32 to vector<10x10x16xf32>
    %c0_27 = arith.constant 0 : index
    %c0_28 = arith.constant 0 : index
    %c0_29 = arith.constant 0 : index
    %36 = vector.load %arg12[%c0_27, %c0_28, %c0_29] : memref<10x10x16xf32, #tpu.memory_space<vmem>>, vector<10x10x16xf32>
    tpu.vector_store %arg12[%c0_27, %c0_28, %c0_29], %35 {strides = array<i32>} : memref<10x10x16xf32, #tpu.memory_space<vmem>>, vector<10x10x16xf32>,
    %c1_30 = arith.constant 1 : index
    %c1_31 = arith.constant 1 : index
    %c0_32 = arith.constant 0 : index
    %37 = vector.load %arg12[%c1_30, %c1_31, %c0_32] : memref<10x10x16xf32, #tpu.memory_space<vmem>>, vector<8x8x16xf32>
    tpu.vector_store %arg12[%c1_30, %c1_31, %c0_32], %34 {strides = array<i32>} : memref<10x10x16xf32, #tpu.memory_space<vmem>>, vector<8x8x16xf32>,
    %c0_33 = arith.constant 0 : index
    %c0_34 = arith.constant 0 : index
    %c0_35 = arith.constant 0 : index
    %38 = vector.load %arg12[%c0_33, %c0_34, %c0_35] : memref<10x10x16xf32, #tpu.memory_space<vmem>>, vector<10x10x16xf32>
    %39 = vector.extract_strided_slice %38 {offsets = [0, 0, 0], sizes = [8, 8, 16], strides = [1, 1, 1]} : vector<10x10x16xf32> to vector<8x8x16xf32>
    %40 = vector.extract_strided_slice %38 {offsets = [0, 1, 0], sizes = [8, 8, 16], strides = [1, 1, 1]} : vector<10x10x16xf32> to vector<8x8x16xf32>
    %41 = vector.extract_strided_slice %38 {offsets = [0, 2, 0], sizes = [8, 8, 16], strides = [1, 1, 1]} : vector<10x10x16xf32> to vector<8x8x16xf32>
    %42 = vector.extract_strided_slice %38 {offsets = [1, 0, 0], sizes = [8, 8, 16], strides = [1, 1, 1]} : vector<10x10x16xf32> to vector<8x8x16xf32>
    %43 = vector.extract_strided_slice %38 {offsets = [1, 1, 0], sizes = [8, 8, 16], strides = [1, 1, 1]} : vector<10x10x16xf32> to vector<8x8x16xf32>
    %44 = vector.extract_strided_slice %38 {offsets = [1, 2, 0], sizes = [8, 8, 16], strides = [1, 1, 1]} : vector<10x10x16xf32> to vector<8x8x16xf32>
    %45 = vector.extract_strided_slice %38 {offsets = [2, 0, 0], sizes = [8, 8, 16], strides = [1, 1, 1]} : vector<10x10x16xf32> to vector<8x8x16xf32>
    %46 = vector.extract_strided_slice %38 {offsets = [2, 1, 0], sizes = [8, 8, 16], strides = [1, 1, 1]} : vector<10x10x16xf32> to vector<8x8x16xf32>
    %47 = vector.extract_strided_slice %38 {offsets = [2, 2, 0], sizes = [8, 8, 16], strides = [1, 1, 1]} : vector<10x10x16xf32> to vector<8x8x16xf32>
    %48 = tpu.concatenate %39, %40, %41, %42, %43, %44, %45, %46, %47 in 2 : vector<8x8x16xf32>, vector<8x8x16xf32>, vector<8x8x16xf32>, vector<8x8x16xf32>, vector<8x8x16xf32>, vector<8x8x16xf32>, vector<8x8x16xf32>, vector<8x8x16xf32>, vector<8x8x16xf32> -> vector<8x8x144xf32>
    %49 = vector.shape_cast %48 : vector<8x8x144xf32> to vector<64x144xf32>
    %c0_36 = arith.constant 0 : index
    %c0_37 = arith.constant 0 : index
    %50 = vector.load %arg4[%c0_36, %c0_37] : memref<144x16xf32, #tpu.memory_space<vmem>>, vector<144x16xf32>
    %cst_38 = arith.constant dense<0.000000e+00> : vector<64x16xf32>
    %51 = tpu.matmul %49, %50, %cst_38 {dimension_numbers = #tpu.dot_dimension_numbers<[1], [0], [0], [1], [0, 0, 1, 1], [], []>} : vector<64x144xf32>, vector<144x16xf32>, vector<64x16xf32> -> vector<64x16xf32>
    %c0_39 = arith.constant 0 : index
    %c0_40 = arith.constant 0 : index
    %52 = vector.load %arg5[%c0_39, %c0_40] : memref<1x16xf32, #tpu.memory_space<vmem>>, vector<1x16xf32>
    %53 = vector.broadcast %52 : vector<1x16xf32> to vector<64x16xf32>
    %54 = arith.addf %51, %53 : vector<64x16xf32>
    %cst_41 = arith.constant 0.000000e+00 : f32
    %55 = vector.broadcast %cst_41 : f32 to vector<64x16xf32>
    %56 = arith.maximumf %54, %55 : vector<64x16xf32>
    %57 = vector.shape_cast %56 : vector<64x16xf32> to vector<8x8x16xf32>
    %58 = vector.shape_cast %57 : vector<8x8x16xf32> to vector<4x2x8x16xf32>
    %59 = vector.extract_strided_slice %58 {offsets = [0, 0, 0, 0], sizes = [4, 1, 8, 16], strides = [1, 1, 1, 1]} : vector<4x2x8x16xf32> to vector<4x1x8x16xf32>
    %60 = vector.shape_cast %59 : vector<4x1x8x16xf32> to vector<4x8x16xf32>
    %61 = vector.extract_strided_slice %58 {offsets = [0, 1, 0, 0], sizes = [4, 1, 8, 16], strides = [1, 1, 1, 1]} : vector<4x2x8x16xf32> to vector<4x1x8x16xf32>
    %62 = vector.shape_cast %61 : vector<4x1x8x16xf32> to vector<4x8x16xf32>
    %63 = arith.maximumf %60, %62 : vector<4x8x16xf32>
    %c0_42 = arith.constant 0 : index
    %c0_43 = arith.constant 0 : index
    %c0_44 = arith.constant 0 : index
    %64 = vector.load %arg16[%c0_42, %c0_43, %c0_44] : memref<4x8x16xf32, #tpu.memory_space<vmem>>, vector<4x8x16xf32>
    tpu.vector_store %arg16[%c0_42, %c0_43, %c0_44], %63 {strides = array<i32>} : memref<4x8x16xf32, #tpu.memory_space<vmem>>, vector<4x8x16xf32>,
    %c0_45 = arith.constant 0 : index
    %c0_46 = arith.constant 0 : index
    %c0_47 = arith.constant 0 : index
    %65 = tpu.strided_load %arg16[%c0_45, %c0_46, %c0_47] {strides = array<i32: 1, 2, 1>} : memref<4x8x16xf32, #tpu.memory_space<vmem>>, vector<4x4x16xf32>
    %c0_48 = arith.constant 0 : index
    %c1_49 = arith.constant 1 : index
    %c0_50 = arith.constant 0 : index
    %66 = tpu.strided_load %arg16[%c0_48, %c1_49, %c0_50] {strides = array<i32: 1, 2, 1>} : memref<4x8x16xf32, #tpu.memory_space<vmem>>, vector<4x4x16xf32>
    %67 = arith.maximumf %65, %66 : vector<4x4x16xf32>
    %cst_51 = arith.constant 0.000000e+00 : f32
    %68 = vector.broadcast %cst_51 : f32 to vector<6x6x16xf32>
    %c0_52 = arith.constant 0 : index
    %c0_53 = arith.constant 0 : index
    %c0_54 = arith.constant 0 : index
    %69 = vector.load %arg13[%c0_52, %c0_53, %c0_54] : memref<6x6x16xf32, #tpu.memory_space<vmem>>, vector<6x6x16xf32>
    tpu.vector_store %arg13[%c0_52, %c0_53, %c0_54], %68 {strides = array<i32>} : memref<6x6x16xf32, #tpu.memory_space<vmem>>, vector<6x6x16xf32>,
    %c1_55 = arith.constant 1 : index
    %c1_56 = arith.constant 1 : index
    %c0_57 = arith.constant 0 : index
    %70 = vector.load %arg13[%c1_55, %c1_56, %c0_57] : memref<6x6x16xf32, #tpu.memory_space<vmem>>, vector<4x4x16xf32>
    tpu.vector_store %arg13[%c1_55, %c1_56, %c0_57], %67 {strides = array<i32>} : memref<6x6x16xf32, #tpu.memory_space<vmem>>, vector<4x4x16xf32>,
    %c0_58 = arith.constant 0 : index
    %c0_59 = arith.constant 0 : index
    %c0_60 = arith.constant 0 : index
    %71 = vector.load %arg13[%c0_58, %c0_59, %c0_60] : memref<6x6x16xf32, #tpu.memory_space<vmem>>, vector<6x6x16xf32>
    %72 = vector.extract_strided_slice %71 {offsets = [0, 0, 0], sizes = [4, 4, 16], strides = [1, 1, 1]} : vector<6x6x16xf32> to vector<4x4x16xf32>
    %73 = vector.extract_strided_slice %71 {offsets = [0, 1, 0], sizes = [4, 4, 16], strides = [1, 1, 1]} : vector<6x6x16xf32> to vector<4x4x16xf32>
    %74 = vector.extract_strided_slice %71 {offsets = [0, 2, 0], sizes = [4, 4, 16], strides = [1, 1, 1]} : vector<6x6x16xf32> to vector<4x4x16xf32>
    %75 = vector.extract_strided_slice %71 {offsets = [1, 0, 0], sizes = [4, 4, 16], strides = [1, 1, 1]} : vector<6x6x16xf32> to vector<4x4x16xf32>
    %76 = vector.extract_strided_slice %71 {offsets = [1, 1, 0], sizes = [4, 4, 16], strides = [1, 1, 1]} : vector<6x6x16xf32> to vector<4x4x16xf32>
    %77 = vector.extract_strided_slice %71 {offsets = [1, 2, 0], sizes = [4, 4, 16], strides = [1, 1, 1]} : vector<6x6x16xf32> to vector<4x4x16xf32>
    %78 = vector.extract_strided_slice %71 {offsets = [2, 0, 0], sizes = [4, 4, 16], strides = [1, 1, 1]} : vector<6x6x16xf32> to vector<4x4x16xf32>
    %79 = vector.extract_strided_slice %71 {offsets = [2, 1, 0], sizes = [4, 4, 16], strides = [1, 1, 1]} : vector<6x6x16xf32> to vector<4x4x16xf32>
    %80 = vector.extract_strided_slice %71 {offsets = [2, 2, 0], sizes = [4, 4, 16], strides = [1, 1, 1]} : vector<6x6x16xf32> to vector<4x4x16xf32>
    %81 = tpu.concatenate %72, %73, %74, %75, %76, %77, %78, %79, %80 in 2 : vector<4x4x16xf32>, vector<4x4x16xf32>, vector<4x4x16xf32>, vector<4x4x16xf32>, vector<4x4x16xf32>, vector<4x4x16xf32>, vector<4x4x16xf32>, vector<4x4x16xf32>, vector<4x4x16xf32> -> vector<4x4x144xf32>
    %82 = vector.shape_cast %81 : vector<4x4x144xf32> to vector<16x144xf32>
    %c0_61 = arith.constant 0 : index
    %c0_62 = arith.constant 0 : index
    %83 = vector.load %arg6[%c0_61, %c0_62] : memref<144x16xf32, #tpu.memory_space<vmem>>, vector<144x16xf32>
    %cst_63 = arith.constant dense<0.000000e+00> : vector<16x16xf32>
    %84 = tpu.matmul %82, %83, %cst_63 {dimension_numbers = #tpu.dot_dimension_numbers<[1], [0], [0], [1], [0, 0, 1, 1], [], []>} : vector<16x144xf32>, vector<144x16xf32>, vector<16x16xf32> -> vector<16x16xf32>
    %c0_64 = arith.constant 0 : index
    %c0_65 = arith.constant 0 : index
    %85 = vector.load %arg7[%c0_64, %c0_65] : memref<1x16xf32, #tpu.memory_space<vmem>>, vector<1x16xf32>
    %86 = vector.broadcast %85 : vector<1x16xf32> to vector<16x16xf32>
    %87 = arith.addf %84, %86 : vector<16x16xf32>
    %cst_66 = arith.constant 0.000000e+00 : f32
    %88 = vector.broadcast %cst_66 : f32 to vector<16x16xf32>
    %89 = arith.maximumf %87, %88 : vector<16x16xf32>
    %90 = vector.shape_cast %89 : vector<16x16xf32> to vector<4x4x16xf32>
    %91 = vector.shape_cast %90 : vector<4x4x16xf32> to vector<2x2x4x16xf32>
    %92 = vector.extract_strided_slice %91 {offsets = [0, 0, 0, 0], sizes = [2, 1, 4, 16], strides = [1, 1, 1, 1]} : vector<2x2x4x16xf32> to vector<2x1x4x16xf32>
    %93 = vector.shape_cast %92 : vector<2x1x4x16xf32> to vector<2x4x16xf32>
    %94 = vector.extract_strided_slice %91 {offsets = [0, 1, 0, 0], sizes = [2, 1, 4, 16], strides = [1, 1, 1, 1]} : vector<2x2x4x16xf32> to vector<2x1x4x16xf32>
    %95 = vector.shape_cast %94 : vector<2x1x4x16xf32> to vector<2x4x16xf32>
    %96 = arith.maximumf %93, %95 : vector<2x4x16xf32>
    %c0_67 = arith.constant 0 : index
    %c0_68 = arith.constant 0 : index
    %c0_69 = arith.constant 0 : index
    %97 = vector.load %arg17[%c0_67, %c0_68, %c0_69] : memref<2x4x16xf32, #tpu.memory_space<vmem>>, vector<2x4x16xf32>
    tpu.vector_store %arg17[%c0_67, %c0_68, %c0_69], %96 {strides = array<i32>} : memref<2x4x16xf32, #tpu.memory_space<vmem>>, vector<2x4x16xf32>,
    %c0_70 = arith.constant 0 : index
    %c0_71 = arith.constant 0 : index
    %c0_72 = arith.constant 0 : index
    %98 = tpu.strided_load %arg17[%c0_70, %c0_71, %c0_72] {strides = array<i32: 1, 2, 1>} : memref<2x4x16xf32, #tpu.memory_space<vmem>>, vector<2x2x16xf32>
    %c0_73 = arith.constant 0 : index
    %c1_74 = arith.constant 1 : index
    %c0_75 = arith.constant 0 : index
    %99 = tpu.strided_load %arg17[%c0_73, %c1_74, %c0_75] {strides = array<i32: 1, 2, 1>} : memref<2x4x16xf32, #tpu.memory_space<vmem>>, vector<2x2x16xf32>
    %100 = arith.maximumf %98, %99 : vector<2x2x16xf32>
    %cst_76 = arith.constant 0.000000e+00 : f32
    %101 = vector.broadcast %cst_76 : f32 to vector<4x4x16xf32>
    %c0_77 = arith.constant 0 : index
    %c0_78 = arith.constant 0 : index
    %c0_79 = arith.constant 0 : index
    %102 = vector.load %arg14[%c0_77, %c0_78, %c0_79] : memref<4x4x16xf32, #tpu.memory_space<vmem>>, vector<4x4x16xf32>
    tpu.vector_store %arg14[%c0_77, %c0_78, %c0_79], %101 {strides = array<i32>} : memref<4x4x16xf32, #tpu.memory_space<vmem>>, vector<4x4x16xf32>,
    %c1_80 = arith.constant 1 : index
    %c1_81 = arith.constant 1 : index
    %c0_82 = arith.constant 0 : index
    %103 = vector.load %arg14[%c1_80, %c1_81, %c0_82] : memref<4x4x16xf32, #tpu.memory_space<vmem>>, vector<2x2x16xf32>
    tpu.vector_store %arg14[%c1_80, %c1_81, %c0_82], %100 {strides = array<i32>} : memref<4x4x16xf32, #tpu.memory_space<vmem>>, vector<2x2x16xf32>,
    %c0_83 = arith.constant 0 : index
    %c0_84 = arith.constant 0 : index
    %c0_85 = arith.constant 0 : index
    %104 = vector.load %arg14[%c0_83, %c0_84, %c0_85] : memref<4x4x16xf32, #tpu.memory_space<vmem>>, vector<4x4x16xf32>
    %105 = vector.extract_strided_slice %104 {offsets = [0, 0, 0], sizes = [2, 2, 16], strides = [1, 1, 1]} : vector<4x4x16xf32> to vector<2x2x16xf32>
    %106 = vector.extract_strided_slice %104 {offsets = [0, 1, 0], sizes = [2, 2, 16], strides = [1, 1, 1]} : vector<4x4x16xf32> to vector<2x2x16xf32>
    %107 = vector.extract_strided_slice %104 {offsets = [0, 2, 0], sizes = [2, 2, 16], strides = [1, 1, 1]} : vector<4x4x16xf32> to vector<2x2x16xf32>
    %108 = vector.extract_strided_slice %104 {offsets = [1, 0, 0], sizes = [2, 2, 16], strides = [1, 1, 1]} : vector<4x4x16xf32> to vector<2x2x16xf32>
    %109 = vector.extract_strided_slice %104 {offsets = [1, 1, 0], sizes = [2, 2, 16], strides = [1, 1, 1]} : vector<4x4x16xf32> to vector<2x2x16xf32>
    %110 = vector.extract_strided_slice %104 {offsets = [1, 2, 0], sizes = [2, 2, 16], strides = [1, 1, 1]} : vector<4x4x16xf32> to vector<2x2x16xf32>
    %111 = vector.extract_strided_slice %104 {offsets = [2, 0, 0], sizes = [2, 2, 16], strides = [1, 1, 1]} : vector<4x4x16xf32> to vector<2x2x16xf32>
    %112 = vector.extract_strided_slice %104 {offsets = [2, 1, 0], sizes = [2, 2, 16], strides = [1, 1, 1]} : vector<4x4x16xf32> to vector<2x2x16xf32>
    %113 = vector.extract_strided_slice %104 {offsets = [2, 2, 0], sizes = [2, 2, 16], strides = [1, 1, 1]} : vector<4x4x16xf32> to vector<2x2x16xf32>
    %114 = tpu.concatenate %105, %106, %107, %108, %109, %110, %111, %112, %113 in 2 : vector<2x2x16xf32>, vector<2x2x16xf32>, vector<2x2x16xf32>, vector<2x2x16xf32>, vector<2x2x16xf32>, vector<2x2x16xf32>, vector<2x2x16xf32>, vector<2x2x16xf32>, vector<2x2x16xf32> -> vector<2x2x144xf32>
    %115 = vector.shape_cast %114 : vector<2x2x144xf32> to vector<4x144xf32>
    %c0_86 = arith.constant 0 : index
    %c0_87 = arith.constant 0 : index
    %116 = vector.load %arg8[%c0_86, %c0_87] : memref<144x16xf32, #tpu.memory_space<vmem>>, vector<144x16xf32>
    %cst_88 = arith.constant dense<0.000000e+00> : vector<4x16xf32>
    %117 = tpu.matmul %115, %116, %cst_88 {dimension_numbers = #tpu.dot_dimension_numbers<[1], [0], [0], [1], [0, 0, 1, 1], [], []>} : vector<4x144xf32>, vector<144x16xf32>, vector<4x16xf32> -> vector<4x16xf32>
    %c0_89 = arith.constant 0 : index
    %c0_90 = arith.constant 0 : index
    %118 = vector.load %arg9[%c0_89, %c0_90] : memref<1x16xf32, #tpu.memory_space<vmem>>, vector<1x16xf32>
    %119 = vector.broadcast %118 : vector<1x16xf32> to vector<4x16xf32>
    %120 = arith.addf %117, %119 : vector<4x16xf32>
    %cst_91 = arith.constant 0.000000e+00 : f32
    %121 = vector.broadcast %cst_91 : f32 to vector<4x16xf32>
    %122 = arith.maximumf %120, %121 : vector<4x16xf32>
    %123 = vector.shape_cast %122 : vector<4x16xf32> to vector<2x2x16xf32>
    %cst_92 = arith.constant 0.000000e+00 : f32
    %124 = vector.broadcast %cst_92 : f32 to vector<4x4x16xf32>
    %c0_93 = arith.constant 0 : index
    %c0_94 = arith.constant 0 : index
    %c0_95 = arith.constant 0 : index
    %125 = vector.load %arg18[%c0_93, %c0_94, %c0_95] : memref<4x4x16xf32, #tpu.memory_space<vmem>>, vector<4x4x16xf32>
    tpu.vector_store %arg18[%c0_93, %c0_94, %c0_95], %124 {strides = array<i32>} : memref<4x4x16xf32, #tpu.memory_space<vmem>>, vector<4x4x16xf32>,
    %c1_96 = arith.constant 1 : index
    %c1_97 = arith.constant 1 : index
    %c0_98 = arith.constant 0 : index
    %126 = vector.load %arg18[%c1_96, %c1_97, %c0_98] : memref<4x4x16xf32, #tpu.memory_space<vmem>>, vector<2x2x16xf32>
    tpu.vector_store %arg18[%c1_96, %c1_97, %c0_98], %123 {strides = array<i32>} : memref<4x4x16xf32, #tpu.memory_space<vmem>>, vector<2x2x16xf32>,
    %c0_99 = arith.constant 0 : index
    %c0_100 = arith.constant 0 : index
    %c0_101 = arith.constant 0 : index
    %127 = vector.load %arg18[%c0_99, %c0_100, %c0_101] : memref<4x4x16xf32, #tpu.memory_space<vmem>>, vector<2x2x16xf32>
    %c0_102 = arith.constant 0 : index
    %c1_103 = arith.constant 1 : index
    %c0_104 = arith.constant 0 : index
    %128 = vector.load %arg18[%c0_102, %c1_103, %c0_104] : memref<4x4x16xf32, #tpu.memory_space<vmem>>, vector<2x2x16xf32>
    %129 = arith.maximumf %127, %128 : vector<2x2x16xf32>
    %c0_105 = arith.constant 0 : index
    %c2 = arith.constant 2 : index
    %c0_106 = arith.constant 0 : index
    %130 = vector.load %arg18[%c0_105, %c2, %c0_106] : memref<4x4x16xf32, #tpu.memory_space<vmem>>, vector<2x2x16xf32>
    %131 = arith.maximumf %129, %130 : vector<2x2x16xf32>
    %c1_107 = arith.constant 1 : index
    %c0_108 = arith.constant 0 : index
    %c0_109 = arith.constant 0 : index
    %132 = vector.load %arg18[%c1_107, %c0_108, %c0_109] : memref<4x4x16xf32, #tpu.memory_space<vmem>>, vector<2x2x16xf32>
    %133 = arith.maximumf %131, %132 : vector<2x2x16xf32>
    %c1_110 = arith.constant 1 : index
    %c1_111 = arith.constant 1 : index
    %c0_112 = arith.constant 0 : index
    %134 = vector.load %arg18[%c1_110, %c1_111, %c0_112] : memref<4x4x16xf32, #tpu.memory_space<vmem>>, vector<2x2x16xf32>
    %135 = arith.maximumf %133, %134 : vector<2x2x16xf32>
    %c1_113 = arith.constant 1 : index
    %c2_114 = arith.constant 2 : index
    %c0_115 = arith.constant 0 : index
    %136 = vector.load %arg18[%c1_113, %c2_114, %c0_115] : memref<4x4x16xf32, #tpu.memory_space<vmem>>, vector<2x2x16xf32>
    %137 = arith.maximumf %135, %136 : vector<2x2x16xf32>
    %c2_116 = arith.constant 2 : index
    %c0_117 = arith.constant 0 : index
    %c0_118 = arith.constant 0 : index
    %138 = vector.load %arg18[%c2_116, %c0_117, %c0_118] : memref<4x4x16xf32, #tpu.memory_space<vmem>>, vector<2x2x16xf32>
    %139 = arith.maximumf %137, %138 : vector<2x2x16xf32>
    %c2_119 = arith.constant 2 : index
    %c1_120 = arith.constant 1 : index
    %c0_121 = arith.constant 0 : index
    %140 = vector.load %arg18[%c2_119, %c1_120, %c0_121] : memref<4x4x16xf32, #tpu.memory_space<vmem>>, vector<2x2x16xf32>
    %141 = arith.maximumf %139, %140 : vector<2x2x16xf32>
    %c2_122 = arith.constant 2 : index
    %c2_123 = arith.constant 2 : index
    %c0_124 = arith.constant 0 : index
    %142 = vector.load %arg18[%c2_122, %c2_123, %c0_124] : memref<4x4x16xf32, #tpu.memory_space<vmem>>, vector<2x2x16xf32>
    %143 = arith.maximumf %141, %142 : vector<2x2x16xf32>
    %c0_125 = arith.constant 0 : index
    %c0_126 = arith.constant 0 : index
    %c0_127 = arith.constant 0 : index
    %c0_128 = arith.constant 0 : index
    %144 = vector.load %arg10[%c0_125, %c0_126, %c0_127, %c0_128] : memref<1x2x2x16xf32, #tpu.memory_space<vmem>>, vector<1x2x2x16xf32>
    %145 = vector.shape_cast %144 : vector<1x2x2x16xf32> to vector<2x2x16xf32>
    %146 = vector.shape_cast %143 : vector<2x2x16xf32> to vector<1x2x2x16xf32>
    tpu.vector_store %arg10[%c0_125, %c0_126, %c0_127, %c0_128], %146 {strides = array<i32>} : memref<1x2x2x16xf32, #tpu.memory_space<vmem>>, vector<1x2x2x16xf32>,
    return
  }
  func.func @transform_0(%arg0: i32) -> (i32, i32, i32, i32) {
    %c0_i32 = arith.constant 0 : i32
    %c0_i32_0 = arith.constant 0 : i32
    %c0_i32_1 = arith.constant 0 : i32
    %c0_i32_2 = arith.constant 0 : i32
    return %arg0, %c0_i32, %c0_i32_0, %c0_i32_1 : i32, i32, i32, i32
  }
  func.func @transform_1(%arg0: i32) -> (i32, i32) {
    %c0_i32 = arith.constant 0 : i32
    %c0_i32_0 = arith.constant 0 : i32
    %c0_i32_1 = arith.constant 0 : i32
    return %c0_i32, %c0_i32_0 : i32, i32
  }
  func.func @transform_2(%arg0: i32) -> (i32, i32) {
    %c0_i32 = arith.constant 0 : i32
    %c0_i32_0 = arith.constant 0 : i32
    %c0_i32_1 = arith.constant 0 : i32
    return %c0_i32, %c0_i32_0 : i32, i32
  }
  func.func @transform_3(%arg0: i32) -> (i32, i32) {
    %c0_i32 = arith.constant 0 : i32
    %c0_i32_0 = arith.constant 0 : i32
    %c0_i32_1 = arith.constant 0 : i32
    return %c0_i32, %c0_i32_0 : i32, i32
  }
  func.func @transform_4(%arg0: i32) -> (i32, i32) {
    %c0_i32 = arith.constant 0 : i32
    %c0_i32_0 = arith.constant 0 : i32
    %c0_i32_1 = arith.constant 0 : i32
    return %c0_i32, %c0_i32_0 : i32, i32
  }
  func.func @transform_5(%arg0: i32) -> (i32, i32) {
    %c0_i32 = arith.constant 0 : i32
    %c0_i32_0 = arith.constant 0 : i32
    %c0_i32_1 = arith.constant 0 : i32
    return %c0_i32, %c0_i32_0 : i32, i32
  }
  func.func @transform_6(%arg0: i32) -> (i32, i32) {
    %c0_i32 = arith.constant 0 : i32
    %c0_i32_0 = arith.constant 0 : i32
    %c0_i32_1 = arith.constant 0 : i32
    return %c0_i32, %c0_i32_0 : i32, i32
  }
  func.func @transform_7(%arg0: i32) -> (i32, i32) {
    %c0_i32 = arith.constant 0 : i32
    %c0_i32_0 = arith.constant 0 : i32
    %c0_i32_1 = arith.constant 0 : i32
    return %c0_i32, %c0_i32_0 : i32, i32
  }
  func.func @transform_8(%arg0: i32) -> (i32, i32) {
    %c0_i32 = arith.constant 0 : i32
    %c0_i32_0 = arith.constant 0 : i32
    %c0_i32_1 = arith.constant 0 : i32
    return %c0_i32, %c0_i32_0 : i32, i32
  }
  func.func @transform_9(%arg0: i32) -> (i32, i32, i32, i32) {
    %c0_i32 = arith.constant 0 : i32
    %c0_i32_0 = arith.constant 0 : i32
    %c0_i32_1 = arith.constant 0 : i32
    %c0_i32_2 = arith.constant 0 : i32
    return %arg0, %c0_i32, %c0_i32_0, %c0_i32_1 : i32, i32, i32, i32
  }
}

</mosaic_0001>

<llo_original>
// kernel: fnet_forward.1
$region0: #{fnet_forward.1}
  #allocation0 [shape = 'u32[]', space=smem, size = 0x4, offset = 0x4, fixed_abs, tag = 'smem constant byte address 0x4 - core index']
  #allocation1 [shape = 'u32[144,128]{1,0:T(1,128)}', space=vmem, size = 0x12000, scoped, tag = 'internal scratch']
  #allocation2 [shape = 'f32[18,18,1]{2,1,0:T(8,128)}', space=vmem, size = 0x36000, scoped, tag = 'scratch operand']
  #allocation3 [shape = 'f32[10,10,16]{2,1,0:T(8,128)}', space=vmem, size = 0x14000, scoped, tag = 'scratch operand']
  #allocation4 [shape = 'f32[6,6,16]{2,1,0:T(8,128)}', space=vmem, size = 0x6000, scoped, tag = 'scratch operand']
  #allocation5 [shape = 'f32[4,4,16]{2,1,0:T(4,128)}', space=vmem, size = 0x2000, scoped, tag = 'scratch operand']
  #allocation6 [shape = 'f32[8,16,16]{2,1,0:T(8,128)}', space=vmem, size = 0x10000, scoped, tag = 'scratch operand']
  #allocation7 [shape = 'f32[4,8,16]{2,1,0:T(8,128)}', space=vmem, size = 0x4000, scoped, tag = 'scratch operand']
  #allocation8 [shape = 'f32[2,4,16]{2,1,0:T(4,128)}', space=vmem, size = 0x1000, scoped, tag = 'scratch operand']
  #allocation9 [shape = 'f32[4,4,16]{2,1,0:T(4,128)}', space=vmem, size = 0x2000, scoped, tag = 'scratch operand']
  %s0 = inlined_call_operand.vmem [shape: f32[2,16,16,1], index: 0, kind: input, shape index: {}]
  %s1 = inlined_call_operand.vmem [shape: f32[9,16], index: 1, kind: input, shape index: {}]
  %s2 = inlined_call_operand.vmem [shape: f32[1,16], index: 2, kind: input, shape index: {}]
  %s3 = inlined_call_operand.vmem [shape: f32[144,16], index: 3, kind: input, shape index: {}]
  %s4 = inlined_call_operand.vmem [shape: f32[1,16], index: 4, kind: input, shape index: {}]
  %s5 = inlined_call_operand.vmem [shape: f32[144,16], index: 5, kind: input, shape index: {}]
  %s6 = inlined_call_operand.vmem [shape: f32[1,16], index: 6, kind: input, shape index: {}]
  %s7 = inlined_call_operand.vmem [shape: f32[144,16], index: 7, kind: input, shape index: {}]
  %s8 = inlined_call_operand.vmem [shape: f32[1,16], index: 8, kind: input, shape index: {}]
  %s9 = inlined_call_operand.hbm [shape: f32[2,2,2,16], index: 9, kind: output, shape index: {}]
  %s10 = sld [smem:[#allocation0]]
  $region69: #{fnet_forward.1} parent=0
    _
  %s12 = ssub.s32 1, %s10
  %s13 = scalar_select 0, %s12, %s10
  $region1: #{fnet_forward.1} parent=0
    #allocation10 [shape = 'u8[4096]{0}', space=vmem, size = 0x1000, scoped, tag = 'output window, operand 0']
    #allocation11 [shape = 's32[2]{0}', space=sflag, size = 0x8, scoped, tag = 'scoped memory for fnet_forward.1']
    %14 = vsyncpa [#allocation11], 0
    %s15 = scalar_lea.sflag [#allocation11], 1
    %16 = vsyncpa %s15, 0
    loop: start=0, step=1, limit=4
    $region2: #{fnet_forward.1} parent=1 // loop_pre_header
      _
    $region3: #{fnet_forward.1} parent=1 // loop_header
      %s18 = sphi 0, %s22
      %p19 = scmp.ge.s32.totalorder %s18, 4
      %s28 = sphi 0, %s30
      %s31 = sphi 0, %s28
      %s32 = sphi 0, %s31
      %s48 = sphi 0, %s32
      %s52 = sphi 0, %s52
      %s54 = sphi 0, %s52
      %s55 = sphi 0, %s54
      %s69 = sphi 0, %s55
      %s73 = sphi 0, %s73
      %s75 = sphi 0, %s73
      %s76 = sphi 0, %s75
      %s90 = sphi 0, %s76
      %s94 = sphi 0, %s94
      %s96 = sphi 0, %s94
      %s97 = sphi 0, %s96
      %s111 = sphi 0, %s97
      %s115 = sphi 0, %s115
      %s117 = sphi 0, %s115
      %s118 = sphi 0, %s117
      %s132 = sphi 0, %s118
      %s136 = sphi 0, %s136
      %s138 = sphi 0, %s136
      %s139 = sphi 0, %s138
      %s153 = sphi 0, %s139
      %s157 = sphi 0, %s157
      %s159 = sphi 0, %s157
      %s160 = sphi 0, %s159
      %s174 = sphi 0, %s160
      %s178 = sphi 0, %s178
      %s180 = sphi 0, %s178
      %s181 = sphi 0, %s180
      %s195 = sphi 0, %s181
      %s199 = sphi 0, %s199
      %s201 = sphi 0, %s199
      %s202 = sphi 0, %s201
      %s216 = sphi 0, %s202
      %s222 = sphi 0, %s224
      %s225 = sphi 0, %s222
      %s226 = sphi 0, %s225
      %s242 = sphi 0, %s226
    $region4: #{fnet_forward.1} parent=1 // loop_header_branch
      %21 = sbr.rel (%p19) target = $region8
    $region5: #{fnet_forward.1} parent=1 // loop_body
      %s23 = ssub.s32 %s18, 1
      %s24 = ssub.s32 %s18, 2
      %s25 = sadd.s32 %s18, 1
      %s26 = ssub.s32 %s18, %s25
      %p27 = scmp.eq.s32.totalorder %s26, 0
      %s29 = sadd.s32 %s28, 1
      %s30 = scalar_select %p27, %s28, %s29
      %p33 = pneg %p27
      %p34 = scmp.eq.s32.totalorder %s18, 1
      %p35 = por %p33, %p34
      %p36 = scmp.ne.s32.totalorder %s28, %s31
      %p37 = scmp.eq.s32.totalorder %s18, 0
      %p38 = por %p36, %p37
      %p39 = scmp.ne.s32.totalorder %s28, %s31
      %p40 = scmp.eq.s32.totalorder %s23, 1
      %p41 = por %p39, %p40
      %p42 = scmp.ne.s32.totalorder %s31, %s32
      %p43 = scmp.eq.s32.totalorder %s23, 0
      %p44 = por %p42, %p43
      %p45 = scmp.ne.s32.totalorder %s31, %s32
      %p46 = scmp.eq.s32.totalorder %s24, 1
      %p47 = por %p45, %p46
      %p49 = scmp.ne.s32.totalorder %s32, %s48
      %p50 = scmp.eq.s32.totalorder %s24, 0
      %p51 = por %p49, %p50
      %s53 = sadd.s32 %s52, 1
      %p56 = scmp.eq.s32.totalorder %s18, 1
      %p57 = scmp.ne.s32.totalorder %s52, %s54
      %p58 = scmp.eq.s32.totalorder %s18, 0
      %p59 = por %p57, %p58
      %p60 = scmp.ne.s32.totalorder %s52, %s54
      %p61 = scmp.eq.s32.totalorder %s23, 1
      %p62 = por %p60, %p61
      %p63 = scmp.ne.s32.totalorder %s54, %s55
      %p64 = scmp.eq.s32.totalorder %s23, 0
      %p65 = por %p63, %p64
      %p66 = scmp.ne.s32.totalorder %s54, %s55
      %p67 = scmp.eq.s32.totalorder %s24, 1
      %p68 = por %p66, %p67
      %p70 = scmp.ne.s32.totalorder %s55, %s69
      %p71 = scmp.eq.s32.totalorder %s24, 0
      %p72 = por %p70, %p71
      %s74 = sadd.s32 %s73, 1
      %p77 = scmp.eq.s32.totalorder %s18, 1
      %p78 = scmp.ne.s32.totalorder %s73, %s75
      %p79 = scmp.eq.s32.totalorder %s18, 0
      %p80 = por %p78, %p79
      %p81 = scmp.ne.s32.totalorder %s73, %s75
      %p82 = scmp.eq.s32.totalorder %s23, 1
      %p83 = por %p81, %p82
      %p84 = scmp.ne.s32.totalorder %s75, %s76
      %p85 = scmp.eq.s32.totalorder %s23, 0
      %p86 = por %p84, %p85
      %p87 = scmp.ne.s32.totalorder %s75, %s76
      %p88 = scmp.eq.s32.totalorder %s24, 1
      %p89 = por %p87, %p88
      %p91 = scmp.ne.s32.totalorder %s76, %s90
      %p92 = scmp.eq.s32.totalorder %s24, 0
      %p93 = por %p91, %p92
      %s95 = sadd.s32 %s94, 1
      %p98 = scmp.eq.s32.totalorder %s18, 1
      %p99 = scmp.ne.s32.totalorder %s94, %s96
      %p100 = scmp.eq.s32.totalorder %s18, 0
      %p101 = por %p99, %p100
      %p102 = scmp.ne.s32.totalorder %s94, %s96
      %p103 = scmp.eq.s32.totalorder %s23, 1
      %p104 = por %p102, %p103
      %p105 = scmp.ne.s32.totalorder %s96, %s97
      %p106 = scmp.eq.s32.totalorder %s23, 0
      %p107 = por %p105, %p106
      %p108 = scmp.ne.s32.totalorder %s96, %s97
      %p109 = scmp.eq.s32.totalorder %s24, 1
      %p110 = por %p108, %p109
      %p112 = scmp.ne.s32.totalorder %s97, %s111
      %p113 = scmp.eq.s32.totalorder %s24, 0
      %p114 = por %p112, %p113
      %s116 = sadd.s32 %s115, 1
      %p119 = scmp.eq.s32.totalorder %s18, 1
      %p120 = scmp.ne.s32.totalorder %s115, %s117
      %p121 = scmp.eq.s32.totalorder %s18, 0
      %p122 = por %p120, %p121
      %p123 = scmp.ne.s32.totalorder %s115, %s117
      %p124 = scmp.eq.s32.totalorder %s23, 1
      %p125 = por %p123, %p124
      %p126 = scmp.ne.s32.totalorder %s117, %s118
      %p127 = scmp.eq.s32.totalorder %s23, 0
      %p128 = por %p126, %p127
      %p129 = scmp.ne.s32.totalorder %s117, %s118
      %p130 = scmp.eq.s32.totalorder %s24, 1
      %p131 = por %p129, %p130
      %p133 = scmp.ne.s32.totalorder %s118, %s132
      %p134 = scmp.eq.s32.totalorder %s24, 0
      %p135 = por %p133, %p134
      %s137 = sadd.s32 %s136, 1
      %p140 = scmp.eq.s32.totalorder %s18, 1
      %p141 = scmp.ne.s32.totalorder %s136, %s138
      %p142 = scmp.eq.s32.totalorder %s18, 0
      %p143 = por %p141, %p142
      %p144 = scmp.ne.s32.totalorder %s136, %s138
      %p145 = scmp.eq.s32.totalorder %s23, 1
      %p146 = por %p144, %p145
      %p147 = scmp.ne.s32.totalorder %s138, %s139
      %p148 = scmp.eq.s32.totalorder %s23, 0
      %p149 = por %p147, %p148
      %p150 = scmp.ne.s32.totalorder %s138, %s139
      %p151 = scmp.eq.s32.totalorder %s24, 1
      %p152 = por %p150, %p151
      %p154 = scmp.ne.s32.totalorder %s139, %s153
      %p155 = scmp.eq.s32.totalorder %s24, 0
      %p156 = por %p154, %p155
      %s158 = sadd.s32 %s157, 1
      %p161 = scmp.eq.s32.totalorder %s18, 1
      %p162 = scmp.ne.s32.totalorder %s157, %s159
      %p163 = scmp.eq.s32.totalorder %s18, 0
      %p164 = por %p162, %p163
      %p165 = scmp.ne.s32.totalorder %s157, %s159
      %p166 = scmp.eq.s32.totalorder %s23, 1
      %p167 = por %p165, %p166
      %p168 = scmp.ne.s32.totalorder %s159, %s160
      %p169 = scmp.eq.s32.totalorder %s23, 0
      %p170 = por %p168, %p169
      %p171 = scmp.ne.s32.totalorder %s159, %s160
      %p172 = scmp.eq.s32.totalorder %s24, 1
      %p173 = por %p171, %p172
      %p175 = scmp.ne.s32.totalorder %s160, %s174
      %p176 = scmp.eq.s32.totalorder %s24, 0
      %p177 = por %p175, %p176
      %s179 = sadd.s32 %s178, 1
      %p182 = scmp.eq.s32.totalorder %s18, 1
      %p183 = scmp.ne.s32.totalorder %s178, %s180
      %p184 = scmp.eq.s32.totalorder %s18, 0
      %p185 = por %p183, %p184
      %p186 = scmp.ne.s32.totalorder %s178, %s180
      %p187 = scmp.eq.s32.totalorder %s23, 1
      %p188 = por %p186, %p187
      %p189 = scmp.ne.s32.totalorder %s180, %s181
      %p190 = scmp.eq.s32.totalorder %s23, 0
      %p191 = por %p189, %p190
      %p192 = scmp.ne.s32.totalorder %s180, %s181
      %p193 = scmp.eq.s32.totalorder %s24, 1
      %p194 = por %p192, %p193
      %p196 = scmp.ne.s32.totalorder %s181, %s195
      %p197 = scmp.eq.s32.totalorder %s24, 0
      %p198 = por %p196, %p197
      %s200 = sadd.s32 %s199, 1
      %p203 = scmp.eq.s32.totalorder %s18, 1
      %p204 = scmp.ne.s32.totalorder %s199, %s201
      %p205 = scmp.eq.s32.totalorder %s18, 0
      %p206 = por %p204, %p205
      %p207 = scmp.ne.s32.totalorder %s199, %s201
      %p208 = scmp.eq.s32.totalorder %s23, 1
      %p209 = por %p207, %p208
      %p210 = scmp.ne.s32.totalorder %s201, %s202
      %p211 = scmp.eq.s32.totalorder %s23, 0
      %p212 = por %p210, %p211
      %p213 = scmp.ne.s32.totalorder %s201, %s202
      %p214 = scmp.eq.s32.totalorder %s24, 1
      %p215 = por %p213, %p214
      %p217 = scmp.ne.s32.totalorder %s202, %s216
      %p218 = scmp.eq.s32.totalorder %s24, 0
      %p219 = por %p217, %p218
      %s220 = ssub.s32 %s18, %s25
      %p221 = scmp.eq.s32.totalorder %s220, 0
      %s223 = sadd.s32 %s222, 1
      %s224 = scalar_select %p221, %s222, %s223
      %p227 = pneg %p221
      %p228 = scmp.eq.s32.totalorder %s18, 1
      %p229 = por %p227, %p228
      %p230 = scmp.ne.s32.totalorder %s222, %s225
      %p231 = scmp.eq.s32.totalorder %s18, 0
      %p232 = por %p230, %p231
      %p233 = scmp.ne.s32.totalorder %s222, %s225
      %p234 = scmp.eq.s32.totalorder %s23, 1
      %p235 = por %p233, %p234
      %p236 = scmp.ne.s32.totalorder %s225, %s226
      %p237 = scmp.eq.s32.totalorder %s23, 0
      %p238 = por %p236, %p237
      %p239 = scmp.ne.s32.totalorder %s225, %s226
      %p240 = scmp.eq.s32.totalorder %s24, 1
      %p241 = por %p239, %p240
      %p243 = scmp.ne.s32.totalorder %s226, %s242
      %p244 = scmp.eq.s32.totalorder %s24, 0
      %p245 = por %p243, %p244
      %p246 = scmp.le.s32.totalorder 1, %s18
      %p247 = scmp.lt.s32.totalorder %s18, 3
      %p248 = pnand %p246, %p247
      %p249 = pneg %p248
      // Predicated region
      $region9: #{fnet_forward.1} parent=5 // pred_check
        _
      $region10: #{fnet_forward.1} parent=5 // pred_check_branch
        %251 = sbr.rel (%p248) target = $region12
      $region11: #{fnet_forward.1} parent=5 // pred_region
        %s252 = ssub.s32 %s18, 1
        // Predicated region
        $region13: #{fnet_forward.1} parent=11 // pred_check
          %p253 = pneg %p65
        $region14: #{fnet_forward.1} parent=11 // pred_check_branch
          %255 = sbr.rel (%p253) target = $region16
        $region15: #{fnet_forward.1} parent=11 // pred_region
          _
        $region16: #{fnet_forward.1} parent=11 // pred_fallthru
          _
        // Predicated region
        $region17: #{fnet_forward.1} parent=11 // pred_check
          %p256 = pneg %p86
        $region18: #{fnet_forward.1} parent=11 // pred_check_branch
          %258 = sbr.rel (%p256) target = $region20
        $region19: #{fnet_forward.1} parent=11 // pred_region
          _
        $region20: #{fnet_forward.1} parent=11 // pred_fallthru
          _
        // Predicated region
        $region21: #{fnet_forward.1} parent=11 // pred_check
          %p259 = pneg %p107
        $region22: #{fnet_forward.1} parent=11 // pred_check_branch
          %261 = sbr.rel (%p259) target = $region24
        $region23: #{fnet_forward.1} parent=11 // pred_region
          _
        $region24: #{fnet_forward.1} parent=11 // pred_fallthru
          _
        // Predicated region
        $region25: #{fnet_forward.1} parent=11 // pred_check
          %p262 = pneg %p128
        $region26: #{fnet_forward.1} parent=11 // pred_check_branch
          %264 = sbr.rel (%p262) target = $region28
        $region27: #{fnet_forward.1} parent=11 // pred_region
          _
        $region28: #{fnet_forward.1} parent=11 // pred_fallthru
          _
        // Predicated region
        $region29: #{fnet_forward.1} parent=11 // pred_check
          %p265 = pneg %p149
        $region30: #{fnet_forward.1} parent=11 // pred_check_branch
          %267 = sbr.rel (%p265) target = $region32
        $region31: #{fnet_forward.1} parent=11 // pred_region
          _
        $region32: #{fnet_forward.1} parent=11 // pred_fallthru
          _
        // Predicated region
        $region33: #{fnet_forward.1} parent=11 // pred_check
          %p268 = pneg %p170
        $region34: #{fnet_forward.1} parent=11 // pred_check_branch
          %270 = sbr.rel (%p268) target = $region36
        $region35: #{fnet_forward.1} parent=11 // pred_region
          _
        $region36: #{fnet_forward.1} parent=11 // pred_fallthru
          _
        // Predicated region
        $region37: #{fnet_forward.1} parent=11 // pred_check
          %p271 = pneg %p191
        $region38: #{fnet_forward.1} parent=11 // pred_check_branch
          %273 = sbr.rel (%p271) target = $region40
        $region39: #{fnet_forward.1} parent=11 // pred_region
          _
        $region40: #{fnet_forward.1} parent=11 // pred_fallthru
          _
        // Predicated region
        $region41: #{fnet_forward.1} parent=11 // pred_check
          %p274 = pneg %p212
        $region42: #{fnet_forward.1} parent=11 // pred_check_branch
          %276 = sbr.rel (%p274) target = $region44
        $region43: #{fnet_forward.1} parent=11 // pred_region
          _
        $region44: #{fnet_forward.1} parent=11 // pred_fallthru
          _
      $region12: #{fnet_forward.1} parent=5 // pred_fallthru
        _
      %p277 = scmp.lt.s32.totalorder %s18, 2
      // Predicated region
      $region45: #{fnet_forward.1} parent=5 // pred_check
        %p278 = pneg %p277
      $region46: #{fnet_forward.1} parent=5 // pred_check_branch
        %280 = sbr.rel (%p278) target = $region48
      $region47: #{fnet_forward.1} parent=5 // pred_region
        // Predicated region
        $region49: #{fnet_forward.1} parent=47 // pred_check
          %p281 = pneg %p38
        $region50: #{fnet_forward.1} parent=47 // pred_check_branch
          %283 = sbr.rel (%p281) target = $region52
        $region51: #{fnet_forward.1} parent=47 // pred_region
          %p284 = scmp.lt.s32.totalorder %s18, 1
          %s285 = scalar_select %p284, %s18, 1
          %s286 = smul.addr %s285, 32
          %s287 = smul.addr %s286, 8
          %s288 = scalar_lea.vmem %s0, %s287
        $region52: #{fnet_forward.1} parent=47 // pred_fallthru
          _
      $region48: #{fnet_forward.1} parent=5 // pred_fallthru
        _
      %p289 = scmp.le.s32.totalorder 1, %s18
      %p290 = scmp.lt.s32.totalorder %s18, 3
      %p291 = pnand %p289, %p290
      %p292 = pneg %p291
      // Predicated region
      $region53: #{fnet_forward.1} parent=5 // pred_check
        _
      $region54: #{fnet_forward.1} parent=5 // pred_check_branch
        %294 = sbr.rel (%p291) target = $region56
      $region55: #{fnet_forward.1} parent=5 // pred_region
        %s295 = ssub.s32 %s18, 1
        %p296 = scmp.lt.s32.totalorder %s23, 1
        %s297 = scalar_select %p296, %s23, 1
        %s298 = smul.addr %s297, 32
        %s299 = smul.addr %s298, 8
        %s300 = scalar_lea.vmem %s0, %s299
        %p301 = pneg %p44
        %p302 = pneg %p41
        %p303 = pneg %p65
        %p304 = pneg %p62
        %p305 = pneg %p86
        %p306 = pneg %p83
        %p307 = pneg %p107
        %p308 = pneg %p104
        %p309 = pneg %p128
        %p310 = pneg %p125
        %p311 = pneg %p149
        %p312 = pneg %p146
        %p313 = pneg %p170
        %p314 = pneg %p167
        %p315 = pneg %p191
        %p316 = pneg %p188
        %p317 = pneg %p212
        %p318 = pneg %p209
        %p319 = pneg %p238
        %p320 = pneg %p235
        %s321 = sand.u32 %s225, 1
        %s322 = scalar_lea.sflag [#allocation11], %s321
        %s323 = sand.u32 %s225, 1
        %s324 = smul.addr %s323, 4
        %s325 = scalar_lea.vmem [#allocation10], %s324
        %p326 = scmp.lt.s32.totalorder %s23, 1
        %s327 = scalar_select %p326, %s23, 1
        %s328 = smul.addr %s327, 32
        %s329 = smul.addr %s328, 8
        %s330 = scalar_lea.vmem %s0, %s329
        %v331 = vld [vmem:[%s330] sm:$0xff]
        %v332 = vld [vmem:[%s330 + $0x8] sm:$0xff]
        %v333 = vld [vmem:[%s330 + $0x10] sm:$0xff]
        %v334 = vld [vmem:[%s330 + $0x18] sm:$0xff]
        %v335 = vld [vmem:[%s330 + $0x20] sm:$0xff]
        %v336 = vld [vmem:[%s330 + $0x28] sm:$0xff]
        %v337 = vld [vmem:[%s330 + $0x30] sm:$0xff]
        %v338 = vld [vmem:[%s330 + $0x38] sm:$0xff]
        %v339 = vld [vmem:[%s330 + $0x40] sm:$0xff]
        %v340 = vld [vmem:[%s330 + $0x48] sm:$0xff]
        %v341 = vld [vmem:[%s330 + $0x50] sm:$0xff]
        %v342 = vld [vmem:[%s330 + $0x58] sm:$0xff]
        %v343 = vld [vmem:[%s330 + $0x60] sm:$0xff]
        %v344 = vld [vmem:[%s330 + $0x68] sm:$0xff]
        %v345 = vld [vmem:[%s330 + $0x70] sm:$0xff]
        %v346 = vld [vmem:[%s330 + $0x78] sm:$0xff]
        %v347 = vld [vmem:[%s330 + $0x80] sm:$0xff]
        %v348 = vld [vmem:[%s330 + $0x88] sm:$0xff]
        %v349 = vld [vmem:[%s330 + $0x90] sm:$0xff]
        %v350 = vld [vmem:[%s330 + $0x98] sm:$0xff]
        %v351 = vld [vmem:[%s330 + $0xa0] sm:$0xff]
        %v352 = vld [vmem:[%s330 + $0xa8] sm:$0xff]
        %v353 = vld [vmem:[%s330 + $0xb0] sm:$0xff]
        %v354 = vld [vmem:[%s330 + $0xb8] sm:$0xff]
        %v355 = vld [vmem:[%s330 + $0xc0] sm:$0xff]
        %v356 = vld [vmem:[%s330 + $0xc8] sm:$0xff]
        %v357 = vld [vmem:[%s330 + $0xd0] sm:$0xff]
        %v358 = vld [vmem:[%s330 + $0xd8] sm:$0xff]
        %v359 = vld [vmem:[%s330 + $0xe0] sm:$0xff]
        %v360 = vld [vmem:[%s330 + $0xe8] sm:$0xff]
        %v361 = vld [vmem:[%s330 + $0xf0] sm:$0xff]
        %v362 = vld [vmem:[%s330 + $0xf8] sm:$0xff]
        %vm363 = vcmask 7168
        %364 = vst.msk [vmem:[#allocation2] sm:$0xff] %vm363, 0.0
        %365 = vst.msk [vmem:[#allocation2 + $0x8] sm:$0xff] %vm363, 0.0
        %vm366 = vcmask 1024
        %367 = vst.msk [vmem:[#allocation2 + $0x10] sm:$0x3] %vm366, 0.0
        %368 = vst.msk [vmem:[#allocation2 + $0x18] sm:$0xff] %vm363, 0.0
        %369 = vst.msk [vmem:[#allocation2 + $0x20] sm:$0xff] %vm363, 0.0
        %370 = vst.msk [vmem:[#allocation2 + $0x28] sm:$0x3] %vm366, 0.0
        %371 = vst.msk [vmem:[#allocation2 + $0x30] sm:$0xff] %vm363, 0.0
        %372 = vst.msk [vmem:[#allocation2 + $0x38] sm:$0xff] %vm363, 0.0
        %373 = vst.msk [vmem:[#allocation2 + $0x40] sm:$0x3] %vm366, 0.0
        %374 = vst.msk [vmem:[#allocation2 + $0x48] sm:$0xff] %vm363, 0.0
        %375 = vst.msk [vmem:[#allocation2 + $0x50] sm:$0xff] %vm363, 0.0
        %376 = vst.msk [vmem:[#allocation2 + $0x58] sm:$0x3] %vm366, 0.0
        %377 = vst.msk [vmem:[#allocation2 + $0x60] sm:$0xff] %vm363, 0.0
        %378 = vst.msk [vmem:[#allocation2 + $0x68] sm:$0xff] %vm363, 0.0
        %379 = vst.msk [vmem:[#allocation2 + $0x70] sm:$0x3] %vm366, 0.0
        %380 = vst.msk [vmem:[#allocation2 + $0x78] sm:$0xff] %vm363, 0.0
        %381 = vst.msk [vmem:[#allocation2 + $0x80] sm:$0xff] %vm363, 0.0
        %382 = vst.msk [vmem:[#allocation2 + $0x88] sm:$0x3] %vm366, 0.0
        %383 = vst.msk [vmem:[#allocation2 + $0x90] sm:$0xff] %vm363, 0.0
        %384 = vst.msk [vmem:[#allocation2 + $0x98] sm:$0xff] %vm363, 0.0
        %385 = vst.msk [vmem:[#allocation2 + $0xa0] sm:$0x3] %vm366, 0.0
        %386 = vst.msk [vmem:[#allocation2 + $0xa8] sm:$0xff] %vm363, 0.0
        %387 = vst.msk [vmem:[#allocation2 + $0xb0] sm:$0xff] %vm363, 0.0
        %388 = vst.msk [vmem:[#allocation2 + $0xb8] sm:$0x3] %vm366, 0.0
        %389 = vst.msk [vmem:[#allocation2 + $0xc0] sm:$0xff] %vm363, 0.0
        %390 = vst.msk [vmem:[#allocation2 + $0xc8] sm:$0xff] %vm363, 0.0
        %391 = vst.msk [vmem:[#allocation2 + $0xd0] sm:$0x3] %vm366, 0.0
        %392 = vst.msk [vmem:[#allocation2 + $0xd8] sm:$0xff] %vm363, 0.0
        %393 = vst.msk [vmem:[#allocation2 + $0xe0] sm:$0xff] %vm363, 0.0
        %394 = vst.msk [vmem:[#allocation2 + $0xe8] sm:$0x3] %vm366, 0.0
        %395 = vst.msk [vmem:[#allocation2 + $0xf0] sm:$0xff] %vm363, 0.0
        %396 = vst.msk [vmem:[#allocation2 + $0xf8] sm:$0xff] %vm363, 0.0
        %397 = vst.msk [vmem:[#allocation2 + $0x100] sm:$0x3] %vm366, 0.0
        %398 = vst.msk [vmem:[#allocation2 + $0x108] sm:$0xff] %vm363, 0.0
        %399 = vst.msk [vmem:[#allocation2 + $0x110] sm:$0xff] %vm363, 0.0
        %400 = vst.msk [vmem:[#allocation2 + $0x118] sm:$0x3] %vm366, 0.0
        %401 = vst.msk [vmem:[#allocation2 + $0x120] sm:$0xff] %vm363, 0.0
        %402 = vst.msk [vmem:[#allocation2 + $0x128] sm:$0xff] %vm363, 0.0
        %403 = vst.msk [vmem:[#allocation2 + $0x130] sm:$0x3] %vm366, 0.0
        %404 = vst.msk [vmem:[#allocation2 + $0x138] sm:$0xff] %vm363, 0.0
        %405 = vst.msk [vmem:[#allocation2 + $0x140] sm:$0xff] %vm363, 0.0
        %406 = vst.msk [vmem:[#allocation2 + $0x148] sm:$0x3] %vm366, 0.0
        %407 = vst.msk [vmem:[#allocation2 + $0x150] sm:$0xff] %vm363, 0.0
        %408 = vst.msk [vmem:[#allocation2 + $0x158] sm:$0xff] %vm363, 0.0
        %409 = vst.msk [vmem:[#allocation2 + $0x160] sm:$0x3] %vm366, 0.0
        %410 = vst.msk [vmem:[#allocation2 + $0x168] sm:$0xff] %vm363, 0.0
        %411 = vst.msk [vmem:[#allocation2 + $0x170] sm:$0xff] %vm363, 0.0
        %412 = vst.msk [vmem:[#allocation2 + $0x178] sm:$0x3] %vm366, 0.0
        %413 = vst.msk [vmem:[#allocation2 + $0x180] sm:$0xff] %vm363, 0.0
        %414 = vst.msk [vmem:[#allocation2 + $0x188] sm:$0xff] %vm363, 0.0
        %415 = vst.msk [vmem:[#allocation2 + $0x190] sm:$0x3] %vm366, 0.0
        %416 = vst.msk [vmem:[#allocation2 + $0x198] sm:$0xff] %vm363, 0.0
        %417 = vst.msk [vmem:[#allocation2 + $0x1a0] sm:$0xff] %vm363, 0.0
        %418 = vst.msk [vmem:[#allocation2 + $0x1a8] sm:$0x3] %vm366, 0.0
        %s419 = scalar_lea.vmem [#allocation2], 24
        %420 = vst.msk [vmem:[%s419 + $0x1] sm:$0xff] %vm363, %v331
        %421 = vst.msk [vmem:[%s419 + $0x9] sm:$0xff] %vm363, %v332
        %422 = vst.msk [vmem:[%s419 + $0x19] sm:$0xff] %vm363, %v333
        %423 = vst.msk [vmem:[%s419 + $0x21] sm:$0xff] %vm363, %v334
        %424 = vst.msk [vmem:[%s419 + $0x31] sm:$0xff] %vm363, %v335
        %425 = vst.msk [vmem:[%s419 + $0x39] sm:$0xff] %vm363, %v336
        %426 = vst.msk [vmem:[%s419 + $0x49] sm:$0xff] %vm363, %v337
        %427 = vst.msk [vmem:[%s419 + $0x51] sm:$0xff] %vm363, %v338
        %428 = vst.msk [vmem:[%s419 + $0x61] sm:$0xff] %vm363, %v339
        %429 = vst.msk [vmem:[%s419 + $0x69] sm:$0xff] %vm363, %v340
        %430 = vst.msk [vmem:[%s419 + $0x79] sm:$0xff] %vm363, %v341
        %431 = vst.msk [vmem:[%s419 + $0x81] sm:$0xff] %vm363, %v342
        %432 = vst.msk [vmem:[%s419 + $0x91] sm:$0xff] %vm363, %v343
        %433 = vst.msk [vmem:[%s419 + $0x99] sm:$0xff] %vm363, %v344
        %434 = vst.msk [vmem:[%s419 + $0xa9] sm:$0xff] %vm363, %v345
        %435 = vst.msk [vmem:[%s419 + $0xb1] sm:$0xff] %vm363, %v346
        %436 = vst.msk [vmem:[%s419 + $0xc1] sm:$0xff] %vm363, %v347
        %437 = vst.msk [vmem:[%s419 + $0xc9] sm:$0xff] %vm363, %v348
        %438 = vst.msk [vmem:[%s419 + $0xd9] sm:$0xff] %vm363, %v349
        %439 = vst.msk [vmem:[%s419 + $0xe1] sm:$0xff] %vm363, %v350
        %440 = vst.msk [vmem:[%s419 + $0xf1] sm:$0xff] %vm363, %v351
        %441 = vst.msk [vmem:[%s419 + $0xf9] sm:$0xff] %vm363, %v352
        %442 = vst.msk [vmem:[%s419 + $0x109] sm:$0xff] %vm363, %v353
        %443 = vst.msk [vmem:[%s419 + $0x111] sm:$0xff] %vm363, %v354
        %444 = vst.msk [vmem:[%s419 + $0x121] sm:$0xff] %vm363, %v355
        %445 = vst.msk [vmem:[%s419 + $0x129] sm:$0xff] %vm363, %v356
        %446 = vst.msk [vmem:[%s419 + $0x139] sm:$0xff] %vm363, %v357
        %447 = vst.msk [vmem:[%s419 + $0x141] sm:$0xff] %vm363, %v358
        %448 = vst.msk [vmem:[%s419 + $0x151] sm:$0xff] %vm363, %v359
        %449 = vst.msk [vmem:[%s419 + $0x159] sm:$0xff] %vm363, %v360
        %450 = vst.msk [vmem:[%s419 + $0x169] sm:$0xff] %vm363, %v361
        %451 = vst.msk [vmem:[%s419 + $0x171] sm:$0xff] %vm363, %v362
        %v452 = vld [vmem:[#allocation2] sm:$0xff]
        %v453 = vld [vmem:[#allocation2 + $0x8] sm:$0xff]
        %v454 = vld [vmem:[#allocation2 + $0x10] sm:$0x3]
        %v455 = vld [vmem:[#allocation2 + $0x18] sm:$0xff]
        %v456 = vld [vmem:[#allocation2 + $0x20] sm:$0xff]
        %v457 = vld [vmem:[#allocation2 + $0x28] sm:$0x3]
        %v458 = vld [vmem:[#allocation2 + $0x30] sm:$0xff]
        %v459 = vld [vmem:[#allocation2 + $0x38] sm:$0xff]
        %v460 = vld [vmem:[#allocation2 + $0x40] sm:$0x3]
        %v461 = vld [vmem:[#allocation2 + $0x48] sm:$0xff]
        %v462 = vld [vmem:[#allocation2 + $0x50] sm:$0xff]
        %v463 = vld [vmem:[#allocation2 + $0x58] sm:$0x3]
        %v464 = vld [vmem:[#allocation2 + $0x60] sm:$0xff]
        %v465 = vld [vmem:[#allocation2 + $0x68] sm:$0xff]
        %v466 = vld [vmem:[#allocation2 + $0x70] sm:$0x3]
        %v467 = vld [vmem:[#allocation2 + $0x78] sm:$0xff]
        %v468 = vld [vmem:[#allocation2 + $0x80] sm:$0xff]
        %v469 = vld [vmem:[#allocation2 + $0x88] sm:$0x3]
        %v470 = vld [vmem:[#allocation2 + $0x90] sm:$0xff]
        %v471 = vld [vmem:[#allocation2 + $0x98] sm:$0xff]
        %v472 = vld [vmem:[#allocation2 + $0xa0] sm:$0x3]
        %v473 = vld [vmem:[#allocation2 + $0xa8] sm:$0xff]
        %v474 = vld [vmem:[#allocation2 + $0xb0] sm:$0xff]
        %v475 = vld [vmem:[#allocation2 + $0xb8] sm:$0x3]
        %v476 = vld [vmem:[#allocation2 + $0xc0] sm:$0xff]
        %v477 = vld [vmem:[#allocation2 + $0xc8] sm:$0xff]
        %v478 = vld [vmem:[#allocation2 + $0xd0] sm:$0x3]
        %v479 = vld [vmem:[#allocation2 + $0xd8] sm:$0xff]
        %v480 = vld [vmem:[#allocation2 + $0xe0] sm:$0xff]
        %v481 = vld [vmem:[#allocation2 + $0xe8] sm:$0x3]
        %v482 = vld [vmem:[#allocation2 + $0xf0] sm:$0xff]
        %v483 = vld [vmem:[#allocation2 + $0xf8] sm:$0xff]
        %v484 = vld [vmem:[#allocation2 + $0x100] sm:$0x3]
        %v485 = vld [vmem:[#allocation2 + $0x108] sm:$0xff]
        %v486 = vld [vmem:[#allocation2 + $0x110] sm:$0xff]
        %v487 = vld [vmem:[#allocation2 + $0x118] sm:$0x3]
        %v488 = vld [vmem:[#allocation2 + $0x120] sm:$0xff]
        %v489 = vld [vmem:[#allocation2 + $0x128] sm:$0xff]
        %v490 = vld [vmem:[#allocation2 + $0x130] sm:$0x3]
        %v491 = vld [vmem:[#allocation2 + $0x138] sm:$0xff]
        %v492 = vld [vmem:[#allocation2 + $0x140] sm:$0xff]
        %v493 = vld [vmem:[#allocation2 + $0x148] sm:$0x3]
        %v494 = vld [vmem:[#allocation2 + $0x150] sm:$0xff]
        %v495 = vld [vmem:[#allocation2 + $0x158] sm:$0xff]
        %v496 = vld [vmem:[#allocation2 + $0x160] sm:$0x3]
        %v497 = vld [vmem:[#allocation2 + $0x168] sm:$0xff]
        %v498 = vld [vmem:[#allocation2 + $0x170] sm:$0xff]
        %v499 = vld [vmem:[#allocation2 + $0x178] sm:$0x3]
        %v500 = vld [vmem:[#allocation2 + $0x180] sm:$0xff]
        %v501 = vld [vmem:[#allocation2 + $0x188] sm:$0xff]
        %v502 = vld [vmem:[#allocation2 + $0x190] sm:$0x3]
        %v503 = vld [vmem:[#allocation2 + $0x198] sm:$0xff]
        %v504 = vld [vmem:[#allocation2 + $0x1a0] sm:$0xff]
        %v505 = vld [vmem:[#allocation2 + $0x1a8] sm:$0x3]
        %vm554 = vcmask 1046528
        %v555 = vrot.slane %v452, 1
        %v556 = vrot.slane %v453, 1
        %v557 = vsel %vm554, %v555, %v556
        %v558 = vrot.slane %v454, 1
        %v559 = vsel %vm554, %v556, %v558
        %v560 = vrot.slane %v455, 1
        %v561 = vrot.slane %v456, 1
        %v562 = vsel %vm554, %v560, %v561
        %v563 = vrot.slane %v457, 1
        %v564 = vsel %vm554, %v561, %v563
        %v565 = vrot.slane %v458, 1
        %v566 = vrot.slane %v459, 1
        %v567 = vsel %vm554, %v565, %v566
        %v568 = vrot.slane %v460, 1
        %v569 = vsel %vm554, %v566, %v568
        %v570 = vrot.slane %v461, 1
        %v571 = vrot.slane %v462, 1
        %v572 = vsel %vm554, %v570, %v571
        %v573 = vrot.slane %v463, 1
        %v574 = vsel %vm554, %v571, %v573
        %v575 = vrot.slane %v464, 1
        %v576 = vrot.slane %v465, 1
        %v577 = vsel %vm554, %v575, %v576
        %v578 = vrot.slane %v466, 1
        %v579 = vsel %vm554, %v576, %v578
        %v580 = vrot.slane %v467, 1
        %v581 = vrot.slane %v468, 1
        %v582 = vsel %vm554, %v580, %v581
        %v583 = vrot.slane %v469, 1
        %v584 = vsel %vm554, %v581, %v583
        %v585 = vrot.slane %v470, 1
        %v586 = vrot.slane %v471, 1
        %v587 = vsel %vm554, %v585, %v586
        %v588 = vrot.slane %v472, 1
        %v589 = vsel %vm554, %v586, %v588
        %v590 = vrot.slane %v473, 1
        %v591 = vrot.slane %v474, 1
        %v592 = vsel %vm554, %v590, %v591
        %v593 = vrot.slane %v475, 1
        %v594 = vsel %vm554, %v591, %v593
        %v595 = vrot.slane %v476, 1
        %v596 = vrot.slane %v477, 1
        %v597 = vsel %vm554, %v595, %v596
        %v598 = vrot.slane %v478, 1
        %v599 = vsel %vm554, %v596, %v598
        %v600 = vrot.slane %v479, 1
        %v601 = vrot.slane %v480, 1
        %v602 = vsel %vm554, %v600, %v601
        %v603 = vrot.slane %v481, 1
        %v604 = vsel %vm554, %v601, %v603
        %v605 = vrot.slane %v482, 1
        %v606 = vrot.slane %v483, 1
        %v607 = vsel %vm554, %v605, %v606
        %v608 = vrot.slane %v484, 1
        %v609 = vsel %vm554, %v606, %v608
        %v610 = vrot.slane %v485, 1
        %v611 = vrot.slane %v486, 1
        %v612 = vsel %vm554, %v610, %v611
        %v613 = vrot.slane %v487, 1
        %v614 = vsel %vm554, %v611, %v613
        %v615 = vrot.slane %v488, 1
        %v616 = vrot.slane %v489, 1
        %v617 = vsel %vm554, %v615, %v616
        %v618 = vrot.slane %v490, 1
        %v619 = vsel %vm554, %v616, %v618
        %v620 = vrot.slane %v491, 1
        %v621 = vrot.slane %v492, 1
        %v622 = vsel %vm554, %v620, %v621
        %v623 = vrot.slane %v493, 1
        %v624 = vsel %vm554, %v621, %v623
        %v625 = vrot.slane %v494, 1
        %v626 = vrot.slane %v495, 1
        %v627 = vsel %vm554, %v625, %v626
        %v628 = vrot.slane %v496, 1
        %v629 = vsel %vm554, %v626, %v628
        %v630 = vrot.slane %v497, 1
        %v631 = vrot.slane %v498, 1
        %v632 = vsel %vm554, %v630, %v631
        %v633 = vrot.slane %v499, 1
        %v634 = vsel %vm554, %v631, %v633
        %635 = vrot.lane.b32.xlu0 %v557, 1
        %v636 = vpop.permute.xlu0 %635
        %637 = vrot.lane.b32.xlu0 %v559, 1
        %v638 = vpop.permute.xlu0 %637
        %639 = vrot.lane.b32.xlu0 %v562, 1
        %v640 = vpop.permute.xlu0 %639
        %641 = vrot.lane.b32.xlu0 %v564, 1
        %v642 = vpop.permute.xlu0 %641
        %643 = vrot.lane.b32.xlu0 %v567, 1
        %v644 = vpop.permute.xlu0 %643
        %645 = vrot.lane.b32.xlu0 %v569, 1
        %v646 = vpop.permute.xlu0 %645
        %647 = vrot.lane.b32.xlu0 %v572, 1
        %v648 = vpop.permute.xlu0 %647
        %649 = vrot.lane.b32.xlu0 %v574, 1
        %v650 = vpop.permute.xlu0 %649
        %651 = vrot.lane.b32.xlu0 %v577, 1
        %v652 = vpop.permute.xlu0 %651
        %653 = vrot.lane.b32.xlu0 %v579, 1
        %v654 = vpop.permute.xlu0 %653
        %655 = vrot.lane.b32.xlu0 %v582, 1
        %v656 = vpop.permute.xlu0 %655
        %657 = vrot.lane.b32.xlu0 %v584, 1
        %v658 = vpop.permute.xlu0 %657
        %659 = vrot.lane.b32.xlu0 %v587, 1
        %v660 = vpop.permute.xlu0 %659
        %661 = vrot.lane.b32.xlu0 %v589, 1
        %v662 = vpop.permute.xlu0 %661
        %663 = vrot.lane.b32.xlu0 %v592, 1
        %v664 = vpop.permute.xlu0 %663
        %665 = vrot.lane.b32.xlu0 %v594, 1
        %v666 = vpop.permute.xlu0 %665
        %667 = vrot.lane.b32.xlu0 %v597, 1
        %v668 = vpop.permute.xlu0 %667
        %669 = vrot.lane.b32.xlu0 %v599, 1
        %v670 = vpop.permute.xlu0 %669
        %671 = vrot.lane.b32.xlu0 %v602, 1
        %v672 = vpop.permute.xlu0 %671
        %673 = vrot.lane.b32.xlu0 %v604, 1
        %v674 = vpop.permute.xlu0 %673
        %675 = vrot.lane.b32.xlu0 %v607, 1
        %v676 = vpop.permute.xlu0 %675
        %677 = vrot.lane.b32.xlu0 %v609, 1
        %v678 = vpop.permute.xlu0 %677
        %679 = vrot.lane.b32.xlu0 %v612, 1
        %v680 = vpop.permute.xlu0 %679
        %681 = vrot.lane.b32.xlu0 %v614, 1
        %v682 = vpop.permute.xlu0 %681
        %683 = vrot.lane.b32.xlu0 %v617, 1
        %v684 = vpop.permute.xlu0 %683
        %685 = vrot.lane.b32.xlu0 %v619, 1
        %v686 = vpop.permute.xlu0 %685
        %687 = vrot.lane.b32.xlu0 %v622, 1
        %v688 = vpop.permute.xlu0 %687
        %689 = vrot.lane.b32.xlu0 %v624, 1
        %v690 = vpop.permute.xlu0 %689
        %691 = vrot.lane.b32.xlu0 %v627, 1
        %v692 = vpop.permute.xlu0 %691
        %693 = vrot.lane.b32.xlu0 %v629, 1
        %v694 = vpop.permute.xlu0 %693
        %695 = vrot.lane.b32.xlu0 %v632, 1
        %v696 = vpop.permute.xlu0 %695
        %697 = vrot.lane.b32.xlu0 %v634, 1
        %v698 = vpop.permute.xlu0 %697
        %vm731 = vcmask 1045504
        %v732 = vrot.slane %v452, 2
        %v733 = vrot.slane %v453, 2
        %v734 = vsel %vm731, %v732, %v733
        %v735 = vrot.slane %v454, 2
        %v736 = vsel %vm731, %v733, %v735
        %v737 = vrot.slane %v455, 2
        %v738 = vrot.slane %v456, 2
        %v739 = vsel %vm731, %v737, %v738
        %v740 = vrot.slane %v457, 2
        %v741 = vsel %vm731, %v738, %v740
        %v742 = vrot.slane %v458, 2
        %v743 = vrot.slane %v459, 2
        %v744 = vsel %vm731, %v742, %v743
        %v745 = vrot.slane %v460, 2
        %v746 = vsel %vm731, %v743, %v745
        %v747 = vrot.slane %v461, 2
        %v748 = vrot.slane %v462, 2
        %v749 = vsel %vm731, %v747, %v748
        %v750 = vrot.slane %v463, 2
        %v751 = vsel %vm731, %v748, %v750
        %v752 = vrot.slane %v464, 2
        %v753 = vrot.slane %v465, 2
        %v754 = vsel %vm731, %v752, %v753
        %v755 = vrot.slane %v466, 2
        %v756 = vsel %vm731, %v753, %v755
        %v757 = vrot.slane %v467, 2
        %v758 = vrot.slane %v468, 2
        %v759 = vsel %vm731, %v757, %v758
        %v760 = vrot.slane %v469, 2
        %v761 = vsel %vm731, %v758, %v760
        %v762 = vrot.slane %v470, 2
        %v763 = vrot.slane %v471, 2
        %v764 = vsel %vm731, %v762, %v763
        %v765 = vrot.slane %v472, 2
        %v766 = vsel %vm731, %v763, %v765
        %v767 = vrot.slane %v473, 2
        %v768 = vrot.slane %v474, 2
        %v769 = vsel %vm731, %v767, %v768
        %v770 = vrot.slane %v475, 2
        %v771 = vsel %vm731, %v768, %v770
        %v772 = vrot.slane %v476, 2
        %v773 = vrot.slane %v477, 2
        %v774 = vsel %vm731, %v772, %v773
        %v775 = vrot.slane %v478, 2
        %v776 = vsel %vm731, %v773, %v775
        %v777 = vrot.slane %v479, 2
        %v778 = vrot.slane %v480, 2
        %v779 = vsel %vm731, %v777, %v778
        %v780 = vrot.slane %v481, 2
        %v781 = vsel %vm731, %v778, %v780
        %v782 = vrot.slane %v482, 2
        %v783 = vrot.slane %v483, 2
        %v784 = vsel %vm731, %v782, %v783
        %v785 = vrot.slane %v484, 2
        %v786 = vsel %vm731, %v783, %v785
        %v787 = vrot.slane %v485, 2
        %v788 = vrot.slane %v486, 2
        %v789 = vsel %vm731, %v787, %v788
        %v790 = vrot.slane %v487, 2
        %v791 = vsel %vm731, %v788, %v790
        %v792 = vrot.slane %v488, 2
        %v793 = vrot.slane %v489, 2
        %v794 = vsel %vm731, %v792, %v793
        %v795 = vrot.slane %v490, 2
        %v796 = vsel %vm731, %v793, %v795
        %v797 = vrot.slane %v491, 2
        %v798 = vrot.slane %v492, 2
        %v799 = vsel %vm731, %v797, %v798
        %v800 = vrot.slane %v493, 2
        %v801 = vsel %vm731, %v798, %v800
        %v802 = vrot.slane %v494, 2
        %v803 = vrot.slane %v495, 2
        %v804 = vsel %vm731, %v802, %v803
        %v805 = vrot.slane %v496, 2
        %v806 = vsel %vm731, %v803, %v805
        %v807 = vrot.slane %v497, 2
        %v808 = vrot.slane %v498, 2
        %v809 = vsel %vm731, %v807, %v808
        %v810 = vrot.slane %v499, 2
        %v811 = vsel %vm731, %v808, %v810
        %812 = vrot.lane.b32.xlu0 %v734, 2
        %v813 = vpop.permute.xlu0 %812
        %814 = vrot.lane.b32.xlu0 %v736, 2
        %v815 = vpop.permute.xlu0 %814
        %816 = vrot.lane.b32.xlu0 %v739, 2
        %v817 = vpop.permute.xlu0 %816
        %818 = vrot.lane.b32.xlu0 %v741, 2
        %v819 = vpop.permute.xlu0 %818
        %820 = vrot.lane.b32.xlu0 %v744, 2
        %v821 = vpop.permute.xlu0 %820
        %822 = vrot.lane.b32.xlu0 %v746, 2
        %v823 = vpop.permute.xlu0 %822
        %824 = vrot.lane.b32.xlu0 %v749, 2
        %v825 = vpop.permute.xlu0 %824
        %826 = vrot.lane.b32.xlu0 %v751, 2
        %v827 = vpop.permute.xlu0 %826
        %828 = vrot.lane.b32.xlu0 %v754, 2
        %v829 = vpop.permute.xlu0 %828
        %830 = vrot.lane.b32.xlu0 %v756, 2
        %v831 = vpop.permute.xlu0 %830
        %832 = vrot.lane.b32.xlu0 %v759, 2
        %v833 = vpop.permute.xlu0 %832
        %834 = vrot.lane.b32.xlu0 %v761, 2
        %v835 = vpop.permute.xlu0 %834
        %836 = vrot.lane.b32.xlu0 %v764, 2
        %v837 = vpop.permute.xlu0 %836
        %838 = vrot.lane.b32.xlu0 %v766, 2
        %v839 = vpop.permute.xlu0 %838
        %840 = vrot.lane.b32.xlu0 %v769, 2
        %v841 = vpop.permute.xlu0 %840
        %842 = vrot.lane.b32.xlu0 %v771, 2
        %v843 = vpop.permute.xlu0 %842
        %844 = vrot.lane.b32.xlu0 %v774, 2
        %v845 = vpop.permute.xlu0 %844
        %846 = vrot.lane.b32.xlu0 %v776, 2
        %v847 = vpop.permute.xlu0 %846
        %848 = vrot.lane.b32.xlu0 %v779, 2
        %v849 = vpop.permute.xlu0 %848
        %850 = vrot.lane.b32.xlu0 %v781, 2
        %v851 = vpop.permute.xlu0 %850
        %852 = vrot.lane.b32.xlu0 %v784, 2
        %v853 = vpop.permute.xlu0 %852
        %854 = vrot.lane.b32.xlu0 %v786, 2
        %v855 = vpop.permute.xlu0 %854
        %856 = vrot.lane.b32.xlu0 %v789, 2
        %v857 = vpop.permute.xlu0 %856
        %858 = vrot.lane.b32.xlu0 %v791, 2
        %v859 = vpop.permute.xlu0 %858
        %860 = vrot.lane.b32.xlu0 %v794, 2
        %v861 = vpop.permute.xlu0 %860
        %862 = vrot.lane.b32.xlu0 %v796, 2
        %v863 = vpop.permute.xlu0 %862
        %864 = vrot.lane.b32.xlu0 %v799, 2
        %v865 = vpop.permute.xlu0 %864
        %866 = vrot.lane.b32.xlu0 %v801, 2
        %v867 = vpop.permute.xlu0 %866
        %868 = vrot.lane.b32.xlu0 %v804, 2
        %v869 = vpop.permute.xlu0 %868
        %870 = vrot.lane.b32.xlu0 %v806, 2
        %v871 = vpop.permute.xlu0 %870
        %872 = vrot.lane.b32.xlu0 %v809, 2
        %v873 = vpop.permute.xlu0 %872
        %874 = vrot.lane.b32.xlu0 %v811, 2
        %v875 = vpop.permute.xlu0 %874
        %910 = vrot.lane.b32.xlu0 %v455, 3
        %v911 = vpop.permute.xlu0 %910
        %912 = vrot.lane.b32.xlu0 %v456, 3
        %v913 = vpop.permute.xlu0 %912
        %914 = vrot.lane.b32.xlu0 %v458, 3
        %v915 = vpop.permute.xlu0 %914
        %916 = vrot.lane.b32.xlu0 %v459, 3
        %v917 = vpop.permute.xlu0 %916
        %918 = vrot.lane.b32.xlu0 %v461, 3
        %v919 = vpop.permute.xlu0 %918
        %920 = vrot.lane.b32.xlu0 %v462, 3
        %v921 = vpop.permute.xlu0 %920
        %922 = vrot.lane.b32.xlu0 %v464, 3
        %v923 = vpop.permute.xlu0 %922
        %924 = vrot.lane.b32.xlu0 %v465, 3
        %v925 = vpop.permute.xlu0 %924
        %926 = vrot.lane.b32.xlu0 %v467, 3
        %v927 = vpop.permute.xlu0 %926
        %928 = vrot.lane.b32.xlu0 %v468, 3
        %v929 = vpop.permute.xlu0 %928
        %930 = vrot.lane.b32.xlu0 %v470, 3
        %v931 = vpop.permute.xlu0 %930
        %932 = vrot.lane.b32.xlu0 %v471, 3
        %v933 = vpop.permute.xlu0 %932
        %934 = vrot.lane.b32.xlu0 %v473, 3
        %v935 = vpop.permute.xlu0 %934
        %936 = vrot.lane.b32.xlu0 %v474, 3
        %v937 = vpop.permute.xlu0 %936
        %938 = vrot.lane.b32.xlu0 %v476, 3
        %v939 = vpop.permute.xlu0 %938
        %940 = vrot.lane.b32.xlu0 %v477, 3
        %v941 = vpop.permute.xlu0 %940
        %942 = vrot.lane.b32.xlu0 %v479, 3
        %v943 = vpop.permute.xlu0 %942
        %944 = vrot.lane.b32.xlu0 %v480, 3
        %v945 = vpop.permute.xlu0 %944
        %946 = vrot.lane.b32.xlu0 %v482, 3
        %v947 = vpop.permute.xlu0 %946
        %948 = vrot.lane.b32.xlu0 %v483, 3
        %v949 = vpop.permute.xlu0 %948
        %950 = vrot.lane.b32.xlu0 %v485, 3
        %v951 = vpop.permute.xlu0 %950
        %952 = vrot.lane.b32.xlu0 %v486, 3
        %v953 = vpop.permute.xlu0 %952
        %954 = vrot.lane.b32.xlu0 %v488, 3
        %v955 = vpop.permute.xlu0 %954
        %956 = vrot.lane.b32.xlu0 %v489, 3
        %v957 = vpop.permute.xlu0 %956
        %958 = vrot.lane.b32.xlu0 %v491, 3
        %v959 = vpop.permute.xlu0 %958
        %960 = vrot.lane.b32.xlu0 %v492, 3
        %v961 = vpop.permute.xlu0 %960
        %962 = vrot.lane.b32.xlu0 %v494, 3
        %v963 = vpop.permute.xlu0 %962
        %964 = vrot.lane.b32.xlu0 %v495, 3
        %v965 = vpop.permute.xlu0 %964
        %966 = vrot.lane.b32.xlu0 %v497, 3
        %v967 = vpop.permute.xlu0 %966
        %968 = vrot.lane.b32.xlu0 %v498, 3
        %v969 = vpop.permute.xlu0 %968
        %970 = vrot.lane.b32.xlu0 %v500, 3
        %v971 = vpop.permute.xlu0 %970
        %972 = vrot.lane.b32.xlu0 %v501, 3
        %v973 = vpop.permute.xlu0 %972
        %v1007 = vrot.slane %v500, 1
        %v1008 = vrot.slane %v501, 1
        %v1009 = vsel %vm554, %v1007, %v1008
        %v1010 = vrot.slane %v502, 1
        %v1011 = vsel %vm554, %v1008, %v1010
        %1012 = vrot.lane.b32.xlu0 %v562, 4
        %v1013 = vpop.permute.xlu0 %1012
        %1014 = vrot.lane.b32.xlu0 %v564, 4
        %v1015 = vpop.permute.xlu0 %1014
        %1016 = vrot.lane.b32.xlu0 %v567, 4
        %v1017 = vpop.permute.xlu0 %1016
        %1018 = vrot.lane.b32.xlu0 %v569, 4
        %v1019 = vpop.permute.xlu0 %1018
        %1020 = vrot.lane.b32.xlu0 %v572, 4
        %v1021 = vpop.permute.xlu0 %1020
        %1022 = vrot.lane.b32.xlu0 %v574, 4
        %v1023 = vpop.permute.xlu0 %1022
        %1024 = vrot.lane.b32.xlu0 %v577, 4
        %v1025 = vpop.permute.xlu0 %1024
        %1026 = vrot.lane.b32.xlu0 %v579, 4
        %v1027 = vpop.permute.xlu0 %1026
        %1028 = vrot.lane.b32.xlu0 %v582, 4
        %v1029 = vpop.permute.xlu0 %1028
        %1030 = vrot.lane.b32.xlu0 %v584, 4
        %v1031 = vpop.permute.xlu0 %1030
        %1032 = vrot.lane.b32.xlu0 %v587, 4
        %v1033 = vpop.permute.xlu0 %1032
        %1034 = vrot.lane.b32.xlu0 %v589, 4
        %v1035 = vpop.permute.xlu0 %1034
        %1036 = vrot.lane.b32.xlu0 %v592, 4
        %v1037 = vpop.permute.xlu0 %1036
        %1038 = vrot.lane.b32.xlu0 %v594, 4
        %v1039 = vpop.permute.xlu0 %1038
        %1040 = vrot.lane.b32.xlu0 %v597, 4
        %v1041 = vpop.permute.xlu0 %1040
        %1042 = vrot.lane.b32.xlu0 %v599, 4
        %v1043 = vpop.permute.xlu0 %1042
        %1044 = vrot.lane.b32.xlu0 %v602, 4
        %v1045 = vpop.permute.xlu0 %1044
        %1046 = vrot.lane.b32.xlu0 %v604, 4
        %v1047 = vpop.permute.xlu0 %1046
        %1048 = vrot.lane.b32.xlu0 %v607, 4
        %v1049 = vpop.permute.xlu0 %1048
        %1050 = vrot.lane.b32.xlu0 %v609, 4
        %v1051 = vpop.permute.xlu0 %1050
        %1052 = vrot.lane.b32.xlu0 %v612, 4
        %v1053 = vpop.permute.xlu0 %1052
        %1054 = vrot.lane.b32.xlu0 %v614, 4
        %v1055 = vpop.permute.xlu0 %1054
        %1056 = vrot.lane.b32.xlu0 %v617, 4
        %v1057 = vpop.permute.xlu0 %1056
        %1058 = vrot.lane.b32.xlu0 %v619, 4
        %v1059 = vpop.permute.xlu0 %1058
        %1060 = vrot.lane.b32.xlu0 %v622, 4
        %v1061 = vpop.permute.xlu0 %1060
        %1062 = vrot.lane.b32.xlu0 %v624, 4
        %v1063 = vpop.permute.xlu0 %1062
        %1064 = vrot.lane.b32.xlu0 %v627, 4
        %v1065 = vpop.permute.xlu0 %1064
        %1066 = vrot.lane.b32.xlu0 %v629, 4
        %v1067 = vpop.permute.xlu0 %1066
        %1068 = vrot.lane.b32.xlu0 %v632, 4
        %v1069 = vpop.permute.xlu0 %1068
        %1070 = vrot.lane.b32.xlu0 %v634, 4
        %v1071 = vpop.permute.xlu0 %1070
        %1072 = vrot.lane.b32.xlu0 %v1009, 4
        %v1073 = vpop.permute.xlu0 %1072
        %1074 = vrot.lane.b32.xlu0 %v1011, 4
        %v1075 = vpop.permute.xlu0 %1074
        %v1108 = vrot.slane %v500, 2
        %v1109 = vrot.slane %v501, 2
        %v1110 = vsel %vm731, %v1108, %v1109
        %v1111 = vrot.slane %v502, 2
        %v1112 = vsel %vm731, %v1109, %v1111
        %1113 = vrot.lane.b32.xlu0 %v739, 5
        %v1114 = vpop.permute.xlu0 %1113
        %1115 = vrot.lane.b32.xlu0 %v741, 5
        %v1116 = vpop.permute.xlu0 %1115
        %1117 = vrot.lane.b32.xlu0 %v744, 5
        %v1118 = vpop.permute.xlu0 %1117
        %1119 = vrot.lane.b32.xlu0 %v746, 5
        %v1120 = vpop.permute.xlu0 %1119
        %1121 = vrot.lane.b32.xlu0 %v749, 5
        %v1122 = vpop.permute.xlu0 %1121
        %1123 = vrot.lane.b32.xlu0 %v751, 5
        %v1124 = vpop.permute.xlu0 %1123
        %1125 = vrot.lane.b32.xlu0 %v754, 5
        %v1126 = vpop.permute.xlu0 %1125
        %1127 = vrot.lane.b32.xlu0 %v756, 5
        %v1128 = vpop.permute.xlu0 %1127
        %1129 = vrot.lane.b32.xlu0 %v759, 5
        %v1130 = vpop.permute.xlu0 %1129
        %1131 = vrot.lane.b32.xlu0 %v761, 5
        %v1132 = vpop.permute.xlu0 %1131
        %1133 = vrot.lane.b32.xlu0 %v764, 5
        %v1134 = vpop.permute.xlu0 %1133
        %1135 = vrot.lane.b32.xlu0 %v766, 5
        %v1136 = vpop.permute.xlu0 %1135
        %1137 = vrot.lane.b32.xlu0 %v769, 5
        %v1138 = vpop.permute.xlu0 %1137
        %1139 = vrot.lane.b32.xlu0 %v771, 5
        %v1140 = vpop.permute.xlu0 %1139
        %1141 = vrot.lane.b32.xlu0 %v774, 5
        %v1142 = vpop.permute.xlu0 %1141
        %1143 = vrot.lane.b32.xlu0 %v776, 5
        %v1144 = vpop.permute.xlu0 %1143
        %1145 = vrot.lane.b32.xlu0 %v779, 5
        %v1146 = vpop.permute.xlu0 %1145
        %1147 = vrot.lane.b32.xlu0 %v781, 5
        %v1148 = vpop.permute.xlu0 %1147
        %1149 = vrot.lane.b32.xlu0 %v784, 5
        %v1150 = vpop.permute.xlu0 %1149
        %1151 = vrot.lane.b32.xlu0 %v786, 5
        %v1152 = vpop.permute.xlu0 %1151
        %1153 = vrot.lane.b32.xlu0 %v789, 5
        %v1154 = vpop.permute.xlu0 %1153
        %1155 = vrot.lane.b32.xlu0 %v791, 5
        %v1156 = vpop.permute.xlu0 %1155
        %1157 = vrot.lane.b32.xlu0 %v794, 5
        %v1158 = vpop.permute.xlu0 %1157
        %1159 = vrot.lane.b32.xlu0 %v796, 5
        %v1160 = vpop.permute.xlu0 %1159
        %1161 = vrot.lane.b32.xlu0 %v799, 5
        %v1162 = vpop.permute.xlu0 %1161
        %1163 = vrot.lane.b32.xlu0 %v801, 5
        %v1164 = vpop.permute.xlu0 %1163
        %1165 = vrot.lane.b32.xlu0 %v804, 5
        %v1166 = vpop.permute.xlu0 %1165
        %1167 = vrot.lane.b32.xlu0 %v806, 5
        %v1168 = vpop.permute.xlu0 %1167
        %1169 = vrot.lane.b32.xlu0 %v809, 5
        %v1170 = vpop.permute.xlu0 %1169
        %1171 = vrot.lane.b32.xlu0 %v811, 5
        %v1172 = vpop.permute.xlu0 %1171
        %1173 = vrot.lane.b32.xlu0 %v1110, 5
        %v1174 = vpop.permute.xlu0 %1173
        %1175 = vrot.lane.b32.xlu0 %v1112, 5
        %v1176 = vpop.permute.xlu0 %1175
        %1211 = vrot.lane.b32.xlu0 %v458, 6
        %v1212 = vpop.permute.xlu0 %1211
        %1213 = vrot.lane.b32.xlu0 %v459, 6
        %v1214 = vpop.permute.xlu0 %1213
        %1215 = vrot.lane.b32.xlu0 %v461, 6
        %v1216 = vpop.permute.xlu0 %1215
        %1217 = vrot.lane.b32.xlu0 %v462, 6
        %v1218 = vpop.permute.xlu0 %1217
        %1219 = vrot.lane.b32.xlu0 %v464, 6
        %v1220 = vpop.permute.xlu0 %1219
        %1221 = vrot.lane.b32.xlu0 %v465, 6
        %v1222 = vpop.permute.xlu0 %1221
        %1223 = vrot.lane.b32.xlu0 %v467, 6
        %v1224 = vpop.permute.xlu0 %1223
        %1225 = vrot.lane.b32.xlu0 %v468, 6
        %v1226 = vpop.permute.xlu0 %1225
        %1227 = vrot.lane.b32.xlu0 %v470, 6
        %v1228 = vpop.permute.xlu0 %1227
        %1229 = vrot.lane.b32.xlu0 %v471, 6
        %v1230 = vpop.permute.xlu0 %1229
        %1231 = vrot.lane.b32.xlu0 %v473, 6
        %v1232 = vpop.permute.xlu0 %1231
        %1233 = vrot.lane.b32.xlu0 %v474, 6
        %v1234 = vpop.permute.xlu0 %1233
        %1235 = vrot.lane.b32.xlu0 %v476, 6
        %v1236 = vpop.permute.xlu0 %1235
        %1237 = vrot.lane.b32.xlu0 %v477, 6
        %v1238 = vpop.permute.xlu0 %1237
        %1239 = vrot.lane.b32.xlu0 %v479, 6
        %v1240 = vpop.permute.xlu0 %1239
        %1241 = vrot.lane.b32.xlu0 %v480, 6
        %v1242 = vpop.permute.xlu0 %1241
        %1243 = vrot.lane.b32.xlu0 %v482, 6
        %v1244 = vpop.permute.xlu0 %1243
        %1245 = vrot.lane.b32.xlu0 %v483, 6
        %v1246 = vpop.permute.xlu0 %1245
        %1247 = vrot.lane.b32.xlu0 %v485, 6
        %v1248 = vpop.permute.xlu0 %1247
        %1249 = vrot.lane.b32.xlu0 %v486, 6
        %v1250 = vpop.permute.xlu0 %1249
        %1251 = vrot.lane.b32.xlu0 %v488, 6
        %v1252 = vpop.permute.xlu0 %1251
        %1253 = vrot.lane.b32.xlu0 %v489, 6
        %v1254 = vpop.permute.xlu0 %1253
        %1255 = vrot.lane.b32.xlu0 %v491, 6
        %v1256 = vpop.permute.xlu0 %1255
        %1257 = vrot.lane.b32.xlu0 %v492, 6
        %v1258 = vpop.permute.xlu0 %1257
        %1259 = vrot.lane.b32.xlu0 %v494, 6
        %v1260 = vpop.permute.xlu0 %1259
        %1261 = vrot.lane.b32.xlu0 %v495, 6
        %v1262 = vpop.permute.xlu0 %1261
        %1263 = vrot.lane.b32.xlu0 %v497, 6
        %v1264 = vpop.permute.xlu0 %1263
        %1265 = vrot.lane.b32.xlu0 %v498, 6
        %v1266 = vpop.permute.xlu0 %1265
        %1267 = vrot.lane.b32.xlu0 %v500, 6
        %v1268 = vpop.permute.xlu0 %1267
        %1269 = vrot.lane.b32.xlu0 %v501, 6
        %v1270 = vpop.permute.xlu0 %1269
        %1271 = vrot.lane.b32.xlu0 %v503, 6
        %v1272 = vpop.permute.xlu0 %1271
        %1273 = vrot.lane.b32.xlu0 %v504, 6
        %v1274 = vpop.permute.xlu0 %1273
        %v1308 = vrot.slane %v503, 1
        %v1309 = vrot.slane %v504, 1
        %v1310 = vsel %vm554, %v1308, %v1309
        %v1311 = vrot.slane %v505, 1
        %v1312 = vsel %vm554, %v1309, %v1311
        %1313 = vrot.lane.b32.xlu0 %v567, 7
        %v1314 = vpop.permute.xlu0 %1313
        %1315 = vrot.lane.b32.xlu0 %v569, 7
        %v1316 = vpop.permute.xlu0 %1315
        %1317 = vrot.lane.b32.xlu0 %v572, 7
        %v1318 = vpop.permute.xlu0 %1317
        %1319 = vrot.lane.b32.xlu0 %v574, 7
        %v1320 = vpop.permute.xlu0 %1319
        %1321 = vrot.lane.b32.xlu0 %v577, 7
        %v1322 = vpop.permute.xlu0 %1321
        %1323 = vrot.lane.b32.xlu0 %v579, 7
        %v1324 = vpop.permute.xlu0 %1323
        %1325 = vrot.lane.b32.xlu0 %v582, 7
        %v1326 = vpop.permute.xlu0 %1325
        %1327 = vrot.lane.b32.xlu0 %v584, 7
        %v1328 = vpop.permute.xlu0 %1327
        %1329 = vrot.lane.b32.xlu0 %v587, 7
        %v1330 = vpop.permute.xlu0 %1329
        %1331 = vrot.lane.b32.xlu0 %v589, 7
        %v1332 = vpop.permute.xlu0 %1331
        %1333 = vrot.lane.b32.xlu0 %v592, 7
        %v1334 = vpop.permute.xlu0 %1333
        %1335 = vrot.lane.b32.xlu0 %v594, 7
        %v1336 = vpop.permute.xlu0 %1335
        %1337 = vrot.lane.b32.xlu0 %v597, 7
        %v1338 = vpop.permute.xlu0 %1337
        %1339 = vrot.lane.b32.xlu0 %v599, 7
        %v1340 = vpop.permute.xlu0 %1339
        %1341 = vrot.lane.b32.xlu0 %v602, 7
        %v1342 = vpop.permute.xlu0 %1341
        %1343 = vrot.lane.b32.xlu0 %v604, 7
        %v1344 = vpop.permute.xlu0 %1343
        %1345 = vrot.lane.b32.xlu0 %v607, 7
        %v1346 = vpop.permute.xlu0 %1345
        %1347 = vrot.lane.b32.xlu0 %v609, 7
        %v1348 = vpop.permute.xlu0 %1347
        %1349 = vrot.lane.b32.xlu0 %v612, 7
        %v1350 = vpop.permute.xlu0 %1349
        %1351 = vrot.lane.b32.xlu0 %v614, 7
        %v1352 = vpop.permute.xlu0 %1351
        %1353 = vrot.lane.b32.xlu0 %v617, 7
        %v1354 = vpop.permute.xlu0 %1353
        %1355 = vrot.lane.b32.xlu0 %v619, 7
        %v1356 = vpop.permute.xlu0 %1355
        %1357 = vrot.lane.b32.xlu0 %v622, 7
        %v1358 = vpop.permute.xlu0 %1357
        %1359 = vrot.lane.b32.xlu0 %v624, 7
        %v1360 = vpop.permute.xlu0 %1359
        %1361 = vrot.lane.b32.xlu0 %v627, 7
        %v1362 = vpop.permute.xlu0 %1361
        %1363 = vrot.lane.b32.xlu0 %v629, 7
        %v1364 = vpop.permute.xlu0 %1363
        %1365 = vrot.lane.b32.xlu0 %v632, 7
        %v1366 = vpop.permute.xlu0 %1365
        %1367 = vrot.lane.b32.xlu0 %v634, 7
        %v1368 = vpop.permute.xlu0 %1367
        %1369 = vrot.lane.b32.xlu0 %v1009, 7
        %v1370 = vpop.permute.xlu0 %1369
        %1371 = vrot.lane.b32.xlu0 %v1011, 7
        %v1372 = vpop.permute.xlu0 %1371
        %1373 = vrot.lane.b32.xlu0 %v1310, 7
        %v1374 = vpop.permute.xlu0 %1373
        %1375 = vrot.lane.b32.xlu0 %v1312, 7
        %v1376 = vpop.permute.xlu0 %1375
        %v1409 = vrot.slane %v503, 2
        %v1410 = vrot.slane %v504, 2
        %v1411 = vsel %vm731, %v1409, %v1410
        %v1412 = vrot.slane %v505, 2
        %v1413 = vsel %vm731, %v1410, %v1412
        %1414 = vrot.lane.b32.xlu0 %v744, 8
        %v1415 = vpop.permute.xlu0 %1414
        %1416 = vrot.lane.b32.xlu0 %v746, 8
        %v1417 = vpop.permute.xlu0 %1416
        %1418 = vrot.lane.b32.xlu0 %v749, 8
        %v1419 = vpop.permute.xlu0 %1418
        %1420 = vrot.lane.b32.xlu0 %v751, 8
        %v1421 = vpop.permute.xlu0 %1420
        %1422 = vrot.lane.b32.xlu0 %v754, 8
        %v1423 = vpop.permute.xlu0 %1422
        %1424 = vrot.lane.b32.xlu0 %v756, 8
        %v1425 = vpop.permute.xlu0 %1424
        %1426 = vrot.lane.b32.xlu0 %v759, 8
        %v1427 = vpop.permute.xlu0 %1426
        %1428 = vrot.lane.b32.xlu0 %v761, 8
        %v1429 = vpop.permute.xlu0 %1428
        %1430 = vrot.lane.b32.xlu0 %v764, 8
        %v1431 = vpop.permute.xlu0 %1430
        %1432 = vrot.lane.b32.xlu0 %v766, 8
        %v1433 = vpop.permute.xlu0 %1432
        %1434 = vrot.lane.b32.xlu0 %v769, 8
        %v1435 = vpop.permute.xlu0 %1434
        %1436 = vrot.lane.b32.xlu0 %v771, 8
        %v1437 = vpop.permute.xlu0 %1436
        %1438 = vrot.lane.b32.xlu0 %v774, 8
        %v1439 = vpop.permute.xlu0 %1438
        %1440 = vrot.lane.b32.xlu0 %v776, 8
        %v1441 = vpop.permute.xlu0 %1440
        %1442 = vrot.lane.b32.xlu0 %v779, 8
        %v1443 = vpop.permute.xlu0 %1442
        %1444 = vrot.lane.b32.xlu0 %v781, 8
        %v1445 = vpop.permute.xlu0 %1444
        %1446 = vrot.lane.b32.xlu0 %v784, 8
        %v1447 = vpop.permute.xlu0 %1446
        %1448 = vrot.lane.b32.xlu0 %v786, 8
        %v1449 = vpop.permute.xlu0 %1448
        %1450 = vrot.lane.b32.xlu0 %v789, 8
        %v1451 = vpop.permute.xlu0 %1450
        %1452 = vrot.lane.b32.xlu0 %v791, 8
        %v1453 = vpop.permute.xlu0 %1452
        %1454 = vrot.lane.b32.xlu0 %v794, 8
        %v1455 = vpop.permute.xlu0 %1454
        %1456 = vrot.lane.b32.xlu0 %v796, 8
        %v1457 = vpop.permute.xlu0 %1456
        %1458 = vrot.lane.b32.xlu0 %v799, 8
        %v1459 = vpop.permute.xlu0 %1458
        %1460 = vrot.lane.b32.xlu0 %v801, 8
        %v1461 = vpop.permute.xlu0 %1460
        %1462 = vrot.lane.b32.xlu0 %v804, 8
        %v1463 = vpop.permute.xlu0 %1462
        %1464 = vrot.lane.b32.xlu0 %v806, 8
        %v1465 = vpop.permute.xlu0 %1464
        %1466 = vrot.lane.b32.xlu0 %v809, 8
        %v1467 = vpop.permute.xlu0 %1466
        %1468 = vrot.lane.b32.xlu0 %v811, 8
        %v1469 = vpop.permute.xlu0 %1468
        %1470 = vrot.lane.b32.xlu0 %v1110, 8
        %v1471 = vpop.permute.xlu0 %1470
        %1472 = vrot.lane.b32.xlu0 %v1112, 8
        %v1473 = vpop.permute.xlu0 %1472
        %1474 = vrot.lane.b32.xlu0 %v1411, 8
        %v1475 = vpop.permute.xlu0 %1474
        %1476 = vrot.lane.b32.xlu0 %v1413, 8
        %v1477 = vpop.permute.xlu0 %1476
        %v1510 = vsel %vm363, %v452, %v636
        %v1511 = vsel %vm363, %v453, %v638
        %v1512 = vsel %vm363, %v455, %v640
        %v1513 = vsel %vm363, %v456, %v642
        %v1514 = vsel %vm363, %v458, %v644
        %v1515 = vsel %vm363, %v459, %v646
        %v1516 = vsel %vm363, %v461, %v648
        %v1517 = vsel %vm363, %v462, %v650
        %v1518 = vsel %vm363, %v464, %v652
        %v1519 = vsel %vm363, %v465, %v654
        %v1520 = vsel %vm363, %v467, %v656
        %v1521 = vsel %vm363, %v468, %v658
        %v1522 = vsel %vm363, %v470, %v660
        %v1523 = vsel %vm363, %v471, %v662
        %v1524 = vsel %vm363, %v473, %v664
        %v1525 = vsel %vm363, %v474, %v666
        %v1526 = vsel %vm363, %v476, %v668
        %v1527 = vsel %vm363, %v477, %v670
        %v1528 = vsel %vm363, %v479, %v672
        %v1529 = vsel %vm363, %v480, %v674
        %v1530 = vsel %vm363, %v482, %v676
        %v1531 = vsel %vm363, %v483, %v678
        %v1532 = vsel %vm363, %v485, %v680
        %v1533 = vsel %vm363, %v486, %v682
        %v1534 = vsel %vm363, %v488, %v684
        %v1535 = vsel %vm363, %v489, %v686
        %v1536 = vsel %vm363, %v491, %v688
        %v1537 = vsel %vm363, %v492, %v690
        %v1538 = vsel %vm363, %v494, %v692
        %v1539 = vsel %vm363, %v495, %v694
        %v1540 = vsel %vm363, %v497, %v696
        %v1541 = vsel %vm363, %v498, %v698
        %vm1542 = vcmask 15360
        %v1543 = vsel %vm1542, %v1510, %v813
        %v1544 = vsel %vm1542, %v1511, %v815
        %v1545 = vsel %vm1542, %v1512, %v817
        %v1546 = vsel %vm1542, %v1513, %v819
        %v1547 = vsel %vm1542, %v1514, %v821
        %v1548 = vsel %vm1542, %v1515, %v823
        %v1549 = vsel %vm1542, %v1516, %v825
        %v1550 = vsel %vm1542, %v1517, %v827
        %v1551 = vsel %vm1542, %v1518, %v829
        %v1552 = vsel %vm1542, %v1519, %v831
        %v1553 = vsel %vm1542, %v1520, %v833
        %v1554 = vsel %vm1542, %v1521, %v835
        %v1555 = vsel %vm1542, %v1522, %v837
        %v1556 = vsel %vm1542, %v1523, %v839
        %v1557 = vsel %vm1542, %v1524, %v841
        %v1558 = vsel %vm1542, %v1525, %v843
        %v1559 = vsel %vm1542, %v1526, %v845
        %v1560 = vsel %vm1542, %v1527, %v847
        %v1561 = vsel %vm1542, %v1528, %v849
        %v1562 = vsel %vm1542, %v1529, %v851
        %v1563 = vsel %vm1542, %v1530, %v853
        %v1564 = vsel %vm1542, %v1531, %v855
        %v1565 = vsel %vm1542, %v1532, %v857
        %v1566 = vsel %vm1542, %v1533, %v859
        %v1567 = vsel %vm1542, %v1534, %v861
        %v1568 = vsel %vm1542, %v1535, %v863
        %v1569 = vsel %vm1542, %v1536, %v865
        %v1570 = vsel %vm1542, %v1537, %v867
        %v1571 = vsel %vm1542, %v1538, %v869
        %v1572 = vsel %vm1542, %v1539, %v871
        %v1573 = vsel %vm1542, %v1540, %v873
        %v1574 = vsel %vm1542, %v1541, %v875
        %vm1575 = vcmask 23552
        %v1576 = vsel %vm1575, %v1543, %v911
        %v1577 = vsel %vm1575, %v1544, %v913
        %v1578 = vsel %vm1575, %v1545, %v915
        %v1579 = vsel %vm1575, %v1546, %v917
        %v1580 = vsel %vm1575, %v1547, %v919
        %v1581 = vsel %vm1575, %v1548, %v921
        %v1582 = vsel %vm1575, %v1549, %v923
        %v1583 = vsel %vm1575, %v1550, %v925
        %v1584 = vsel %vm1575, %v1551, %v927
        %v1585 = vsel %vm1575, %v1552, %v929
        %v1586 = vsel %vm1575, %v1553, %v931
        %v1587 = vsel %vm1575, %v1554, %v933
        %v1588 = vsel %vm1575, %v1555, %v935
        %v1589 = vsel %vm1575, %v1556, %v937
        %v1590 = vsel %vm1575, %v1557, %v939
        %v1591 = vsel %vm1575, %v1558, %v941
        %v1592 = vsel %vm1575, %v1559, %v943
        %v1593 = vsel %vm1575, %v1560, %v945
        %v1594 = vsel %vm1575, %v1561, %v947
        %v1595 = vsel %vm1575, %v1562, %v949
        %v1596 = vsel %vm1575, %v1563, %v951
        %v1597 = vsel %vm1575, %v1564, %v953
        %v1598 = vsel %vm1575, %v1565, %v955
        %v1599 = vsel %vm1575, %v1566, %v957
        %v1600 = vsel %vm1575, %v1567, %v959
        %v1601 = vsel %vm1575, %v1568, %v961
        %v1602 = vsel %vm1575, %v1569, %v963
        %v1603 = vsel %vm1575, %v1570, %v965
        %v1604 = vsel %vm1575, %v1571, %v967
        %v1605 = vsel %vm1575, %v1572, %v969
        %v1606 = vsel %vm1575, %v1573, %v971
        %v1607 = vsel %vm1575, %v1574, %v973
        %vm1608 = vcmask 31744
        %v1609 = vsel %vm1608, %v1576, %v1013
        %v1610 = vsel %vm1608, %v1577, %v1015
        %v1611 = vsel %vm1608, %v1578, %v1017
        %v1612 = vsel %vm1608, %v1579, %v1019
        %v1613 = vsel %vm1608, %v1580, %v1021
        %v1614 = vsel %vm1608, %v1581, %v1023
        %v1615 = vsel %vm1608, %v1582, %v1025
        %v1616 = vsel %vm1608, %v1583, %v1027
        %v1617 = vsel %vm1608, %v1584, %v1029
        %v1618 = vsel %vm1608, %v1585, %v1031
        %v1619 = vsel %vm1608, %v1586, %v1033
        %v1620 = vsel %vm1608, %v1587, %v1035
        %v1621 = vsel %vm1608, %v1588, %v1037
        %v1622 = vsel %vm1608, %v1589, %v1039
        %v1623 = vsel %vm1608, %v1590, %v1041
        %v1624 = vsel %vm1608, %v1591, %v1043
        %v1625 = vsel %vm1608, %v1592, %v1045
        %v1626 = vsel %vm1608, %v1593, %v1047
        %v1627 = vsel %vm1608, %v1594, %v1049
        %v1628 = vsel %vm1608, %v1595, %v1051
        %v1629 = vsel %vm1608, %v1596, %v1053
        %v1630 = vsel %vm1608, %v1597, %v1055
        %v1631 = vsel %vm1608, %v1598, %v1057
        %v1632 = vsel %vm1608, %v1599, %v1059
        %v1633 = vsel %vm1608, %v1600, %v1061
        %v1634 = vsel %vm1608, %v1601, %v1063
        %v1635 = vsel %vm1608, %v1602, %v1065
        %v1636 = vsel %vm1608, %v1603, %v1067
        %v1637 = vsel %vm1608, %v1604, %v1069
        %v1638 = vsel %vm1608, %v1605, %v1071
        %v1639 = vsel %vm1608, %v1606, %v1073
        %v1640 = vsel %vm1608, %v1607, %v1075
        %vm1641 = vcmask 39936
        %v1642 = vsel %vm1641, %v1609, %v1114
        %v1643 = vsel %vm1641, %v1610, %v1116
        %v1644 = vsel %vm1641, %v1611, %v1118
        %v1645 = vsel %vm1641, %v1612, %v1120
        %v1646 = vsel %vm1641, %v1613, %v1122
        %v1647 = vsel %vm1641, %v1614, %v1124
        %v1648 = vsel %vm1641, %v1615, %v1126
        %v1649 = vsel %vm1641, %v1616, %v1128
        %v1650 = vsel %vm1641, %v1617, %v1130
        %v1651 = vsel %vm1641, %v1618, %v1132
        %v1652 = vsel %vm1641, %v1619, %v1134
        %v1653 = vsel %vm1641, %v1620, %v1136
        %v1654 = vsel %vm1641, %v1621, %v1138
        %v1655 = vsel %vm1641, %v1622, %v1140
        %v1656 = vsel %vm1641, %v1623, %v1142
        %v1657 = vsel %vm1641, %v1624, %v1144
        %v1658 = vsel %vm1641, %v1625, %v1146
        %v1659 = vsel %vm1641, %v1626, %v1148
        %v1660 = vsel %vm1641, %v1627, %v1150
        %v1661 = vsel %vm1641, %v1628, %v1152
        %v1662 = vsel %vm1641, %v1629, %v1154
        %v1663 = vsel %vm1641, %v1630, %v1156
        %v1664 = vsel %vm1641, %v1631, %v1158
        %v1665 = vsel %vm1641, %v1632, %v1160
        %v1666 = vsel %vm1641, %v1633, %v1162
        %v1667 = vsel %vm1641, %v1634, %v1164
        %v1668 = vsel %vm1641, %v1635, %v1166
        %v1669 = vsel %vm1641, %v1636, %v1168
        %v1670 = vsel %vm1641, %v1637, %v1170
        %v1671 = vsel %vm1641, %v1638, %v1172
        %v1672 = vsel %vm1641, %v1639, %v1174
        %v1673 = vsel %vm1641, %v1640, %v1176
        %vm1674 = vcmask 48128
        %v1675 = vsel %vm1674, %v1642, %v1212
        %v1676 = vsel %vm1674, %v1643, %v1214
        %v1677 = vsel %vm1674, %v1644, %v1216
        %v1678 = vsel %vm1674, %v1645, %v1218
        %v1679 = vsel %vm1674, %v1646, %v1220
        %v1680 = vsel %vm1674, %v1647, %v1222
        %v1681 = vsel %vm1674, %v1648, %v1224
        %v1682 = vsel %vm1674, %v1649, %v1226
        %v1683 = vsel %vm1674, %v1650, %v1228
        %v1684 = vsel %vm1674, %v1651, %v1230
        %v1685 = vsel %vm1674, %v1652, %v1232
        %v1686 = vsel %vm1674, %v1653, %v1234
        %v1687 = vsel %vm1674, %v1654, %v1236
        %v1688 = vsel %vm1674, %v1655, %v1238
        %v1689 = vsel %vm1674, %v1656, %v1240
        %v1690 = vsel %vm1674, %v1657, %v1242
        %v1691 = vsel %vm1674, %v1658, %v1244
        %v1692 = vsel %vm1674, %v1659, %v1246
        %v1693 = vsel %vm1674, %v1660, %v1248
        %v1694 = vsel %vm1674, %v1661, %v1250
        %v1695 = vsel %vm1674, %v1662, %v1252
        %v1696 = vsel %vm1674, %v1663, %v1254
        %v1697 = vsel %vm1674, %v1664, %v1256
        %v1698 = vsel %vm1674, %v1665, %v1258
        %v1699 = vsel %vm1674, %v1666, %v1260
        %v1700 = vsel %vm1674, %v1667, %v1262
        %v1701 = vsel %vm1674, %v1668, %v1264
        %v1702 = vsel %vm1674, %v1669, %v1266
        %v1703 = vsel %vm1674, %v1670, %v1268
        %v1704 = vsel %vm1674, %v1671, %v1270
        %v1705 = vsel %vm1674, %v1672, %v1272
        %v1706 = vsel %vm1674, %v1673, %v1274
        %vm1707 = vcmask 56320
        %v1708 = vsel %vm1707, %v1675, %v1314
        %v1709 = vsel %vm1707, %v1676, %v1316
        %v1710 = vsel %vm1707, %v1677, %v1318
        %v1711 = vsel %vm1707, %v1678, %v1320
        %v1712 = vsel %vm1707, %v1679, %v1322
        %v1713 = vsel %vm1707, %v1680, %v1324
        %v1714 = vsel %vm1707, %v1681, %v1326
        %v1715 = vsel %vm1707, %v1682, %v1328
        %v1716 = vsel %vm1707, %v1683, %v1330
        %v1717 = vsel %vm1707, %v1684, %v1332
        %v1718 = vsel %vm1707, %v1685, %v1334
        %v1719 = vsel %vm1707, %v1686, %v1336
        %v1720 = vsel %vm1707, %v1687, %v1338
        %v1721 = vsel %vm1707, %v1688, %v1340
        %v1722 = vsel %vm1707, %v1689, %v1342
        %v1723 = vsel %vm1707, %v1690, %v1344
        %v1724 = vsel %vm1707, %v1691, %v1346
        %v1725 = vsel %vm1707, %v1692, %v1348
        %v1726 = vsel %vm1707, %v1693, %v1350
        %v1727 = vsel %vm1707, %v1694, %v1352
        %v1728 = vsel %vm1707, %v1695, %v1354
        %v1729 = vsel %vm1707, %v1696, %v1356
        %v1730 = vsel %vm1707, %v1697, %v1358
        %v1731 = vsel %vm1707, %v1698, %v1360
        %v1732 = vsel %vm1707, %v1699, %v1362
        %v1733 = vsel %vm1707, %v1700, %v1364
        %v1734 = vsel %vm1707, %v1701, %v1366
        %v1735 = vsel %vm1707, %v1702, %v1368
        %v1736 = vsel %vm1707, %v1703, %v1370
        %v1737 = vsel %vm1707, %v1704, %v1372
        %v1738 = vsel %vm1707, %v1705, %v1374
        %v1739 = vsel %vm1707, %v1706, %v1376
        %vm1740 = vcmask 64512
        %v1741 = vsel %vm1740, %v1708, %v1415
        %v1742 = vsel %vm1740, %v1709, %v1417
        %v1743 = vsel %vm1740, %v1710, %v1419
        %v1744 = vsel %vm1740, %v1711, %v1421
        %v1745 = vsel %vm1740, %v1712, %v1423
        %v1746 = vsel %vm1740, %v1713, %v1425
        %v1747 = vsel %vm1740, %v1714, %v1427
        %v1748 = vsel %vm1740, %v1715, %v1429
        %v1749 = vsel %vm1740, %v1716, %v1431
        %v1750 = vsel %vm1740, %v1717, %v1433
        %v1751 = vsel %vm1740, %v1718, %v1435
        %v1752 = vsel %vm1740, %v1719, %v1437
        %v1753 = vsel %vm1740, %v1720, %v1439
        %v1754 = vsel %vm1740, %v1721, %v1441
        %v1755 = vsel %vm1740, %v1722, %v1443
        %v1756 = vsel %vm1740, %v1723, %v1445
        %v1757 = vsel %vm1740, %v1724, %v1447
        %v1758 = vsel %vm1740, %v1725, %v1449
        %v1759 = vsel %vm1740, %v1726, %v1451
        %v1760 = vsel %vm1740, %v1727, %v1453
        %v1761 = vsel %vm1740, %v1728, %v1455
        %v1762 = vsel %vm1740, %v1729, %v1457
        %v1763 = vsel %vm1740, %v1730, %v1459
        %v1764 = vsel %vm1740, %v1731, %v1461
        %v1765 = vsel %vm1740, %v1732, %v1463
        %v1766 = vsel %vm1740, %v1733, %v1465
        %v1767 = vsel %vm1740, %v1734, %v1467
        %v1768 = vsel %vm1740, %v1735, %v1469
        %v1769 = vsel %vm1740, %v1736, %v1471
        %v1770 = vsel %vm1740, %v1737, %v1473
        %v1771 = vsel %vm1740, %v1738, %v1475
        %v1772 = vsel %vm1740, %v1739, %v1477
        %v1773 = vld [vmem:[%s1] sm:$0xff]
        %v1774 = vld [vmem:[%s1 + $0x8] sm:$0x1]
        %v1775 = vld [vmem:[%s2] sm:$0x1]
        %v1777 = vlaneseq
        %v1778 = vshrl.u32 %v1777, 7
        %v1779 = vsub.s32 0, %v1778
        %v1780 = vrot.slane %v1775, %v1779
        %vm1782 = vcmask 72704
        %v1784 = vsel %vm1782, %v1741, 0
        %v1787 = vsel %vm1782, %v1742, 0
        %v1790 = vsel %vm1782, %v1743, 0
        %v1793 = vsel %vm1782, %v1744, 0
        %v1796 = vsel %vm1782, %v1745, 0
        %v1799 = vsel %vm1782, %v1746, 0
        %v1802 = vsel %vm1782, %v1747, 0
        %v1805 = vsel %vm1782, %v1748, 0
        %v1808 = vsel %vm1782, %v1749, 0
        %v1811 = vsel %vm1782, %v1750, 0
        %v1814 = vsel %vm1782, %v1751, 0
        %v1817 = vsel %vm1782, %v1752, 0
        %v1820 = vsel %vm1782, %v1753, 0
        %v1823 = vsel %vm1782, %v1754, 0
        %v1826 = vsel %vm1782, %v1755, 0
        %v1829 = vsel %vm1782, %v1756, 0
        %v1832 = vsel %vm1782, %v1757, 0
        %v1835 = vsel %vm1782, %v1758, 0
        %v1838 = vsel %vm1782, %v1759, 0
        %v1841 = vsel %vm1782, %v1760, 0
        %v1844 = vsel %vm1782, %v1761, 0
        %v1847 = vsel %vm1782, %v1762, 0
        %v1850 = vsel %vm1782, %v1763, 0
        %v1853 = vsel %vm1782, %v1764, 0
        %v1856 = vsel %vm1782, %v1765, 0
        %v1859 = vsel %vm1782, %v1766, 0
        %v1862 = vsel %vm1782, %v1767, 0
        %v1865 = vsel %vm1782, %v1768, 0
        %v1868 = vsel %vm1782, %v1769, 0
        %v1871 = vsel %vm1782, %v1770, 0
        %v1874 = vsel %vm1782, %v1771, 0
        %v1877 = vsel %vm1782, %v1772, 0
        %vm1879 = vcmask 1040384
        %v1881 = vsel %vm1879, %v1774, 0
        %1883 = vmatprep.subr.mxu0 0.0
        %1884 = vmatpush1.msra.mxu0 %v1773
        %1885 = vmatprep.subr.mxu0 0.0
        %1886 = vmatpush1.msra.mxu0 %v1881
        %1887 = vmatprep.subr.mxu0 0.0
        %1888 = vmatpush1.msra.mxu0 0.0
        %1889 = vmatprep.subr.mxu0 0.0
        %1890 = vmatpush1.msra.mxu0 0.0
        %1891 = vmatprep.subr.mxu0 0.0
        %1892 = vmatpush1.msra.mxu0 0.0
        %1893 = vmatprep.subr.mxu0 0.0
        %1894 = vmatpush1.msra.mxu0 0.0
        %1895 = vmatprep.subr.mxu0 0.0
        %1896 = vmatpush1.msra.mxu0 0.0
        %1897 = vmatprep.subr.mxu0 0.0
        %1898 = vmatpush1.msra.mxu0 0.0
        %1899 = vmatprep.subr.mxu0 0.0
        %1900 = vmatpush1.msra.mxu0 0.0
        %1901 = vmatprep.subr.mxu0 0.0
        %1902 = vmatpush1.msra.mxu0 0.0
        %1903 = vmatprep.subr.mxu0 0.0
        %1904 = vmatpush1.msra.mxu0 0.0
        %1905 = vmatprep.subr.mxu0 0.0
        %1906 = vmatpush1.msra.mxu0 0.0
        %1907 = vmatprep.subr.mxu0 0.0
        %1908 = vmatpush1.msra.mxu0 0.0
        %1909 = vmatprep.subr.mxu0 0.0
        %1910 = vmatpush1.msra.mxu0 0.0
        %1911 = vmatprep.subr.mxu0 0.0
        %1912 = vmatpush1.msra.mxu0 0.0
        %1913 = vmatprep.subr.mxu0 0.0
        %1914 = vmatpush1.msra.mxu0 0.0
        %1915 = vmatprep.subr.mxu0 0.0
        %1916 = vmatpush1.msra.mxu0 0.0
        %1917 = vmatprep.subr.mxu0 0.0
        %1918 = vmatpush1.msra.mxu0 0.0
        %1919 = vmatprep.subr.mxu0 0.0
        %1920 = vmatpush1.msra.mxu0 0.0
        %1921 = vmatprep.subr.mxu0 0.0
        %1922 = vmatpush1.msra.mxu0 0.0
        %1923 = vmatprep.subr.mxu0 0.0
        %1924 = vmatpush1.msra.mxu0 0.0
        %1925 = vmatprep.subr.mxu0 0.0
        %1926 = vmatpush1.msra.mxu0 0.0
        %1927 = vmatprep.subr.mxu0 0.0
        %1928 = vmatpush1.msra.mxu0 0.0
        %1929 = vmatprep.subr.mxu0 0.0
        %1930 = vmatpush1.msra.mxu0 0.0
        %1931 = vmatprep.subr.mxu0 0.0
        %1932 = vmatpush1.msra.mxu0 0.0
        %1933 = vmatprep.subr.mxu0 0.0
        %1934 = vmatpush1.msra.mxu0 0.0
        %1935 = vmatprep.subr.mxu0 0.0
        %1936 = vmatpush1.msra.mxu0 0.0
        %1937 = vmatprep.subr.mxu0 0.0
        %1938 = vmatpush1.msra.mxu0 0.0
        %1939 = vmatprep.subr.mxu0 0.0
        %1940 = vmatpush1.msra.mxu0 0.0
        %1941 = vmatprep.subr.mxu0 0.0
        %1942 = vmatpush1.msra.mxu0 0.0
        %1943 = vmatprep.subr.mxu0 0.0
        %1944 = vmatpush1.msra.mxu0 0.0
        %1945 = vmatprep.subr.mxu0 0.0
        %1946 = vmatpush1.msra.mxu0 0.0
        %1947 = vmatprep.mubr.f32.mxu0 0.0
        %1948 = vmatmul.mubr.f32.gmra.mrb[0].mxu0 %v1784
        %v1949 = vpop.f32.mrb[0].mxu0
        %v1950 = vadd.f32 %v1780, %v1949
        %v1951 = vpop.f32.mrb[0].mxu0
        %1952 = vmatprep.mubr.f32.mxu0 0.0
        %1953 = vmatmul.mubr.f32.gmra.mrb[0].mxu0 %v1787
        %v1954 = vpop.f32.mrb[0].mxu0
        %v1955 = vadd.f32 %v1780, %v1954
        %v1956 = vpop.f32.mrb[0].mxu0
        %1957 = vmatprep.mubr.f32.mxu0 0.0
        %1958 = vmatmul.mubr.f32.gmra.mrb[0].mxu0 %v1790
        %v1959 = vpop.f32.mrb[0].mxu0
        %v1960 = vadd.f32 %v1780, %v1959
        %v1961 = vpop.f32.mrb[0].mxu0
        %1962 = vmatprep.mubr.f32.mxu0 0.0
        %1963 = vmatmul.mubr.f32.gmra.mrb[0].mxu0 %v1793
        %v1964 = vpop.f32.mrb[0].mxu0
        %v1965 = vadd.f32 %v1780, %v1964
        %v1966 = vpop.f32.mrb[0].mxu0
        %1967 = vmatprep.mubr.f32.mxu0 0.0
        %1968 = vmatmul.mubr.f32.gmra.mrb[0].mxu0 %v1796
        %v1969 = vpop.f32.mrb[0].mxu0
        %v1970 = vadd.f32 %v1780, %v1969
        %v1971 = vpop.f32.mrb[0].mxu0
        %1972 = vmatprep.mubr.f32.mxu0 0.0
        %1973 = vmatmul.mubr.f32.gmra.mrb[0].mxu0 %v1799
        %v1974 = vpop.f32.mrb[0].mxu0
        %v1975 = vadd.f32 %v1780, %v1974
        %v1976 = vpop.f32.mrb[0].mxu0
        %1977 = vmatprep.mubr.f32.mxu0 0.0
        %1978 = vmatmul.mubr.f32.gmra.mrb[0].mxu0 %v1802
        %v1979 = vpop.f32.mrb[0].mxu0
        %v1980 = vadd.f32 %v1780, %v1979
        %v1981 = vpop.f32.mrb[0].mxu0
        %1982 = vmatprep.mubr.f32.mxu0 0.0
        %1983 = vmatmul.mubr.f32.gmra.mrb[0].mxu0 %v1805
        %v1984 = vpop.f32.mrb[0].mxu0
        %v1985 = vadd.f32 %v1780, %v1984
        %v1986 = vpop.f32.mrb[0].mxu0
        %1987 = vmatprep.mubr.f32.mxu0 0.0
        %1988 = vmatmul.mubr.f32.gmra.mrb[0].mxu0 %v1808
        %v1989 = vpop.f32.mrb[0].mxu0
        %v1990 = vadd.f32 %v1780, %v1989
        %v1991 = vpop.f32.mrb[0].mxu0
        %1992 = vmatprep.mubr.f32.mxu0 0.0
        %1993 = vmatmul.mubr.f32.gmra.mrb[0].mxu0 %v1811
        %v1994 = vpop.f32.mrb[0].mxu0
        %v1995 = vadd.f32 %v1780, %v1994
        %v1996 = vpop.f32.mrb[0].mxu0
        %1997 = vmatprep.mubr.f32.mxu0 0.0
        %1998 = vmatmul.mubr.f32.gmra.mrb[0].mxu0 %v1814
        %v1999 = vpop.f32.mrb[0].mxu0
        %v2000 = vadd.f32 %v1780, %v1999
        %v2001 = vpop.f32.mrb[0].mxu0
        %2002 = vmatprep.mubr.f32.mxu0 0.0
        %2003 = vmatmul.mubr.f32.gmra.mrb[0].mxu0 %v1817
        %v2004 = vpop.f32.mrb[0].mxu0
        %v2005 = vadd.f32 %v1780, %v2004
        %v2006 = vpop.f32.mrb[0].mxu0
        %2007 = vmatprep.mubr.f32.mxu0 0.0
        %2008 = vmatmul.mubr.f32.gmra.mrb[0].mxu0 %v1820
        %v2009 = vpop.f32.mrb[0].mxu0
        %v2010 = vadd.f32 %v1780, %v2009
        %v2011 = vpop.f32.mrb[0].mxu0
        %2012 = vmatprep.mubr.f32.mxu0 0.0
        %2013 = vmatmul.mubr.f32.gmra.mrb[0].mxu0 %v1823
        %v2014 = vpop.f32.mrb[0].mxu0
        %v2015 = vadd.f32 %v1780, %v2014
        %v2016 = vpop.f32.mrb[0].mxu0
        %2017 = vmatprep.mubr.f32.mxu0 0.0
        %2018 = vmatmul.mubr.f32.gmra.mrb[0].mxu0 %v1826
        %v2019 = vpop.f32.mrb[0].mxu0
        %v2020 = vadd.f32 %v1780, %v2019
        %v2021 = vpop.f32.mrb[0].mxu0
        %2022 = vmatprep.mubr.f32.mxu0 0.0
        %2023 = vmatmul.mubr.f32.gmra.mrb[0].mxu0 %v1829
        %v2024 = vpop.f32.mrb[0].mxu0
        %v2025 = vadd.f32 %v1780, %v2024
        %v2026 = vpop.f32.mrb[0].mxu0
        %2027 = vmatprep.mubr.f32.mxu0 0.0
        %2028 = vmatmul.mubr.f32.gmra.mrb[0].mxu0 %v1832
        %v2029 = vpop.f32.mrb[0].mxu0
        %v2030 = vadd.f32 %v1780, %v2029
        %v2031 = vpop.f32.mrb[0].mxu0
        %2032 = vmatprep.mubr.f32.mxu0 0.0
        %2033 = vmatmul.mubr.f32.gmra.mrb[0].mxu0 %v1835
        %v2034 = vpop.f32.mrb[0].mxu0
        %v2035 = vadd.f32 %v1780, %v2034
        %v2036 = vpop.f32.mrb[0].mxu0
        %2037 = vmatprep.mubr.f32.mxu0 0.0
        %2038 = vmatmul.mubr.f32.gmra.mrb[0].mxu0 %v1838
        %v2039 = vpop.f32.mrb[0].mxu0
        %v2040 = vadd.f32 %v1780, %v2039
        %v2041 = vpop.f32.mrb[0].mxu0
        %2042 = vmatprep.mubr.f32.mxu0 0.0
        %2043 = vmatmul.mubr.f32.gmra.mrb[0].mxu0 %v1841
        %v2044 = vpop.f32.mrb[0].mxu0
        %v2045 = vadd.f32 %v1780, %v2044
        %v2046 = vpop.f32.mrb[0].mxu0
        %2047 = vmatprep.mubr.f32.mxu0 0.0
        %2048 = vmatmul.mubr.f32.gmra.mrb[0].mxu0 %v1844
        %v2049 = vpop.f32.mrb[0].mxu0
        %v2050 = vadd.f32 %v1780, %v2049
        %v2051 = vpop.f32.mrb[0].mxu0
        %2052 = vmatprep.mubr.f32.mxu0 0.0
        %2053 = vmatmul.mubr.f32.gmra.mrb[0].mxu0 %v1847
        %v2054 = vpop.f32.mrb[0].mxu0
        %v2055 = vadd.f32 %v1780, %v2054
        %v2056 = vpop.f32.mrb[0].mxu0
        %2057 = vmatprep.mubr.f32.mxu0 0.0
        %2058 = vmatmul.mubr.f32.gmra.mrb[0].mxu0 %v1850
        %v2059 = vpop.f32.mrb[0].mxu0
        %v2060 = vadd.f32 %v1780, %v2059
        %v2061 = vpop.f32.mrb[0].mxu0
        %2062 = vmatprep.mubr.f32.mxu0 0.0
        %2063 = vmatmul.mubr.f32.gmra.mrb[0].mxu0 %v1853
        %v2064 = vpop.f32.mrb[0].mxu0
        %v2065 = vadd.f32 %v1780, %v2064
        %v2066 = vpop.f32.mrb[0].mxu0
        %2067 = vmatprep.mubr.f32.mxu0 0.0
        %2068 = vmatmul.mubr.f32.gmra.mrb[0].mxu0 %v1856
        %v2069 = vpop.f32.mrb[0].mxu0
        %v2070 = vadd.f32 %v1780, %v2069
        %v2071 = vpop.f32.mrb[0].mxu0
        %2072 = vmatprep.mubr.f32.mxu0 0.0
        %2073 = vmatmul.mubr.f32.gmra.mrb[0].mxu0 %v1859
        %v2074 = vpop.f32.mrb[0].mxu0
        %v2075 = vadd.f32 %v1780, %v2074
        %v2076 = vpop.f32.mrb[0].mxu0
        %2077 = vmatprep.mubr.f32.mxu0 0.0
        %2078 = vmatmul.mubr.f32.gmra.mrb[0].mxu0 %v1862
        %v2079 = vpop.f32.mrb[0].mxu0
        %v2080 = vadd.f32 %v1780, %v2079
        %v2081 = vpop.f32.mrb[0].mxu0
        %2082 = vmatprep.mubr.f32.mxu0 0.0
        %2083 = vmatmul.mubr.f32.gmra.mrb[0].mxu0 %v1865
        %v2084 = vpop.f32.mrb[0].mxu0
        %v2085 = vadd.f32 %v1780, %v2084
        %v2086 = vpop.f32.mrb[0].mxu0
        %2087 = vmatprep.mubr.f32.mxu0 0.0
        %2088 = vmatmul.mubr.f32.gmra.mrb[0].mxu0 %v1868
        %v2089 = vpop.f32.mrb[0].mxu0
        %v2090 = vadd.f32 %v1780, %v2089
        %v2091 = vpop.f32.mrb[0].mxu0
        %2092 = vmatprep.mubr.f32.mxu0 0.0
        %2093 = vmatmul.mubr.f32.gmra.mrb[0].mxu0 %v1871
        %v2094 = vpop.f32.mrb[0].mxu0
        %v2095 = vadd.f32 %v1780, %v2094
        %v2096 = vpop.f32.mrb[0].mxu0
        %2097 = vmatprep.mubr.f32.mxu0 0.0
        %2098 = vmatmul.mubr.f32.gmra.mrb[0].mxu0 %v1874
        %v2099 = vpop.f32.mrb[0].mxu0
        %v2100 = vadd.f32 %v1780, %v2099
        %v2101 = vpop.f32.mrb[0].mxu0
        %2102 = vmatprep.mubr.f32.mxu0 0.0
        %2103 = vmatmul.mubr.f32.gmra.mrb[0].mxu0 %v1877
        %v2104 = vpop.f32.mrb[0].mxu0
        %v2105 = vadd.f32 %v1780, %v2104
        %v2106 = vpop.f32.mrb[0].mxu0
        %2107 = vdwg.mxu0
        %v2108 = vmax.f32 %v1950, 0.0
        %v2109 = vmax.f32 %v1955, 0.0
        %v2110 = vmax.f32 %v1960, 0.0
        %v2111 = vmax.f32 %v1965, 0.0
        %v2112 = vmax.f32 %v1970, 0.0
        %v2113 = vmax.f32 %v1975, 0.0
        %v2114 = vmax.f32 %v1980, 0.0
        %v2115 = vmax.f32 %v1985, 0.0
        %v2116 = vmax.f32 %v1990, 0.0
        %v2117 = vmax.f32 %v1995, 0.0
        %v2118 = vmax.f32 %v2000, 0.0
        %v2119 = vmax.f32 %v2005, 0.0
        %v2120 = vmax.f32 %v2010, 0.0
        %v2121 = vmax.f32 %v2015, 0.0
        %v2122 = vmax.f32 %v2020, 0.0
        %v2123 = vmax.f32 %v2025, 0.0
        %v2124 = vmax.f32 %v2030, 0.0
        %v2125 = vmax.f32 %v2035, 0.0
        %v2126 = vmax.f32 %v2040, 0.0
        %v2127 = vmax.f32 %v2045, 0.0
        %v2128 = vmax.f32 %v2050, 0.0
        %v2129 = vmax.f32 %v2055, 0.0
        %v2130 = vmax.f32 %v2060, 0.0
        %v2131 = vmax.f32 %v2065, 0.0
        %v2132 = vmax.f32 %v2070, 0.0
        %v2133 = vmax.f32 %v2075, 0.0
        %v2134 = vmax.f32 %v2080, 0.0
        %v2135 = vmax.f32 %v2085, 0.0
        %v2136 = vmax.f32 %v2090, 0.0
        %v2137 = vmax.f32 %v2095, 0.0
        %v2138 = vmax.f32 %v2100, 0.0
        %v2139 = vmax.f32 %v2105, 0.0
        %v2140 = vmax.f32 %v2108, %v2110
        %v2141 = vmax.f32 %v2109, %v2111
        %v2142 = vmax.f32 %v2112, %v2114
        %v2143 = vmax.f32 %v2113, %v2115
        %v2144 = vmax.f32 %v2116, %v2118
        %v2145 = vmax.f32 %v2117, %v2119
        %v2146 = vmax.f32 %v2120, %v2122
        %v2147 = vmax.f32 %v2121, %v2123
        %v2148 = vmax.f32 %v2124, %v2126
        %v2149 = vmax.f32 %v2125, %v2127
        %v2150 = vmax.f32 %v2128, %v2130
        %v2151 = vmax.f32 %v2129, %v2131
        %v2152 = vmax.f32 %v2132, %v2134
        %v2153 = vmax.f32 %v2133, %v2135
        %v2154 = vmax.f32 %v2136, %v2138
        %v2155 = vmax.f32 %v2137, %v2139
        %vm2156 = vcmask 130048
        %2157 = vst.msk [vmem:[#allocation6] sm:$0xff] %vm2156, %v2140
        %2158 = vst.msk [vmem:[#allocation6 + $0x8] sm:$0xff] %vm2156, %v2141
        %2159 = vst.msk [vmem:[#allocation6 + $0x10] sm:$0xff] %vm2156, %v2142
        %2160 = vst.msk [vmem:[#allocation6 + $0x18] sm:$0xff] %vm2156, %v2143
        %2161 = vst.msk [vmem:[#allocation6 + $0x20] sm:$0xff] %vm2156, %v2144
        %2162 = vst.msk [vmem:[#allocation6 + $0x28] sm:$0xff] %vm2156, %v2145
        %2163 = vst.msk [vmem:[#allocation6 + $0x30] sm:$0xff] %vm2156, %v2146
        %2164 = vst.msk [vmem:[#allocation6 + $0x38] sm:$0xff] %vm2156, %v2147
        %2165 = vst.msk [vmem:[#allocation6 + $0x40] sm:$0xff] %vm2156, %v2148
        %2166 = vst.msk [vmem:[#allocation6 + $0x48] sm:$0xff] %vm2156, %v2149
        %2167 = vst.msk [vmem:[#allocation6 + $0x50] sm:$0xff] %vm2156, %v2150
        %2168 = vst.msk [vmem:[#allocation6 + $0x58] sm:$0xff] %vm2156, %v2151
        %2169 = vst.msk [vmem:[#allocation6 + $0x60] sm:$0xff] %vm2156, %v2152
        %2170 = vst.msk [vmem:[#allocation6 + $0x68] sm:$0xff] %vm2156, %v2153
        %2171 = vst.msk [vmem:[#allocation6 + $0x70] sm:$0xff] %vm2156, %v2154
        %2172 = vst.msk [vmem:[#allocation6 + $0x78] sm:$0xff] %vm2156, %v2155
        %v2173 = vld [vmem:[#allocation6] ss:$2 sm:$0xff]
        %s2174 = scalar_lea.vmem [#allocation6], 16
        %v2175 = vld [vmem:[%s2174] ss:$2 sm:$0xff]
        %s2176 = scalar_lea.vmem [#allocation6], 32
        %v2177 = vld [vmem:[%s2176] ss:$2 sm:$0xff]
        %s2178 = scalar_lea.vmem [#allocation6], 48
        %v2179 = vld [vmem:[%s2178] ss:$2 sm:$0xff]
        %s2180 = scalar_lea.vmem [#allocation6], 64
        %v2181 = vld [vmem:[%s2180] ss:$2 sm:$0xff]
        %s2182 = scalar_lea.vmem [#allocation6], 80
        %v2183 = vld [vmem:[%s2182] ss:$2 sm:$0xff]
        %s2184 = scalar_lea.vmem [#allocation6], 96
        %v2185 = vld [vmem:[%s2184] ss:$2 sm:$0xff]
        %s2186 = scalar_lea.vmem [#allocation6], 112
        %v2187 = vld [vmem:[%s2186] ss:$2 sm:$0xff]
        %s2188 = scalar_lea.vmem [#allocation6], 1
        %v2189 = vld [vmem:[%s2188] ss:$2 sm:$0xff]
        %s2190 = scalar_lea.vmem [#allocation6], 17
        %v2191 = vld [vmem:[%s2190] ss:$2 sm:$0xff]
        %s2192 = scalar_lea.vmem [#allocation6], 33
        %v2193 = vld [vmem:[%s2192] ss:$2 sm:$0xff]
        %s2194 = scalar_lea.vmem [#allocation6], 49
        %v2195 = vld [vmem:[%s2194] ss:$2 sm:$0xff]
        %s2196 = scalar_lea.vmem [#allocation6], 65
        %v2197 = vld [vmem:[%s2196] ss:$2 sm:$0xff]
        %s2198 = scalar_lea.vmem [#allocation6], 81
        %v2199 = vld [vmem:[%s2198] ss:$2 sm:$0xff]
        %s2200 = scalar_lea.vmem [#allocation6], 97
        %v2201 = vld [vmem:[%s2200] ss:$2 sm:$0xff]
        %s2202 = scalar_lea.vmem [#allocation6], 113
        %v2203 = vld [vmem:[%s2202] ss:$2 sm:$0xff]
        %v2204 = vmax.f32 %v2173, %v2189
        %v2205 = vmax.f32 %v2175, %v2191
        %v2206 = vmax.f32 %v2177, %v2193
        %v2207 = vmax.f32 %v2179, %v2195
        %v2208 = vmax.f32 %v2181, %v2197
        %v2209 = vmax.f32 %v2183, %v2199
        %v2210 = vmax.f32 %v2185, %v2201
        %v2211 = vmax.f32 %v2187, %v2203
        %2212 = vst.msk [vmem:[#allocation3] sm:$0xff] %vm2156, 0.0
        %vm2213 = vcmask 123904
        %2214 = vst.msk [vmem:[#allocation3 + $0x8] sm:$0x3] %vm2213, 0.0
        %2215 = vst.msk [vmem:[#allocation3 + $0x10] sm:$0xff] %vm2156, 0.0
        %2216 = vst.msk [vmem:[#allocation3 + $0x18] sm:$0x3] %vm2213, 0.0
        %2217 = vst.msk [vmem:[#allocation3 + $0x20] sm:$0xff] %vm2156, 0.0
        %2218 = vst.msk [vmem:[#allocation3 + $0x28] sm:$0x3] %vm2213, 0.0
        %2219 = vst.msk [vmem:[#allocation3 + $0x30] sm:$0xff] %vm2156, 0.0
        %2220 = vst.msk [vmem:[#allocation3 + $0x38] sm:$0x3] %vm2213, 0.0
        %2221 = vst.msk [vmem:[#allocation3 + $0x40] sm:$0xff] %vm2156, 0.0
        %2222 = vst.msk [vmem:[#allocation3 + $0x48] sm:$0x3] %vm2213, 0.0
        %2223 = vst.msk [vmem:[#allocation3 + $0x50] sm:$0xff] %vm2156, 0.0
        %2224 = vst.msk [vmem:[#allocation3 + $0x58] sm:$0x3] %vm2213, 0.0
        %2225 = vst.msk [vmem:[#allocation3 + $0x60] sm:$0xff] %vm2156, 0.0
        %2226 = vst.msk [vmem:[#allocation3 + $0x68] sm:$0x3] %vm2213, 0.0
        %2227 = vst.msk [vmem:[#allocation3 + $0x70] sm:$0xff] %vm2156, 0.0
        %2228 = vst.msk [vmem:[#allocation3 + $0x78] sm:$0x3] %vm2213, 0.0
        %2229 = vst.msk [vmem:[#allocation3 + $0x80] sm:$0xff] %vm2156, 0.0
        %2230 = vst.msk [vmem:[#allocation3 + $0x88] sm:$0x3] %vm2213, 0.0
        %2231 = vst.msk [vmem:[#allocation3 + $0x90] sm:$0xff] %vm2156, 0.0
        %2232 = vst.msk [vmem:[#allocation3 + $0x98] sm:$0x3] %vm2213, 0.0
        %s2233 = scalar_lea.vmem [#allocation3], 16
        %2234 = vst.msk [vmem:[%s2233 + $0x1] sm:$0xff] %vm2156, %v2204
        %2235 = vst.msk [vmem:[%s2233 + $0x11] sm:$0xff] %vm2156, %v2205
        %2236 = vst.msk [vmem:[%s2233 + $0x21] sm:$0xff] %vm2156, %v2206
        %2237 = vst.msk [vmem:[%s2233 + $0x31] sm:$0xff] %vm2156, %v2207
        %2238 = vst.msk [vmem:[%s2233 + $0x41] sm:$0xff] %vm2156, %v2208
        %2239 = vst.msk [vmem:[%s2233 + $0x51] sm:$0xff] %vm2156, %v2209
        %2240 = vst.msk [vmem:[%s2233 + $0x61] sm:$0xff] %vm2156, %v2210
        %2241 = vst.msk [vmem:[%s2233 + $0x71] sm:$0xff] %vm2156, %v2211
        %v2242 = vld [vmem:[#allocation3] sm:$0xff]
        %v2243 = vld [vmem:[#allocation3 + $0x8] sm:$0x3]
        %v2244 = vld [vmem:[#allocation3 + $0x10] sm:$0xff]
        %v2245 = vld [vmem:[#allocation3 + $0x18] sm:$0x3]
        %v2246 = vld [vmem:[#allocation3 + $0x20] sm:$0xff]
        %v2247 = vld [vmem:[#allocation3 + $0x28] sm:$0x3]
        %v2248 = vld [vmem:[#allocation3 + $0x30] sm:$0xff]
        %v2249 = vld [vmem:[#allocation3 + $0x38] sm:$0x3]
        %v2250 = vld [vmem:[#allocation3 + $0x40] sm:$0xff]
        %v2251 = vld [vmem:[#allocation3 + $0x48] sm:$0x3]
        %v2252 = vld [vmem:[#allocation3 + $0x50] sm:$0xff]
        %v2253 = vld [vmem:[#allocation3 + $0x58] sm:$0x3]
        %v2254 = vld [vmem:[#allocation3 + $0x60] sm:$0xff]
        %v2255 = vld [vmem:[#allocation3 + $0x68] sm:$0x3]
        %v2256 = vld [vmem:[#allocation3 + $0x70] sm:$0xff]
        %v2257 = vld [vmem:[#allocation3 + $0x78] sm:$0x3]
        %v2258 = vld [vmem:[#allocation3 + $0x80] sm:$0xff]
        %v2259 = vld [vmem:[#allocation3 + $0x88] sm:$0x3]
        %v2260 = vld [vmem:[#allocation3 + $0x90] sm:$0xff]
        %v2261 = vld [vmem:[#allocation3 + $0x98] sm:$0x3]
        %v2278 = vrot.slane %v2242, 1
        %v2279 = vrot.slane %v2243, 1
        %v2280 = vsel %vm554, %v2278, %v2279
        %v2281 = vrot.slane %v2244, 1
        %v2282 = vrot.slane %v2245, 1
        %v2283 = vsel %vm554, %v2281, %v2282
        %v2284 = vrot.slane %v2246, 1
        %v2285 = vrot.slane %v2247, 1
        %v2286 = vsel %vm554, %v2284, %v2285
        %v2287 = vrot.slane %v2248, 1
        %v2288 = vrot.slane %v2249, 1
        %v2289 = vsel %vm554, %v2287, %v2288
        %v2290 = vrot.slane %v2250, 1
        %v2291 = vrot.slane %v2251, 1
        %v2292 = vsel %vm554, %v2290, %v2291
        %v2293 = vrot.slane %v2252, 1
        %v2294 = vrot.slane %v2253, 1
        %v2295 = vsel %vm554, %v2293, %v2294
        %v2296 = vrot.slane %v2254, 1
        %v2297 = vrot.slane %v2255, 1
        %v2298 = vsel %vm554, %v2296, %v2297
        %v2299 = vrot.slane %v2256, 1
        %v2300 = vrot.slane %v2257, 1
        %v2301 = vsel %vm554, %v2299, %v2300
        %2302 = vrot.lane.b32.xlu0 %v2280, 16
        %v2303 = vpop.permute.xlu0 %2302
        %2304 = vrot.lane.b32.xlu0 %v2283, 16
        %v2305 = vpop.permute.xlu0 %2304
        %2306 = vrot.lane.b32.xlu0 %v2286, 16
        %v2307 = vpop.permute.xlu0 %2306
        %2308 = vrot.lane.b32.xlu0 %v2289, 16
        %v2309 = vpop.permute.xlu0 %2308
        %2310 = vrot.lane.b32.xlu0 %v2292, 16
        %v2311 = vpop.permute.xlu0 %2310
        %2312 = vrot.lane.b32.xlu0 %v2295, 16
        %v2313 = vpop.permute.xlu0 %2312
        %2314 = vrot.lane.b32.xlu0 %v2298, 16
        %v2315 = vpop.permute.xlu0 %2314
        %2316 = vrot.lane.b32.xlu0 %v2301, 16
        %v2317 = vpop.permute.xlu0 %2316
        %v2326 = vrot.slane %v2242, 2
        %v2327 = vrot.slane %v2243, 2
        %v2328 = vsel %vm731, %v2326, %v2327
        %v2329 = vrot.slane %v2244, 2
        %v2330 = vrot.slane %v2245, 2
        %v2331 = vsel %vm731, %v2329, %v2330
        %v2332 = vrot.slane %v2246, 2
        %v2333 = vrot.slane %v2247, 2
        %v2334 = vsel %vm731, %v2332, %v2333
        %v2335 = vrot.slane %v2248, 2
        %v2336 = vrot.slane %v2249, 2
        %v2337 = vsel %vm731, %v2335, %v2336
        %v2338 = vrot.slane %v2250, 2
        %v2339 = vrot.slane %v2251, 2
        %v2340 = vsel %vm731, %v2338, %v2339
        %v2341 = vrot.slane %v2252, 2
        %v2342 = vrot.slane %v2253, 2
        %v2343 = vsel %vm731, %v2341, %v2342
        %v2344 = vrot.slane %v2254, 2
        %v2345 = vrot.slane %v2255, 2
        %v2346 = vsel %vm731, %v2344, %v2345
        %v2347 = vrot.slane %v2256, 2
        %v2348 = vrot.slane %v2257, 2
        %v2349 = vsel %vm731, %v2347, %v2348
        %2350 = vrot.lane.b32.xlu0 %v2328, 32
        %v2351 = vpop.permute.xlu0 %2350
        %2352 = vrot.lane.b32.xlu0 %v2331, 32
        %v2353 = vpop.permute.xlu0 %2352
        %2354 = vrot.lane.b32.xlu0 %v2334, 32
        %v2355 = vpop.permute.xlu0 %2354
        %2356 = vrot.lane.b32.xlu0 %v2337, 32
        %v2357 = vpop.permute.xlu0 %2356
        %2358 = vrot.lane.b32.xlu0 %v2340, 32
        %v2359 = vpop.permute.xlu0 %2358
        %2360 = vrot.lane.b32.xlu0 %v2343, 32
        %v2361 = vpop.permute.xlu0 %2360
        %2362 = vrot.lane.b32.xlu0 %v2346, 32
        %v2363 = vpop.permute.xlu0 %2362
        %2364 = vrot.lane.b32.xlu0 %v2349, 32
        %v2365 = vpop.permute.xlu0 %2364
        %2375 = vrot.lane.b32.xlu0 %v2244, 48
        %v2376 = vpop.permute.xlu0 %2375
        %2377 = vrot.lane.b32.xlu0 %v2246, 48
        %v2378 = vpop.permute.xlu0 %2377
        %2379 = vrot.lane.b32.xlu0 %v2248, 48
        %v2380 = vpop.permute.xlu0 %2379
        %2381 = vrot.lane.b32.xlu0 %v2250, 48
        %v2382 = vpop.permute.xlu0 %2381
        %2383 = vrot.lane.b32.xlu0 %v2252, 48
        %v2384 = vpop.permute.xlu0 %2383
        %2385 = vrot.lane.b32.xlu0 %v2254, 48
        %v2386 = vpop.permute.xlu0 %2385
        %2387 = vrot.lane.b32.xlu0 %v2256, 48
        %v2388 = vpop.permute.xlu0 %2387
        %2389 = vrot.lane.b32.xlu0 %v2258, 48
        %v2390 = vpop.permute.xlu0 %2389
        %v2400 = vrot.slane %v2258, 1
        %v2401 = vrot.slane %v2259, 1
        %v2402 = vsel %vm554, %v2400, %v2401
        %2403 = vrot.lane.b32.xlu0 %v2283, 64
        %v2404 = vpop.permute.xlu0 %2403
        %2405 = vrot.lane.b32.xlu0 %v2286, 64
        %v2406 = vpop.permute.xlu0 %2405
        %2407 = vrot.lane.b32.xlu0 %v2289, 64
        %v2408 = vpop.permute.xlu0 %2407
        %2409 = vrot.lane.b32.xlu0 %v2292, 64
        %v2410 = vpop.permute.xlu0 %2409
        %2411 = vrot.lane.b32.xlu0 %v2295, 64
        %v2412 = vpop.permute.xlu0 %2411
        %2413 = vrot.lane.b32.xlu0 %v2298, 64
        %v2414 = vpop.permute.xlu0 %2413
        %2415 = vrot.lane.b32.xlu0 %v2301, 64
        %v2416 = vpop.permute.xlu0 %2415
        %2417 = vrot.lane.b32.xlu0 %v2402, 64
        %v2418 = vpop.permute.xlu0 %2417
        %v2427 = vrot.slane %v2258, 2
        %v2428 = vrot.slane %v2259, 2
        %v2429 = vsel %vm731, %v2427, %v2428
        %2430 = vrot.lane.b32.xlu0 %v2331, 80
        %v2431 = vpop.permute.xlu0 %2430
        %2432 = vrot.lane.b32.xlu0 %v2334, 80
        %v2433 = vpop.permute.xlu0 %2432
        %2434 = vrot.lane.b32.xlu0 %v2337, 80
        %v2435 = vpop.permute.xlu0 %2434
        %2436 = vrot.lane.b32.xlu0 %v2340, 80
        %v2437 = vpop.permute.xlu0 %2436
        %2438 = vrot.lane.b32.xlu0 %v2343, 80
        %v2439 = vpop.permute.xlu0 %2438
        %2440 = vrot.lane.b32.xlu0 %v2346, 80
        %v2441 = vpop.permute.xlu0 %2440
        %2442 = vrot.lane.b32.xlu0 %v2349, 80
        %v2443 = vpop.permute.xlu0 %2442
        %2444 = vrot.lane.b32.xlu0 %v2429, 80
        %v2445 = vpop.permute.xlu0 %2444
        %2455 = vrot.lane.b32.xlu0 %v2246, 96
        %v2456 = vpop.permute.xlu0 %2455
        %2457 = vrot.lane.b32.xlu0 %v2248, 96
        %v2458 = vpop.permute.xlu0 %2457
        %2459 = vrot.lane.b32.xlu0 %v2250, 96
        %v2460 = vpop.permute.xlu0 %2459
        %2461 = vrot.lane.b32.xlu0 %v2252, 96
        %v2462 = vpop.permute.xlu0 %2461
        %2463 = vrot.lane.b32.xlu0 %v2254, 96
        %v2464 = vpop.permute.xlu0 %2463
        %2465 = vrot.lane.b32.xlu0 %v2256, 96
        %v2466 = vpop.permute.xlu0 %2465
        %2467 = vrot.lane.b32.xlu0 %v2258, 96
        %v2468 = vpop.permute.xlu0 %2467
        %2469 = vrot.lane.b32.xlu0 %v2260, 96
        %v2470 = vpop.permute.xlu0 %2469
        %v2480 = vrot.slane %v2260, 1
        %v2481 = vrot.slane %v2261, 1
        %v2482 = vsel %vm554, %v2480, %v2481
        %2483 = vrot.lane.b32.xlu0 %v2286, 112
        %v2484 = vpop.permute.xlu0 %2483
        %2485 = vrot.lane.b32.xlu0 %v2289, 112
        %v2486 = vpop.permute.xlu0 %2485
        %2487 = vrot.lane.b32.xlu0 %v2292, 112
        %v2488 = vpop.permute.xlu0 %2487
        %2489 = vrot.lane.b32.xlu0 %v2295, 112
        %v2490 = vpop.permute.xlu0 %2489
        %2491 = vrot.lane.b32.xlu0 %v2298, 112
        %v2492 = vpop.permute.xlu0 %2491
        %2493 = vrot.lane.b32.xlu0 %v2301, 112
        %v2494 = vpop.permute.xlu0 %2493
        %2495 = vrot.lane.b32.xlu0 %v2402, 112
        %v2496 = vpop.permute.xlu0 %2495
        %2497 = vrot.lane.b32.xlu0 %v2482, 112
        %v2498 = vpop.permute.xlu0 %2497
        %v2507 = vrot.slane %v2260, 2
        %v2508 = vrot.slane %v2261, 2
        %v2509 = vsel %vm731, %v2507, %v2508
        %v2510 = vsel %vm2156, %v2242, %v2303
        %v2511 = vsel %vm2156, %v2244, %v2305
        %v2512 = vsel %vm2156, %v2246, %v2307
        %v2513 = vsel %vm2156, %v2248, %v2309
        %v2514 = vsel %vm2156, %v2250, %v2311
        %v2515 = vsel %vm2156, %v2252, %v2313
        %v2516 = vsel %vm2156, %v2254, %v2315
        %v2517 = vsel %vm2156, %v2256, %v2317
        %vm2518 = vcmask 261120
        %v2519 = vsel %vm2518, %v2510, %v2351
        %v2520 = vsel %vm2518, %v2511, %v2353
        %v2521 = vsel %vm2518, %v2512, %v2355
        %v2522 = vsel %vm2518, %v2513, %v2357
        %v2523 = vsel %vm2518, %v2514, %v2359
        %v2524 = vsel %vm2518, %v2515, %v2361
        %v2525 = vsel %vm2518, %v2516, %v2363
        %v2526 = vsel %vm2518, %v2517, %v2365
        %vm2527 = vcmask 392192
        %v2528 = vsel %vm2527, %v2519, %v2376
        %v2529 = vsel %vm2527, %v2520, %v2378
        %v2530 = vsel %vm2527, %v2521, %v2380
        %v2531 = vsel %vm2527, %v2522, %v2382
        %v2532 = vsel %vm2527, %v2523, %v2384
        %v2533 = vsel %vm2527, %v2524, %v2386
        %v2534 = vsel %vm2527, %v2525, %v2388
        %v2535 = vsel %vm2527, %v2526, %v2390
        %vm2536 = vcmask 523264
        %v2537 = vsel %vm2536, %v2528, %v2404
        %v2538 = vsel %vm2536, %v2529, %v2406
        %v2539 = vsel %vm2536, %v2530, %v2408
        %v2540 = vsel %vm2536, %v2531, %v2410
        %v2541 = vsel %vm2536, %v2532, %v2412
        %v2542 = vsel %vm2536, %v2533, %v2414
        %v2543 = vsel %vm2536, %v2534, %v2416
        %v2544 = vsel %vm2536, %v2535, %v2418
        %vm2545 = vcmask 654336
        %v2546 = vsel %vm2545, %v2537, %v2431
        %v2547 = vsel %vm2545, %v2538, %v2433
        %v2548 = vsel %vm2545, %v2539, %v2435
        %v2549 = vsel %vm2545, %v2540, %v2437
        %v2550 = vsel %vm2545, %v2541, %v2439
        %v2551 = vsel %vm2545, %v2542, %v2441
        %v2552 = vsel %vm2545, %v2543, %v2443
        %v2553 = vsel %vm2545, %v2544, %v2445
        %vm2554 = vcmask 785408
        %v2555 = vsel %vm2554, %v2546, %v2456
        %v2556 = vsel %vm2554, %v2547, %v2458
        %v2557 = vsel %vm2554, %v2548, %v2460
        %v2558 = vsel %vm2554, %v2549, %v2462
        %v2559 = vsel %vm2554, %v2550, %v2464
        %v2560 = vsel %vm2554, %v2551, %v2466
        %v2561 = vsel %vm2554, %v2552, %v2468
        %v2562 = vsel %vm2554, %v2553, %v2470
        %vm2563 = vcmask 916480
        %v2564 = vsel %vm2563, %v2555, %v2484
        %v2565 = vsel %vm2563, %v2556, %v2486
        %v2566 = vsel %vm2563, %v2557, %v2488
        %v2567 = vsel %vm2563, %v2558, %v2490
        %v2568 = vsel %vm2563, %v2559, %v2492
        %v2569 = vsel %vm2563, %v2560, %v2494
        %v2570 = vsel %vm2563, %v2561, %v2496
        %v2571 = vsel %vm2563, %v2562, %v2498
        %v2572 = vld [vmem:[%s3] sm:$0xff]
        %v2573 = vld [vmem:[%s3 + $0x8] sm:$0xff]
        %v2574 = vld [vmem:[%s3 + $0x10] sm:$0xff]
        %v2575 = vld [vmem:[%s3 + $0x18] sm:$0xff]
        %v2576 = vld [vmem:[%s3 + $0x20] sm:$0xff]
        %v2577 = vld [vmem:[%s3 + $0x28] sm:$0xff]
        %v2578 = vld [vmem:[%s3 + $0x30] sm:$0xff]
        %v2579 = vld [vmem:[%s3 + $0x38] sm:$0xff]
        %v2580 = vld [vmem:[%s3 + $0x40] sm:$0xff]
        %v2581 = vld [vmem:[%s3 + $0x48] sm:$0xff]
        %v2582 = vld [vmem:[%s3 + $0x50] sm:$0xff]
        %v2583 = vld [vmem:[%s3 + $0x58] sm:$0xff]
        %v2584 = vld [vmem:[%s3 + $0x60] sm:$0xff]
        %v2585 = vld [vmem:[%s3 + $0x68] sm:$0xff]
        %v2586 = vld [vmem:[%s3 + $0x70] sm:$0xff]
        %v2587 = vld [vmem:[%s3 + $0x78] sm:$0xff]
        %v2588 = vld [vmem:[%s3 + $0x80] sm:$0xff]
        %v2589 = vld [vmem:[%s3 + $0x88] sm:$0xff]
        %v2590 = vld [vmem:[%s4] sm:$0x1]
        %v2592 = vlaneseq
        %v2593 = vshrl.u32 %v2592, 7
        %v2594 = vsub.s32 0, %v2593
        %v2595 = vrot.slane %v2590, %v2594
        %v2597 = vsel %vm2156, %v2334, 0
        %v2599 = vsel %vm2156, %v2337, 0
        %v2601 = vsel %vm2156, %v2340, 0
        %v2603 = vsel %vm2156, %v2343, 0
        %v2605 = vsel %vm2156, %v2346, 0
        %v2607 = vsel %vm2156, %v2349, 0
        %v2609 = vsel %vm2156, %v2429, 0
        %v2611 = vsel %vm2156, %v2509, 0
        %2613 = vmatprep.subr.mxu0 0.0
        %2614 = vmatpush1.msra.mxu0 %v2572
        %2615 = vmatprep.subr.mxu0 0.0
        %2616 = vmatpush1.msra.mxu0 %v2573
        %2617 = vmatprep.subr.mxu0 0.0
        %2618 = vmatpush1.msra.mxu0 %v2574
        %2619 = vmatprep.subr.mxu0 0.0
        %2620 = vmatpush1.msra.mxu0 %v2575
        %2621 = vmatprep.subr.mxu0 0.0
        %2622 = vmatpush1.msra.mxu0 %v2576
        %2623 = vmatprep.subr.mxu0 0.0
        %2624 = vmatpush1.msra.mxu0 %v2577
        %2625 = vmatprep.subr.mxu0 0.0
        %2626 = vmatpush1.msra.mxu0 %v2578
        %2627 = vmatprep.subr.mxu0 0.0
        %2628 = vmatpush1.msra.mxu0 %v2579
        %2629 = vmatprep.subr.mxu0 0.0
        %2630 = vmatpush1.msra.mxu0 %v2580
        %2631 = vmatprep.subr.mxu0 0.0
        %2632 = vmatpush1.msra.mxu0 %v2581
        %2633 = vmatprep.subr.mxu0 0.0
        %2634 = vmatpush1.msra.mxu0 %v2582
        %2635 = vmatprep.subr.mxu0 0.0
        %2636 = vmatpush1.msra.mxu0 %v2583
        %2637 = vmatprep.subr.mxu0 0.0
        %2638 = vmatpush1.msra.mxu0 %v2584
        %2639 = vmatprep.subr.mxu0 0.0
        %2640 = vmatpush1.msra.mxu0 %v2585
        %2641 = vmatprep.subr.mxu0 0.0
        %2642 = vmatpush1.msra.mxu0 %v2586
        %2643 = vmatprep.subr.mxu0 0.0
        %2644 = vmatpush1.msra.mxu0 %v2587
        %2645 = vmatprep.subr.mxu0 0.0
        %2646 = vmatpush1.msra.mxu0 %v2588
        %2647 = vmatprep.subr.mxu0 0.0
        %2648 = vmatpush1.msra.mxu0 %v2589
        %2649 = vmatprep.subr.mxu0 0.0
        %2650 = vmatpush1.msra.mxu0 0.0
        %2651 = vmatprep.subr.mxu0 0.0
        %2652 = vmatpush1.msra.mxu0 0.0
        %2653 = vmatprep.subr.mxu0 0.0
        %2654 = vmatpush1.msra.mxu0 0.0
        %2655 = vmatprep.subr.mxu0 0.0
        %2656 = vmatpush1.msra.mxu0 0.0
        %2657 = vmatprep.subr.mxu0 0.0
        %2658 = vmatpush1.msra.mxu0 0.0
        %2659 = vmatprep.subr.mxu0 0.0
        %2660 = vmatpush1.msra.mxu0 0.0
        %2661 = vmatprep.subr.mxu0 0.0
        %2662 = vmatpush1.msra.mxu0 0.0
        %2663 = vmatprep.subr.mxu0 0.0
        %2664 = vmatpush1.msra.mxu0 0.0
        %2665 = vmatprep.subr.mxu0 0.0
        %2666 = vmatpush1.msra.mxu0 0.0
        %2667 = vmatprep.subr.mxu0 0.0
        %2668 = vmatpush1.msra.mxu0 0.0
        %2669 = vmatprep.subr.mxu0 0.0
        %2670 = vmatpush1.msra.mxu0 0.0
        %2671 = vmatprep.subr.mxu0 0.0
        %2672 = vmatpush1.msra.mxu0 0.0
        %2673 = vmatprep.subr.mxu0 0.0
        %2674 = vmatpush1.msra.mxu0 0.0
        %2675 = vmatprep.subr.mxu0 0.0
        %2676 = vmatpush1.msra.mxu0 0.0
        %2677 = vmatprep.mubr.f32.mxu0 %v2597
        %2678 = vmatmul.mubr.f32.gmra.mrb[0].mxu0 %v2564
        %v2679 = vpop.f32.mrb[0].mxu0
        %v2680 = vadd.f32 %v2595, %v2679
        %v2681 = vpop.f32.mrb[0].mxu0
        %2682 = vmatprep.mubr.f32.mxu0 %v2599
        %2683 = vmatmul.mubr.f32.gmra.mrb[0].mxu0 %v2565
        %v2684 = vpop.f32.mrb[0].mxu0
        %v2685 = vadd.f32 %v2595, %v2684
        %v2686 = vpop.f32.mrb[0].mxu0
        %2687 = vmatprep.mubr.f32.mxu0 %v2601
        %2688 = vmatmul.mubr.f32.gmra.mrb[0].mxu0 %v2566
        %v2689 = vpop.f32.mrb[0].mxu0
        %v2690 = vadd.f32 %v2595, %v2689
        %v2691 = vpop.f32.mrb[0].mxu0
        %2692 = vmatprep.mubr.f32.mxu0 %v2603
        %2693 = vmatmul.mubr.f32.gmra.mrb[0].mxu0 %v2567
        %v2694 = vpop.f32.mrb[0].mxu0
        %v2695 = vadd.f32 %v2595, %v2694
        %v2696 = vpop.f32.mrb[0].mxu0
        %2697 = vmatprep.mubr.f32.mxu0 %v2605
        %2698 = vmatmul.mubr.f32.gmra.mrb[0].mxu0 %v2568
        %v2699 = vpop.f32.mrb[0].mxu0
        %v2700 = vadd.f32 %v2595, %v2699
        %v2701 = vpop.f32.mrb[0].mxu0
        %2702 = vmatprep.mubr.f32.mxu0 %v2607
        %2703 = vmatmul.mubr.f32.gmra.mrb[0].mxu0 %v2569
        %v2704 = vpop.f32.mrb[0].mxu0
        %v2705 = vadd.f32 %v2595, %v2704
        %v2706 = vpop.f32.mrb[0].mxu0
        %2707 = vmatprep.mubr.f32.mxu0 %v2609
        %2708 = vmatmul.mubr.f32.gmra.mrb[0].mxu0 %v2570
        %v2709 = vpop.f32.mrb[0].mxu0
        %v2710 = vadd.f32 %v2595, %v2709
        %v2711 = vpop.f32.mrb[0].mxu0
        %2712 = vmatprep.mubr.f32.mxu0 %v2611
        %2713 = vmatmul.mubr.f32.gmra.mrb[0].mxu0 %v2571
        %v2714 = vpop.f32.mrb[0].mxu0
        %v2715 = vadd.f32 %v2595, %v2714
        %v2716 = vpop.f32.mrb[0].mxu0
        %2717 = vdwg.mxu0
        %v2718 = vmax.f32 %v2680, 0.0
        %v2719 = vmax.f32 %v2685, 0.0
        %v2720 = vmax.f32 %v2690, 0.0
        %v2721 = vmax.f32 %v2695, 0.0
        %v2722 = vmax.f32 %v2700, 0.0
        %v2723 = vmax.f32 %v2705, 0.0
        %v2724 = vmax.f32 %v2710, 0.0
        %v2725 = vmax.f32 %v2715, 0.0
        %v2726 = vmax.f32 %v2718, %v2719
        %v2727 = vmax.f32 %v2720, %v2721
        %v2728 = vmax.f32 %v2722, %v2723
        %v2729 = vmax.f32 %v2724, %v2725
        %2730 = vst.msk [vmem:[#allocation7] sm:$0xff] %vm2156, %v2726
        %2731 = vst.msk [vmem:[#allocation7 + $0x8] sm:$0xff] %vm2156, %v2727
        %2732 = vst.msk [vmem:[#allocation7 + $0x10] sm:$0xff] %vm2156, %v2728
        %2733 = vst.msk [vmem:[#allocation7 + $0x18] sm:$0xff] %vm2156, %v2729
        %v2734 = vld [vmem:[#allocation7] ss:$2 sm:$0xf]
        %s2735 = scalar_lea.vmem [#allocation7], 8
        %v2736 = vld [vmem:[%s2735] ss:$2 sm:$0xf]
        %s2737 = scalar_lea.vmem [#allocation7], 16
        %v2738 = vld [vmem:[%s2737] ss:$2 sm:$0xf]
        %s2739 = scalar_lea.vmem [#allocation7], 24
        %v2740 = vld [vmem:[%s2739] ss:$2 sm:$0xf]
        %s2741 = scalar_lea.vmem [#allocation7], 1
        %v2742 = vld [vmem:[%s2741] ss:$2 sm:$0xf]
        %s2743 = scalar_lea.vmem [#allocation7], 9
        %v2744 = vld [vmem:[%s2743] ss:$2 sm:$0xf]
        %s2745 = scalar_lea.vmem [#allocation7], 17
        %v2746 = vld [vmem:[%s2745] ss:$2 sm:$0xf]
        %s2747 = scalar_lea.vmem [#allocation7], 25
        %v2748 = vld [vmem:[%s2747] ss:$2 sm:$0xf]
        %v2749 = vmax.f32 %v2734, %v2742
        %v2750 = vmax.f32 %v2736, %v2744
        %v2751 = vmax.f32 %v2738, %v2746
        %v2752 = vmax.f32 %v2740, %v2748
        %vm2753 = vcmask 128000
        %2754 = vst.msk [vmem:[#allocation4] sm:$0x3f] %vm2753, 0.0
        %2755 = vst.msk [vmem:[#allocation4 + $0x8] sm:$0x3f] %vm2753, 0.0
        %2756 = vst.msk [vmem:[#allocation4 + $0x10] sm:$0x3f] %vm2753, 0.0
        %2757 = vst.msk [vmem:[#allocation4 + $0x18] sm:$0x3f] %vm2753, 0.0
        %2758 = vst.msk [vmem:[#allocation4 + $0x20] sm:$0x3f] %vm2753, 0.0
        %2759 = vst.msk [vmem:[#allocation4 + $0x28] sm:$0x3f] %vm2753, 0.0
        %s2760 = scalar_lea.vmem [#allocation4], 8
        %vm2761 = vcmask 125952
        %2762 = vst.msk [vmem:[%s2760 + $0x1] sm:$0xf] %vm2761, %v2749
        %2763 = vst.msk [vmem:[%s2760 + $0x9] sm:$0xf] %vm2761, %v2750
        %2764 = vst.msk [vmem:[%s2760 + $0x11] sm:$0xf] %vm2761, %v2751
        %2765 = vst.msk [vmem:[%s2760 + $0x19] sm:$0xf] %vm2761, %v2752
        %v2766 = vld [vmem:[#allocation4] sm:$0x3f]
        %v2767 = vld [vmem:[#allocation4 + $0x8] sm:$0x3f]
        %v2768 = vld [vmem:[#allocation4 + $0x10] sm:$0x3f]
        %v2769 = vld [vmem:[#allocation4 + $0x18] sm:$0x3f]
        %v2770 = vld [vmem:[#allocation4 + $0x20] sm:$0x3f]
        %v2771 = vld [vmem:[#allocation4 + $0x28] sm:$0x3f]
        %v2776 = vrot.slane %v2766, 1
        %v2777 = vrot.slane %v2767, 1
        %v2778 = vrot.slane %v2768, 1
        %v2779 = vrot.slane %v2769, 1
        %2780 = vrot.lane.b32.xlu0 %v2776, 16
        %v2781 = vpop.permute.xlu0 %2780
        %2782 = vrot.lane.b32.xlu0 %v2777, 16
        %v2783 = vpop.permute.xlu0 %2782
        %2784 = vrot.lane.b32.xlu0 %v2778, 16
        %v2785 = vpop.permute.xlu0 %2784
        %2786 = vrot.lane.b32.xlu0 %v2779, 16
        %v2787 = vpop.permute.xlu0 %2786
        %v2792 = vrot.slane %v2766, 2
        %v2793 = vrot.slane %v2767, 2
        %v2794 = vrot.slane %v2768, 2
        %v2795 = vrot.slane %v2769, 2
        %2796 = vrot.lane.b32.xlu0 %v2792, 32
        %v2797 = vpop.permute.xlu0 %2796
        %2798 = vrot.lane.b32.xlu0 %v2793, 32
        %v2799 = vpop.permute.xlu0 %2798
        %2800 = vrot.lane.b32.xlu0 %v2794, 32
        %v2801 = vpop.permute.xlu0 %2800
        %2802 = vrot.lane.b32.xlu0 %v2795, 32
        %v2803 = vpop.permute.xlu0 %2802
        %2809 = vrot.lane.b32.xlu0 %v2767, 48
        %v2810 = vpop.permute.xlu0 %2809
        %2811 = vrot.lane.b32.xlu0 %v2768, 48
        %v2812 = vpop.permute.xlu0 %2811
        %2813 = vrot.lane.b32.xlu0 %v2769, 48
        %v2814 = vpop.permute.xlu0 %2813
        %2815 = vrot.lane.b32.xlu0 %v2770, 48
        %v2816 = vpop.permute.xlu0 %2815
        %v2821 = vrot.slane %v2770, 1
        %2822 = vrot.lane.b32.xlu0 %v2777, 64
        %v2823 = vpop.permute.xlu0 %2822
        %2824 = vrot.lane.b32.xlu0 %v2778, 64
        %v2825 = vpop.permute.xlu0 %2824
        %2826 = vrot.lane.b32.xlu0 %v2779, 64
        %v2827 = vpop.permute.xlu0 %2826
        %2828 = vrot.lane.b32.xlu0 %v2821, 64
        %v2829 = vpop.permute.xlu0 %2828
        %v2834 = vrot.slane %v2770, 2
        %2835 = vrot.lane.b32.xlu0 %v2793, 80
        %v2836 = vpop.permute.xlu0 %2835
        %2837 = vrot.lane.b32.xlu0 %v2794, 80
        %v2838 = vpop.permute.xlu0 %2837
        %2839 = vrot.lane.b32.xlu0 %v2795, 80
        %v2840 = vpop.permute.xlu0 %2839
        %2841 = vrot.lane.b32.xlu0 %v2834, 80
        %v2842 = vpop.permute.xlu0 %2841
        %2848 = vrot.lane.b32.xlu0 %v2768, 96
        %v2849 = vpop.permute.xlu0 %2848
        %2850 = vrot.lane.b32.xlu0 %v2769, 96
        %v2851 = vpop.permute.xlu0 %2850
        %2852 = vrot.lane.b32.xlu0 %v2770, 96
        %v2853 = vpop.permute.xlu0 %2852
        %2854 = vrot.lane.b32.xlu0 %v2771, 96
        %v2855 = vpop.permute.xlu0 %2854
        %v2860 = vrot.slane %v2771, 1
        %2861 = vrot.lane.b32.xlu0 %v2778, 112
        %v2862 = vpop.permute.xlu0 %2861
        %2863 = vrot.lane.b32.xlu0 %v2779, 112
        %v2864 = vpop.permute.xlu0 %2863
        %2865 = vrot.lane.b32.xlu0 %v2821, 112
        %v2866 = vpop.permute.xlu0 %2865
        %2867 = vrot.lane.b32.xlu0 %v2860, 112
        %v2868 = vpop.permute.xlu0 %2867
        %v2873 = vrot.slane %v2771, 2
        %v2874 = vsel %vm2156, %v2766, %v2781
        %v2875 = vsel %vm2156, %v2767, %v2783
        %v2876 = vsel %vm2156, %v2768, %v2785
        %v2877 = vsel %vm2156, %v2769, %v2787
        %v2878 = vsel %vm2518, %v2874, %v2797
        %v2879 = vsel %vm2518, %v2875, %v2799
        %v2880 = vsel %vm2518, %v2876, %v2801
        %v2881 = vsel %vm2518, %v2877, %v2803
        %v2882 = vsel %vm2527, %v2878, %v2810
        %v2883 = vsel %vm2527, %v2879, %v2812
        %v2884 = vsel %vm2527, %v2880, %v2814
        %v2885 = vsel %vm2527, %v2881, %v2816
        %v2886 = vsel %vm2536, %v2882, %v2823
        %v2887 = vsel %vm2536, %v2883, %v2825
        %v2888 = vsel %vm2536, %v2884, %v2827
        %v2889 = vsel %vm2536, %v2885, %v2829
        %v2890 = vsel %vm2545, %v2886, %v2836
        %v2891 = vsel %vm2545, %v2887, %v2838
        %v2892 = vsel %vm2545, %v2888, %v2840
        %v2893 = vsel %vm2545, %v2889, %v2842
        %v2894 = vsel %vm2554, %v2890, %v2849
        %v2895 = vsel %vm2554, %v2891, %v2851
        %v2896 = vsel %vm2554, %v2892, %v2853
        %v2897 = vsel %vm2554, %v2893, %v2855
        %v2898 = vsel %vm2563, %v2894, %v2862
        %v2899 = vsel %vm2563, %v2895, %v2864
        %v2900 = vsel %vm2563, %v2896, %v2866
        %v2901 = vsel %vm2563, %v2897, %v2868
        %v2906 = vcombine.low %v2898, %v2794
        %v2907 = vcombine.low %v2899, %v2795
        %v2908 = vcombine.low %v2900, %v2834
        %v2909 = vcombine.low %v2901, %v2873
        %v2910 = vld [vmem:[%s5] sm:$0xff]
        %v2911 = vld [vmem:[%s5 + $0x8] sm:$0xff]
        %v2912 = vld [vmem:[%s5 + $0x10] sm:$0xff]
        %v2913 = vld [vmem:[%s5 + $0x18] sm:$0xff]
        %v2914 = vld [vmem:[%s5 + $0x20] sm:$0xff]
        %v2915 = vld [vmem:[%s5 + $0x28] sm:$0xff]
        %v2916 = vld [vmem:[%s5 + $0x30] sm:$0xff]
        %v2917 = vld [vmem:[%s5 + $0x38] sm:$0xff]
        %v2918 = vld [vmem:[%s5 + $0x40] sm:$0xff]
        %v2919 = vld [vmem:[%s5 + $0x48] sm:$0xff]
        %v2920 = vld [vmem:[%s5 + $0x50] sm:$0xff]
        %v2921 = vld [vmem:[%s5 + $0x58] sm:$0xff]
        %v2922 = vld [vmem:[%s5 + $0x60] sm:$0xff]
        %v2923 = vld [vmem:[%s5 + $0x68] sm:$0xff]
        %v2924 = vld [vmem:[%s5 + $0x70] sm:$0xff]
        %v2925 = vld [vmem:[%s5 + $0x78] sm:$0xff]
        %v2926 = vld [vmem:[%s5 + $0x80] sm:$0xff]
        %v2927 = vld [vmem:[%s5 + $0x88] sm:$0xff]
        %v2928 = vld [vmem:[%s6] sm:$0x1]
        %v2930 = vlaneseq
        %v2931 = vshrl.u32 %v2930, 7
        %v2932 = vsub.s32 0, %v2931
        %v2933 = vrot.slane %v2928, %v2932
        %v2935 = vcombine.low %v2906, %v2907
        %v2936 = vcombine.high %v2906, %v2907
        %v2937 = vcombine.low %v2908, %v2909
        %v2938 = vcombine.high %v2908, %v2909
        %v2941 = vsel %vm2156, %v2936, 0
        %v2943 = vsel %vm2156, %v2938, 0
        %2945 = vmatprep.subr.mxu0 0.0
        %2946 = vmatpush1.msra.mxu0 %v2910
        %2947 = vmatprep.subr.mxu0 0.0
        %2948 = vmatpush1.msra.mxu0 %v2911
        %2949 = vmatprep.subr.mxu0 0.0
        %2950 = vmatpush1.msra.mxu0 %v2912
        %2951 = vmatprep.subr.mxu0 0.0
        %2952 = vmatpush1.msra.mxu0 %v2913
        %2953 = vmatprep.subr.mxu0 0.0
        %2954 = vmatpush1.msra.mxu0 %v2914
        %2955 = vmatprep.subr.mxu0 0.0
        %2956 = vmatpush1.msra.mxu0 %v2915
        %2957 = vmatprep.subr.mxu0 0.0
        %2958 = vmatpush1.msra.mxu0 %v2916
        %2959 = vmatprep.subr.mxu0 0.0
        %2960 = vmatpush1.msra.mxu0 %v2917
        %2961 = vmatprep.subr.mxu0 0.0
        %2962 = vmatpush1.msra.mxu0 %v2918
        %2963 = vmatprep.subr.mxu0 0.0
        %2964 = vmatpush1.msra.mxu0 %v2919
        %2965 = vmatprep.subr.mxu0 0.0
        %2966 = vmatpush1.msra.mxu0 %v2920
        %2967 = vmatprep.subr.mxu0 0.0
        %2968 = vmatpush1.msra.mxu0 %v2921
        %2969 = vmatprep.subr.mxu0 0.0
        %2970 = vmatpush1.msra.mxu0 %v2922
        %2971 = vmatprep.subr.mxu0 0.0
        %2972 = vmatpush1.msra.mxu0 %v2923
        %2973 = vmatprep.subr.mxu0 0.0
        %2974 = vmatpush1.msra.mxu0 %v2924
        %2975 = vmatprep.subr.mxu0 0.0
        %2976 = vmatpush1.msra.mxu0 %v2925
        %2977 = vmatprep.subr.mxu0 0.0
        %2978 = vmatpush1.msra.mxu0 %v2926
        %2979 = vmatprep.subr.mxu0 0.0
        %2980 = vmatpush1.msra.mxu0 %v2927
        %2981 = vmatprep.subr.mxu0 0.0
        %2982 = vmatpush1.msra.mxu0 0.0
        %2983 = vmatprep.subr.mxu0 0.0
        %2984 = vmatpush1.msra.mxu0 0.0
        %2985 = vmatprep.subr.mxu0 0.0
        %2986 = vmatpush1.msra.mxu0 0.0
        %2987 = vmatprep.subr.mxu0 0.0
        %2988 = vmatpush1.msra.mxu0 0.0
        %2989 = vmatprep.subr.mxu0 0.0
        %2990 = vmatpush1.msra.mxu0 0.0
        %2991 = vmatprep.subr.mxu0 0.0
        %2992 = vmatpush1.msra.mxu0 0.0
        %2993 = vmatprep.subr.mxu0 0.0
        %2994 = vmatpush1.msra.mxu0 0.0
        %2995 = vmatprep.subr.mxu0 0.0
        %2996 = vmatpush1.msra.mxu0 0.0
        %2997 = vmatprep.subr.mxu0 0.0
        %2998 = vmatpush1.msra.mxu0 0.0
        %2999 = vmatprep.subr.mxu0 0.0
        %3000 = vmatpush1.msra.mxu0 0.0
        %3001 = vmatprep.subr.mxu0 0.0
        %3002 = vmatpush1.msra.mxu0 0.0
        %3003 = vmatprep.subr.mxu0 0.0
        %3004 = vmatpush1.msra.mxu0 0.0
        %3005 = vmatprep.subr.mxu0 0.0
        %3006 = vmatpush1.msra.mxu0 0.0
        %3007 = vmatprep.subr.mxu0 0.0
        %3008 = vmatpush1.msra.mxu0 0.0
        %3009 = vmatprep.mubr.f32.mxu0 %v2941
        %3010 = vmatmul.mubr.f32.gmra.mrb[0].mxu0 %v2935
        %v3011 = vpop.f32.mrb[0].mxu0
        %v3012 = vadd.f32 %v2933, %v3011
        %v3013 = vpop.f32.mrb[0].mxu0
        %3014 = vmatprep.mubr.f32.mxu0 %v2943
        %3015 = vmatmul.mubr.f32.gmra.mrb[0].mxu0 %v2937
        %v3016 = vpop.f32.mrb[0].mxu0
        %v3017 = vadd.f32 %v2933, %v3016
        %v3018 = vpop.f32.mrb[0].mxu0
        %3019 = vdwg.mxu0
        %v3020 = vmax.f32 %v3012, 0.0
        %v3021 = vmax.f32 %v3017, 0.0
        %v3024 = vcombine.high %v3020, %v3020
        %v3025 = vcombine.high %v3021, %v3021
        %v3028 = vmax.f32 %v3020, %v3024
        %v3029 = vmax.f32 %v3021, %v3025
        %3030 = vst.msk [vmem:[#allocation8] sm:$0xf] %vm2761, %v3028
        %3031 = vst.msk [vmem:[#allocation8 + $0x4] sm:$0xf] %vm2761, %v3029
        %v3032 = vld [vmem:[#allocation8] ss:$2 sm:$0x3]
        %s3033 = scalar_lea.vmem [#allocation8], 4
        %v3034 = vld [vmem:[%s3033] ss:$2 sm:$0x3]
        %s3035 = scalar_lea.vmem [#allocation8], 1
        %v3036 = vld [vmem:[%s3035] ss:$2 sm:$0x3]
        %s3037 = scalar_lea.vmem [#allocation8], 5
        %v3038 = vld [vmem:[%s3037] ss:$2 sm:$0x3]
        %v3039 = vmax.f32 %v3032, %v3036
        %v3040 = vmax.f32 %v3034, %v3038
        %3041 = vst.msk [vmem:[#allocation5] sm:$0xf] %vm2761, 0.0
        %3042 = vst.msk [vmem:[#allocation5 + $0x4] sm:$0xf] %vm2761, 0.0
        %3043 = vst.msk [vmem:[#allocation5 + $0x8] sm:$0xf] %vm2761, 0.0
        %3044 = vst.msk [vmem:[#allocation5 + $0xc] sm:$0xf] %vm2761, 0.0
        %s3045 = scalar_lea.vmem [#allocation5], 4
        %3046 = vst.msk [vmem:[%s3045 + $0x1] sm:$0x3] %vm2213, %v3039
        %3047 = vst.msk [vmem:[%s3045 + $0x5] sm:$0x3] %vm2213, %v3040
        %v3048 = vld [vmem:[#allocation5] sm:$0xf]
        %v3049 = vld [vmem:[#allocation5 + $0x4] sm:$0xf]
        %v3050 = vld [vmem:[#allocation5 + $0x8] sm:$0xf]
        %v3051 = vld [vmem:[#allocation5 + $0xc] sm:$0xf]
        %v3054 = vrot.slane %v3048, 1
        %v3055 = vrot.slane %v3049, 1
        %3056 = vrot.lane.b32.xlu0 %v3054, 16
        %v3057 = vpop.permute.xlu0 %3056
        %3058 = vrot.lane.b32.xlu0 %v3055, 16
        %v3059 = vpop.permute.xlu0 %3058
        %v3062 = vrot.slane %v3048, 2
        %v3063 = vrot.slane %v3049, 2
        %3064 = vrot.lane.b32.xlu0 %v3062, 32
        %v3065 = vpop.permute.xlu0 %3064
        %3066 = vrot.lane.b32.xlu0 %v3063, 32
        %v3067 = vpop.permute.xlu0 %3066
        %3071 = vrot.lane.b32.xlu0 %v3049, 48
        %v3072 = vpop.permute.xlu0 %3071
        %3073 = vrot.lane.b32.xlu0 %v3050, 48
        %v3074 = vpop.permute.xlu0 %3073
        %v3077 = vrot.slane %v3050, 1
        %3078 = vrot.lane.b32.xlu0 %v3055, 64
        %v3079 = vpop.permute.xlu0 %3078
        %3080 = vrot.lane.b32.xlu0 %v3077, 64
        %v3081 = vpop.permute.xlu0 %3080
        %v3084 = vrot.slane %v3050, 2
        %3085 = vrot.lane.b32.xlu0 %v3063, 80
        %v3086 = vpop.permute.xlu0 %3085
        %3087 = vrot.lane.b32.xlu0 %v3084, 80
        %v3088 = vpop.permute.xlu0 %3087
        %3092 = vrot.lane.b32.xlu0 %v3050, 96
        %v3093 = vpop.permute.xlu0 %3092
        %3094 = vrot.lane.b32.xlu0 %v3051, 96
        %v3095 = vpop.permute.xlu0 %3094
        %v3098 = vrot.slane %v3051, 1
        %3099 = vrot.lane.b32.xlu0 %v3077, 112
        %v3100 = vpop.permute.xlu0 %3099
        %3101 = vrot.lane.b32.xlu0 %v3098, 112
        %v3102 = vpop.permute.xlu0 %3101
        %v3105 = vrot.slane %v3051, 2
        %v3106 = vsel %vm2156, %v3048, %v3057
        %v3107 = vsel %vm2156, %v3049, %v3059
        %v3108 = vsel %vm2518, %v3106, %v3065
        %v3109 = vsel %vm2518, %v3107, %v3067
        %v3110 = vsel %vm2527, %v3108, %v3072
        %v3111 = vsel %vm2527, %v3109, %v3074
        %v3112 = vsel %vm2536, %v3110, %v3079
        %v3113 = vsel %vm2536, %v3111, %v3081
        %v3114 = vsel %vm2545, %v3112, %v3086
        %v3115 = vsel %vm2545, %v3113, %v3088
        %v3116 = vsel %vm2554, %v3114, %v3093
        %v3117 = vsel %vm2554, %v3115, %v3095
        %v3118 = vsel %vm2563, %v3116, %v3100
        %v3119 = vsel %vm2563, %v3117, %v3102
        %v3122 = vcombine.low %v3118, %v3084
        %v3124 = vunpack.c.l.s4 1983009808
        %v3125 = vunpack.c.0.s8 %v3124
        %v3126 = vlaneseq
        %v3127 = vshrl.u32 %v3126, 7
        %v3128 = vsub.s32 %v3125, %v3127
        %v3129 = vrot.slane %v3122, %v3128
        %v3130 = vcombine.low %v3119, %v3105
        %v3132 = vunpack.c.l.s4 1983009808
        %v3133 = vunpack.c.0.s8 %v3132
        %v3134 = vlaneseq
        %v3135 = vshrl.u32 %v3134, 7
        %v3136 = vsub.s32 %v3133, %v3135
        %v3137 = vrot.slane %v3130, %v3136
        %v3138 = vld [vmem:[%s7] sm:$0xff]
        %v3139 = vld [vmem:[%s7 + $0x8] sm:$0xff]
        %v3140 = vld [vmem:[%s7 + $0x10] sm:$0xff]
        %v3141 = vld [vmem:[%s7 + $0x18] sm:$0xff]
        %v3142 = vld [vmem:[%s7 + $0x20] sm:$0xff]
        %v3143 = vld [vmem:[%s7 + $0x28] sm:$0xff]
        %v3144 = vld [vmem:[%s7 + $0x30] sm:$0xff]
        %v3145 = vld [vmem:[%s7 + $0x38] sm:$0xff]
        %v3146 = vld [vmem:[%s7 + $0x40] sm:$0xff]
        %v3147 = vld [vmem:[%s7 + $0x48] sm:$0xff]
        %v3148 = vld [vmem:[%s7 + $0x50] sm:$0xff]
        %v3149 = vld [vmem:[%s7 + $0x58] sm:$0xff]
        %v3150 = vld [vmem:[%s7 + $0x60] sm:$0xff]
        %v3151 = vld [vmem:[%s7 + $0x68] sm:$0xff]
        %v3152 = vld [vmem:[%s7 + $0x70] sm:$0xff]
        %v3153 = vld [vmem:[%s7 + $0x78] sm:$0xff]
        %v3154 = vld [vmem:[%s7 + $0x80] sm:$0xff]
        %v3155 = vld [vmem:[%s7 + $0x88] sm:$0xff]
        %v3156 = vld [vmem:[%s8] sm:$0x1]
        %v3158 = vlaneseq
        %v3159 = vshrl.u32 %v3158, 7
        %v3160 = vsub.s32 0, %v3159
        %v3161 = vrot.slane %v3156, %v3160
        %v3163 = vcombine.low %v3129, %v3137
        %v3165 = vunpack.c.l.s4 1983009808
        %v3166 = vunpack.c.0.s8 %v3165
        %v3167 = vlaneseq
        %v3168 = vshrl.u32 %v3167, 7
        %v3169 = vsub.s32 %v3166, %v3168
        %v3170 = vrot.slane %v3163, %v3169
        %v3171 = vcombine.high %v3170, %v3170
        %v3173 = vsel %vm2156, %v3171, 0
        %3175 = vmatprep.subr.mxu0 0.0
        %3176 = vmatpush1.msra.mxu0 %v3138
        %3177 = vmatprep.subr.mxu0 0.0
        %3178 = vmatpush1.msra.mxu0 %v3139
        %3179 = vmatprep.subr.mxu0 0.0
        %3180 = vmatpush1.msra.mxu0 %v3140
        %3181 = vmatprep.subr.mxu0 0.0
        %3182 = vmatpush1.msra.mxu0 %v3141
        %3183 = vmatprep.subr.mxu0 0.0
        %3184 = vmatpush1.msra.mxu0 %v3142
        %3185 = vmatprep.subr.mxu0 0.0
        %3186 = vmatpush1.msra.mxu0 %v3143
        %3187 = vmatprep.subr.mxu0 0.0
        %3188 = vmatpush1.msra.mxu0 %v3144
        %3189 = vmatprep.subr.mxu0 0.0
        %3190 = vmatpush1.msra.mxu0 %v3145
        %3191 = vmatprep.subr.mxu0 0.0
        %3192 = vmatpush1.msra.mxu0 %v3146
        %3193 = vmatprep.subr.mxu0 0.0
        %3194 = vmatpush1.msra.mxu0 %v3147
        %3195 = vmatprep.subr.mxu0 0.0
        %3196 = vmatpush1.msra.mxu0 %v3148
        %3197 = vmatprep.subr.mxu0 0.0
        %3198 = vmatpush1.msra.mxu0 %v3149
        %3199 = vmatprep.subr.mxu0 0.0
        %3200 = vmatpush1.msra.mxu0 %v3150
        %3201 = vmatprep.subr.mxu0 0.0
        %3202 = vmatpush1.msra.mxu0 %v3151
        %3203 = vmatprep.subr.mxu0 0.0
        %3204 = vmatpush1.msra.mxu0 %v3152
        %3205 = vmatprep.subr.mxu0 0.0
        %3206 = vmatpush1.msra.mxu0 %v3153
        %3207 = vmatprep.subr.mxu0 0.0
        %3208 = vmatpush1.msra.mxu0 %v3154
        %3209 = vmatprep.subr.mxu0 0.0
        %3210 = vmatpush1.msra.mxu0 %v3155
        %3211 = vmatprep.subr.mxu0 0.0
        %3212 = vmatpush1.msra.mxu0 0.0
        %3213 = vmatprep.subr.mxu0 0.0
        %3214 = vmatpush1.msra.mxu0 0.0
        %3215 = vmatprep.subr.mxu0 0.0
        %3216 = vmatpush1.msra.mxu0 0.0
        %3217 = vmatprep.subr.mxu0 0.0
        %3218 = vmatpush1.msra.mxu0 0.0
        %3219 = vmatprep.subr.mxu0 0.0
        %3220 = vmatpush1.msra.mxu0 0.0
        %3221 = vmatprep.subr.mxu0 0.0
        %3222 = vmatpush1.msra.mxu0 0.0
        %3223 = vmatprep.subr.mxu0 0.0
        %3224 = vmatpush1.msra.mxu0 0.0
        %3225 = vmatprep.subr.mxu0 0.0
        %3226 = vmatpush1.msra.mxu0 0.0
        %3227 = vmatprep.subr.mxu0 0.0
        %3228 = vmatpush1.msra.mxu0 0.0
        %3229 = vmatprep.subr.mxu0 0.0
        %3230 = vmatpush1.msra.mxu0 0.0
        %3231 = vmatprep.subr.mxu0 0.0
        %3232 = vmatpush1.msra.mxu0 0.0
        %3233 = vmatprep.subr.mxu0 0.0
        %3234 = vmatpush1.msra.mxu0 0.0
        %3235 = vmatprep.subr.mxu0 0.0
        %3236 = vmatpush1.msra.mxu0 0.0
        %3237 = vmatprep.subr.mxu0 0.0
        %3238 = vmatpush1.msra.mxu0 0.0
        %3239 = vmatprep.mubr.f32.mxu0 %v3173
        %3240 = vmatmul.mubr.f32.gmra.mrb[0].mxu0 %v3170
        %v3241 = vpop.f32.mrb[0].mxu0
        %v3242 = vadd.f32 %v3161, %v3241
        %v3243 = vpop.f32.mrb[0].mxu0
        %3244 = vdwg.mxu0
        %v3245 = vmax.f32 %v3242, 0.0
        %v3248 = vunpack.c.l.s4 1983009808
        %v3249 = vunpack.c.0.s8 %v3248
        %v3250 = vlaneseq
        %v3251 = vshrl.u32 %v3250, 7
        %v3252 = vsub.s32 %v3249, %v3251
        %v3253 = vrot.slane %v3245, %v3252
        %v3254 = vcombine.high %v3253, %v3253
        %3257 = vst.msk [vmem:[#allocation9] sm:$0xf] %vm2761, 0.0
        %3258 = vst.msk [vmem:[#allocation9 + $0x4] sm:$0xf] %vm2761, 0.0
        %3259 = vst.msk [vmem:[#allocation9 + $0x8] sm:$0xf] %vm2761, 0.0
        %3260 = vst.msk [vmem:[#allocation9 + $0xc] sm:$0xf] %vm2761, 0.0
        %s3261 = scalar_lea.vmem [#allocation9], 4
        %3262 = vst.msk [vmem:[%s3261 + $0x1] sm:$0x3] %vm2213, %v3253
        %3263 = vst.msk [vmem:[%s3261 + $0x5] sm:$0x3] %vm2213, %v3254
        %v3264 = vld [vmem:[#allocation9] sm:$0x3]
        %v3265 = vld [vmem:[#allocation9 + $0x4] sm:$0x3]
        %v3266 = vld [vmem:[#allocation9 + $0x1] sm:$0x3]
        %v3267 = vld [vmem:[#allocation9 + $0x5] sm:$0x3]
        %v3268 = vmax.f32 %v3264, %v3266
        %v3269 = vmax.f32 %v3265, %v3267
        %v3270 = vld [vmem:[#allocation9 + $0x2] sm:$0x3]
        %v3271 = vld [vmem:[#allocation9 + $0x6] sm:$0x3]
        %v3272 = vmax.f32 %v3268, %v3270
        %v3273 = vmax.f32 %v3269, %v3271
        %v3274 = vld [vmem:[%s3261] sm:$0x3]
        %v3275 = vld [vmem:[%s3261 + $0x4] sm:$0x3]
        %v3276 = vmax.f32 %v3272, %v3274
        %v3277 = vmax.f32 %v3273, %v3275
        %v3278 = vld [vmem:[%s3261 + $0x1] sm:$0x3]
        %v3279 = vld [vmem:[%s3261 + $0x5] sm:$0x3]
        %v3280 = vmax.f32 %v3276, %v3278
        %v3281 = vmax.f32 %v3277, %v3279
        %v3282 = vld [vmem:[%s3261 + $0x2] sm:$0x3]
        %v3283 = vld [vmem:[%s3261 + $0x6] sm:$0x3]
        %v3284 = vmax.f32 %v3280, %v3282
        %v3285 = vmax.f32 %v3281, %v3283
        %s3286 = scalar_lea.vmem [#allocation9], 8
        %v3287 = vld [vmem:[%s3286] sm:$0x3]
        %v3288 = vld [vmem:[%s3286 + $0x4] sm:$0x3]
        %v3289 = vmax.f32 %v3284, %v3287
        %v3290 = vmax.f32 %v3285, %v3288
        %v3291 = vld [vmem:[%s3286 + $0x1] sm:$0x3]
        %v3292 = vld [vmem:[%s3286 + $0x5] sm:$0x3]
        %v3293 = vmax.f32 %v3289, %v3291
        %v3294 = vmax.f32 %v3290, %v3292
        %v3295 = vld [vmem:[%s3286 + $0x2] sm:$0x3]
        %v3296 = vld [vmem:[%s3286 + $0x6] sm:$0x3]
        %v3297 = vmax.f32 %v3293, %v3295
        %v3298 = vmax.f32 %v3294, %v3296
        %3299 = vst.msk [vmem:[%s325] sm:$0x3] %vm2213, %v3297
        %3300 = vst.msk [vmem:[%s325 + $0x2] sm:$0x3] %vm2213, %v3298
        %s3301 = sand.u32 %s225, 1
        %s3302 = scalar_lea.sflag [#allocation11], %s3301
        %s3303 = sand.u32 %s225, 1
        %s3304 = smul.addr %s3303, 4
        %s3305 = scalar_lea.vmem [#allocation10], %s3304
        // Predicated region
        $region57: #{fnet_forward.1} parent=55 // pred_check
          %p3306 = pneg %p235
        $region58: #{fnet_forward.1} parent=55 // pred_check_branch
          %3308 = sbr.rel (%p3306) target = $region60
        $region59: #{fnet_forward.1} parent=55 // pred_region
          %s3310 = ssub.s32 64, 64
          %3311 = vsyncadd %s3302, %s3310
          %s3312 = smul.addr %s23, 2
          %s3313 = smul.addr %s3312, 32
          %s3314 = scalar_lea.hbm %s9, %s3313
          %s3315 = sshll.u32 %s3305, 4
          %s3316 = int_to_ptr.vmem [resolvable:$true] %s3315
          %3321 = dma.vmem_to_hbm [thread:$0]  %s3316, 64, %s3314, %s3302, 32, 32, 2
        $region60: #{fnet_forward.1} parent=55 // pred_fallthru
          _
      $region56: #{fnet_forward.1} parent=5 // pred_fallthru
        _
      %p3322 = scmp.le.s32.totalorder 2, %s18
      // Predicated region
      $region61: #{fnet_forward.1} parent=5 // pred_check
        %p3323 = pneg %p3322
      $region62: #{fnet_forward.1} parent=5 // pred_check_branch
        %3325 = sbr.rel (%p3323) target = $region64
      $region63: #{fnet_forward.1} parent=5 // pred_region
        %s3326 = ssub.s32 %s18, 2
        // Predicated region
        $region65: #{fnet_forward.1} parent=63 // pred_check
          %p3327 = pneg %p241
        $region66: #{fnet_forward.1} parent=63 // pred_check_branch
          %3329 = sbr.rel (%p3327) target = $region68
        $region67: #{fnet_forward.1} parent=63 // pred_region
          %s3330 = sand.u32 %s226, 1
          %s3331 = scalar_lea.sflag [#allocation11], %s3330
          %s3332 = sand.u32 %s226, 1
          %s3333 = smul.addr %s3332, 4
          %s3334 = scalar_lea.vmem [#allocation10], %s3333
          %3335 = dma.done %s3331, 64
        $region68: #{fnet_forward.1} parent=63 // pred_fallthru
          _
      $region64: #{fnet_forward.1} parent=5 // pred_fallthru
        _
    $region6: #{fnet_forward.1} parent=1 // loop_footer
      %s22 = sadd.s32 1, %s18
    $region7: #{fnet_forward.1} parent=1 // loop_footer_branch
      %17 = sbr.rel target = $region3
    $region8: #{fnet_forward.1} parent=1 // loop_exit
      _
    %3336 = vsyncpa [#allocation11], 1
    %s3337 = scalar_lea.sflag [#allocation11], 1
    %3338 = vsyncpa %s3337, 1

</llo_original>
